<compile_context>
chip_gen: v5e
topology: v5e:2x2
jax: 0.10.0
libtpu: 0.0.40
codegen_flags: <defaults>
</compile_context>

<pallas_src>
import functools
import math

import jax
import jax.numpy as jnp
from jax.experimental import pallas as pl
from jax.experimental.pallas import tpu as pltpu


# -----------------------------------------------------------------------------
# Small helpers
# -----------------------------------------------------------------------------
def _round_up(v, m):
    return -(-v // m) * m


def _halo_granule(W):
    """Smallest row count g >= 2 such that g*W is a multiple of 128 lanes."""
    g = 128 // math.gcd(W, 128)
    return max(g, 2)


def _vmem_estimate_bytes(C, W, TR, G, x_bytes):
    """Rough per-step VMEM footprint: double-buffered I/O blocks + scratch."""
    P1 = (TR + 2) * W
    DX = (-2 * W) % 128 or 128
    DH = 128
    lx = DX + (TR + 4) * W + 1
    lh = DH + P1 + 1
    sub16 = _round_up(C, 16)
    scratch = sub16 * (_round_up(lx, 128) + _round_up(lh, 128)) * 2          # bf16 slabs
    x_blk = _round_up(C, 8) * _round_up(TR * W, 128) * x_bytes
    halo_blk = _round_up(C, 8) * _round_up(G * W, 128) * x_bytes
    w_blk = _round_up(9 * C, 16) * 128 * 2
    b_blk = _round_up(C, 8) * 128 * 4
    wpos_blk = 8 * _round_up(P1, 128) * 4
    io = 2 * (2 * x_blk + 2 * halo_blk + 2 * w_blk + 2 * b_blk + wpos_blk)
    return int(1.2 * (io + scratch))


def _pick_row_tile(H, W, C, N, G, x_bytes, vmem_budget):
    """Largest row tile (multiple of the halo granule, divisor of H) that fits."""
    cands = [t for t in range(G, H + 1, G) if H % t == 0]
    if not cands:
        return None
    if N == 1:                      # keep >=2 grid steps so v7x megacore has work
        smaller = [t for t in cands if t < H]
        if smaller:
            cands = smaller
    fit = [t for t in cands if _vmem_estimate_bytes(C, W, t, G, x_bytes) <= vmem_budget]
    return max(fit) if fit else min(cands)


# -----------------------------------------------------------------------------
# Fused ResBlock kernel
# -----------------------------------------------------------------------------
def _resblock_kernel(wpos_ref, xprev_ref, xcur_ref, xnext_ref,
                     w1_ref, b1_ref, w2_ref, b2_ref,
                     out_ref,
                     xslab_ref, h1slab_ref,
                     *, W, C, TR, G, DX, DH, res_scale):
    """One (image, row-tile) step of ResBlock.

    Layout: channels on sublanes, flattened pixels on lanes.
      xprev/xnext: (1, C, G*W)   halo row blocks above / below the tile.
      xcur:        (1, C, TR*W)  current tile rows (also the residual).
      w*_ref:      (9*C, C)      bf16 per-tap (C_out, C_in) slabs, tap-major.
      b*_ref:      (C, 1)        f32 biases.
      wpos_ref:    (1, (TR+2)*W) int32: column index (q mod W) per output pixel.
      out_ref:     (1, C, TR*W).
      scratch:     xslab (C, DX+(TR+4)*W+1) bf16, h1slab (C, DH+(TR+2)*W+1) bf16.
    """
    f32 = jnp.float32
    bf16 = jnp.bfloat16
    r = pl.program_id(1)
    nr = pl.num_programs(1)
    P1 = (TR + 2) * W              # conv1 output pixels (rows r*TR-1 .. r*TR+TR)
    P2 = TR * W                    # conv2 / final output pixels

    # ---- 1. assemble the halo-extended bf16 input slab ----------------------
    # slab lanes [DX, DX + (TR+4)*W) hold image rows r*TR-2 .. r*TR+TR+1
    # (flattened, no width padding).  The one slack lane at each end is only
    # read at kw-masked output columns; it is zeroed for safety.
    top = xprev_ref[0, :, (G - 2) * W:]        # (C, 2W) rows r*TR-2, r*TR-1
    bot = xnext_ref[0, :, :2 * W]              # (C, 2W) rows r*TR+TR, r*TR+TR+1
    zero2 = jnp.zeros_like(top)
    xslab_ref[:, DX - 1:DX] = jnp.zeros((C, 1), bf16)
    xslab_ref[:, DX:DX + 2 * W] = jnp.where(r > 0, top, zero2).astype(bf16)
    # bulk tile copy lands 128-lane aligned (DX chosen so DX + 2W % 128 == 0)
    xslab_ref[:, DX + 2 * W:DX + (TR + 2) * W] = xcur_ref[0, :, :].astype(bf16)
    xslab_ref[:, DX + (TR + 2) * W:DX + (TR + 4) * W] = (
        jnp.where(r < nr - 1, bot, zero2).astype(bf16))
    xslab_ref[:, DX + (TR + 4) * W:DX + (TR + 4) * W + 1] = jnp.zeros((C, 1), bf16)

    def conv3x3(src_ref, doff, w_ref, P, lmask, rmask):
        """3x3 conv as 9 bf16 MXU dots on lane-shifted slices of one slab."""
        acc = None
        for kw in range(3):
            part = None
            for kh in range(3):
                t = kh * 3 + kw
                s = doff + kh * W + kw - 1
                d = jnp.dot(w_ref[t * C:(t + 1) * C, :],          # (Cout, Cin) bf16
                            src_ref[:, s:s + P],                  # (Cin, P)   bf16
                            preferred_element_type=jnp.float32)
                part = d if part is None else part + d
            if kw == 0:                       # column w==0 has no left neighbour
                part = jnp.where(lmask, part, 0.0)
            elif kw == 2:                     # column w==W-1 has no right neighbour
                part = jnp.where(rmask, part, 0.0)
            acc = part if acc is None else acc + part
        return acc                                              # (Cout, P) f32

    # ---- 2. conv1 + bias + ReLU over TR+2 rows (conv2 halo included) --------
    wp1 = wpos_ref[...]                       # (1, P1) int32
    h1 = conv3x3(xslab_ref, DX, w1_ref, P1, wp1 > 0, wp1 < W - 1)
    h1 = jnp.maximum(h1 + b1_ref[...], 0.0)

    h1slab_ref[:, DH - 1:DH] = jnp.zeros((C, 1), bf16)
    h1slab_ref[:, DH:DH + P1] = h1.astype(bf16)
    h1slab_ref[:, DH + P1:DH + P1 + 1] = jnp.zeros((C, 1), bf16)

    # conv2 must see zeros (not conv1-of-padding) outside the image.
    @pl.when(r == 0)
    def _():
        h1slab_ref[:, DH:DH + W] = jnp.zeros((C, W), bf16)

    @pl.when(r == nr - 1)
    def _():
        h1slab_ref[:, DH + (TR + 1) * W:DH + P1] = jnp.zeros((C, W), bf16)

    # ---- 3. conv2 + bias, res_scale, residual; lane-dense store -------------
    wp2 = wpos_ref[:, :P2]
    h2 = conv3x3(h1slab_ref, DH, w2_ref, P2, wp2 > 0, wp2 < W - 1)
    h2 = h2 + b2_ref[...]
    out = h2 * res_scale + xcur_ref[0, :, :].astype(f32)
    out_ref[0, :, :] = out.astype(out_ref.dtype)


# -----------------------------------------------------------------------------
# Wrapper: BlockSpecs, grid, generation-aware VMEM budgeting
# -----------------------------------------------------------------------------
def resblock_forward(x_nchw, params, *, res_scale=1.0, row_tile=None):
    """Matches ResBlock.forward (conv3x3 -> ReLU -> conv3x3, *res_scale, +x).

    Input / output: NCHW, like the PyTorch module.
    """
    w1, b1, w2, b2 = params["w1"], params["b1"], params["w2"], params["b2"]
    N, C, H, W = x_nchw.shape
    assert w1.shape == (3, 3, C, C)   # TODO(synk): only kernel_size=3 (default_conv) path
    assert W >= 2
    # TODO(synk): add W tiling for rows too wide for VMEM; bn=True path not implemented.

    G = _halo_granule(W)              # halo fetch granule (rows); G*W is 128-aligned
    assert H % G == 0, f"H={H} must be a multiple of the halo granule G={G}"

    try:
        vmem_cap = pltpu.get_tpu_info().vmem_capacity_bytes
    except Exception:                 # conservative default (v7x has 64 MiB / core)
        vmem_cap = 64 * 2 ** 20
    vmem_budget = int(0.6 * vmem_cap)

    x_bytes = jnp.dtype(x_nchw.dtype).itemsize
    TR = row_tile if row_tile is not None else _pick_row_tile(
        H, W, C, N, G, x_bytes, vmem_budget)
    assert TR is not None and H % TR == 0 and TR % G == 0, (TR, G, H)
    R = H // TR
    tpg = TR // G

    DX = (-2 * W) % 128 or 128        # x-slab offset: bulk tile copy is lane-aligned
    DH = 128                          # conv1-activation slab offset (aligned store)
    LX = DX + (TR + 4) * W + 1
    LH = DH + (TR + 2) * W + 1
    P1 = (TR + 2) * W

    # NCHW is already channel-major -> free reshape, no transpose needed.
    x = x_nchw.reshape(N, C, H * W)

    # per-tap (C_out, C_in) weight slabs (tap-major) as bf16 MXU operands
    w1k = jnp.transpose(w1, (0, 1, 3, 2)).reshape(9 * C, C).astype(jnp.bfloat16)
    w2k = jnp.transpose(w2, (0, 1, 3, 2)).reshape(9 * C, C).astype(jnp.bfloat16)
    b1k = b1.reshape(C, 1).astype(jnp.float32)
    b2k = b2.reshape(C, 1).astype(jnp.float32)

    # column position (q mod W) of every conv1 output pixel (prefix reused by conv2)
    wpos = jnp.tile(jnp.arange(W, dtype=jnp.int32), TR + 2).reshape(1, P1)

    kern = functools.partial(_resblock_kernel, W=W, C=C, TR=TR, G=G,
                             DX=DX, DH=DH, res_scale=float(res_scale))

    def idx_cur(n, r):
        return (n, 0, r)

    def idx_prev(n, r):               # G-row block holding image rows r*TR-2, r*TR-1
        return (n, 0, jnp.maximum(r * tpg - 1, 0))

    def idx_next(n, r):               # G-row block holding image rows (r+1)*TR, +1
        return (n, 0, jnp.minimum((r + 1) * tpg, H // G - 1))

    def idx_const(n, r):
        return (0, 0)

    grid_spec = pltpu.PrefetchScalarGridSpec(
        num_scalar_prefetch=0,
        grid=(N, R),
        in_specs=[
            pl.BlockSpec((1, P1), idx_const),            # wpos
            pl.BlockSpec((1, C, G * W), idx_prev),       # halo above
            pl.BlockSpec((1, C, TR * W), idx_cur),       # current rows (+ residual)
            pl.BlockSpec((1, C, G * W), idx_next),       # halo below
            pl.BlockSpec((9 * C, C), idx_const),         # w1 (bf16)
            pl.BlockSpec((C, 1), idx_const),             # b1
            pl.BlockSpec((9 * C, C), idx_const),         # w2 (bf16)
            pl.BlockSpec((C, 1), idx_const),             # b2
        ],
        out_specs=pl.BlockSpec((1, C, TR * W), idx_cur),
        scratch_shapes=[
            pltpu.VMEM((C, LX), jnp.bfloat16),           # halo-extended input slab
            pltpu.VMEM((C, LH), jnp.bfloat16),           # conv1 activation slab
        ],
    )

    flops = 2 * 2 * 9 * N * H * W * C * C                # two 3x3 convs, 2 flops/MAC
    bytes_accessed = int(N * C * H * W * x_bytes * (2.0 + 2.0 * G / TR)
                         + 2 * 9 * C * C * 2 + P1 * 4)
    vmem_est = _vmem_estimate_bytes(C, W, TR, G, x_bytes)
    vmem_limit = int(min(max(32 * 2 ** 20, 2 * vmem_est), int(0.75 * vmem_cap)))

    out = pl.pallas_call(
        kern,
        grid_spec=grid_spec,
        out_shape=jax.ShapeDtypeStruct((N, C, H * W), x_nchw.dtype),
        compiler_params=pltpu.CompilerParams(
            dimension_semantics=("parallel", "parallel"),
            vmem_limit_bytes=vmem_limit),
        cost_estimate=pl.CostEstimate(flops=flops, transcendentals=0,
                                      bytes_accessed=bytes_accessed),
    )(wpos, x, x, x, w1k, b1k, w2k, b2k)

    return out.reshape(N, C, H, W)


# -----------------------------------------------------------------------------
# Params + pure-XLA reference (verification only)
# -----------------------------------------------------------------------------
def init_resblock_params(key, n_feats, scale=0.05):
    k1, k2, k3, k4 = jax.random.split(key, 4)
    nrm = lambda k, s: scale * jax.random.normal(k, s, dtype=jnp.float32)
    return {
        "w1": nrm(k1, (3, 3, n_feats, n_feats)),   # HWIO
        "b1": nrm(k2, (n_feats,)),
        "w2": nrm(k3, (3, 3, n_feats, n_feats)),
        "b2": nrm(k4, (n_feats,)),
    }


def resblock_reference(x_nchw, params, *, res_scale=1.0):
    x = jnp.transpose(x_nchw, (0, 2, 3, 1))
    dn = ("NHWC", "HWIO", "NHWC")
    prec = jax.lax.Precision.HIGHEST
    h = jax.lax.conv_general_dilated(x, params["w1"], (1, 1), "SAME",
                                     dimension_numbers=dn, precision=prec) + params["b1"]
    h = jnp.maximum(h, 0.0)
    h = jax.lax.conv_general_dilated(h, params["w2"], (1, 1), "SAME",
                                     dimension_numbers=dn, precision=prec) + params["b2"]
    out = h * res_scale + x
    return jnp.transpose(out, (0, 3, 1, 2))


# -----------------------------------------------------------------------------
if __name__ == "__main__":
    N, n_feats, H, W = 2, 16, 32, 32
    key = jax.random.PRNGKey(0)
    kx, kp = jax.random.split(key)
    x = jax.random.normal(kx, (N, n_feats, H, W), dtype=jnp.float32)   # NCHW
    params = init_resblock_params(kp, n_feats)

    ref = resblock_reference(x, params, res_scale=1.0)

    # run twice: auto-picked (single row tile) and explicit 4 row-tiles (halo path)
    for rt in (None, 8):
        fwd = jax.jit(functools.partial(resblock_forward, res_scale=1.0, row_tile=rt))
        out = fwd(x, params)
        jax.block_until_ready(out)
        assert out.shape == x.shape and out.dtype == x.dtype
        err = float(jnp.max(jnp.abs(out - ref)))
        # tolerance covers single-pass bf16 MXU operands vs f32 reference
        assert err < 3e-2, f"kernel/reference mismatch (row_tile={rt}): max abs err = {err}"
    print("KERNEL_OK")
</pallas_src>

<mosaic_0001>
module attributes {stable_mosaic.version = 11 : i64} {
  func.func @_resblock_kernel(%arg0: i32, %arg1: i32, %arg2: memref<1x1088xi32, #tpu.memory_space<vmem>>, %arg3: memref<1x16x128xf32, #tpu.memory_space<vmem>>, %arg4: memref<1x16x1024xf32, #tpu.memory_space<vmem>>, %arg5: memref<1x16x128xf32, #tpu.memory_space<vmem>>, %arg6: memref<144x16xbf16, #tpu.memory_space<vmem>>, %arg7: memref<16x1xf32, #tpu.memory_space<vmem>>, %arg8: memref<144x16xbf16, #tpu.memory_space<vmem>>, %arg9: memref<16x1xf32, #tpu.memory_space<vmem>>, %arg10: memref<1x16x1024xf32, #tpu.memory_space<vmem>>, %arg11: memref<16x1217xbf16, #tpu.memory_space<vmem>>, %arg12: memref<16x1217xbf16, #tpu.memory_space<vmem>>) attributes {dimension_semantics = [#tpu.dimension_semantics<parallel>, #tpu.dimension_semantics<parallel>], iteration_bounds = array<i64: 2, 1>, scalar_prefetch = 0 : i64, scratch_operands = 2 : i64, tpu.core_type = #tpu.core_type<tc>, window_params = [{pipeline_mode = #tpu.pipeline_mode<synchronous>, transform_indices = @transform_0, window_bounds = array<i64: 1, 1088>}, {transform_indices = @transform_1, window_bounds = array<i64: 1, 16, 128>}, {transform_indices = @transform_2, window_bounds = array<i64: 1, 16, 1024>}, {transform_indices = @transform_3, window_bounds = array<i64: 1, 16, 128>}, {pipeline_mode = #tpu.pipeline_mode<synchronous>, transform_indices = @transform_4, window_bounds = array<i64: 144, 16>}, {pipeline_mode = #tpu.pipeline_mode<synchronous>, transform_indices = @transform_5, window_bounds = array<i64: 16, 1>}, {pipeline_mode = #tpu.pipeline_mode<synchronous>, transform_indices = @transform_6, window_bounds = array<i64: 144, 16>}, {pipeline_mode = #tpu.pipeline_mode<synchronous>, transform_indices = @transform_7, window_bounds = array<i64: 16, 1>}, {transform_indices = @transform_8, window_bounds = array<i64: 1, 16, 1024>}]} {
    %c0 = arith.constant 0 : index
    %c0_0 = arith.constant 0 : index
    %c64 = arith.constant 64 : index
    %0 = vector.load %arg3[%c0, %c0_0, %c64] : memref<1x16x128xf32, #tpu.memory_space<vmem>>, vector<1x16x64xf32>
    %1 = vector.shape_cast %0 : vector<1x16x64xf32> to vector<16x64xf32>
    %c0_1 = arith.constant 0 : index
    %c0_2 = arith.constant 0 : index
    %c0_3 = arith.constant 0 : index
    %2 = vector.load %arg5[%c0_1, %c0_2, %c0_3] : memref<1x16x128xf32, #tpu.memory_space<vmem>>, vector<1x16x64xf32>
    %3 = vector.shape_cast %2 : vector<1x16x64xf32> to vector<16x64xf32>
    %cst = arith.constant 0.000000e+00 : f32
    %4 = vector.broadcast %cst : f32 to vector<16x64xf32>
    %cst_4 = arith.constant 0.000000e+00 : bf16
    %5 = vector.broadcast %cst_4 : bf16 to vector<16x1xbf16>
    %c0_5 = arith.constant 0 : index
    %c63 = arith.constant 63 : index
    %6 = vector.load %arg11[%c0_5, %c63] : memref<16x1217xbf16, #tpu.memory_space<vmem>>, vector<16x1xbf16>
    tpu.vector_store %arg11[%c0_5, %c63], %5 {strides = array<i32>} : memref<16x1217xbf16, #tpu.memory_space<vmem>>, vector<16x1xbf16>,
    %c0_i32 = arith.constant 0 : i32
    %7 = arith.cmpi sgt, %arg1, %c0_i32 : i32
    %8 = arith.select %7, %1, %4 : vector<16x64xf32>
    %9 = arith.truncf %8 : vector<16x64xf32> to vector<16x64xbf16>
    %c0_6 = arith.constant 0 : index
    %c64_7 = arith.constant 64 : index
    %10 = vector.load %arg11[%c0_6, %c64_7] : memref<16x1217xbf16, #tpu.memory_space<vmem>>, vector<16x64xbf16>
    tpu.vector_store %arg11[%c0_6, %c64_7], %9 {strides = array<i32>} : memref<16x1217xbf16, #tpu.memory_space<vmem>>, vector<16x64xbf16>,
    %c0_8 = arith.constant 0 : index
    %c0_9 = arith.constant 0 : index
    %c0_10 = arith.constant 0 : index
    %11 = vector.load %arg4[%c0_8, %c0_9, %c0_10] : memref<1x16x1024xf32, #tpu.memory_space<vmem>>, vector<1x16x1024xf32>
    %12 = vector.shape_cast %11 : vector<1x16x1024xf32> to vector<16x1024xf32>
    %13 = arith.truncf %12 : vector<16x1024xf32> to vector<16x1024xbf16>
    %c0_11 = arith.constant 0 : index
    %c128 = arith.constant 128 : index
    %14 = vector.load %arg11[%c0_11, %c128] : memref<16x1217xbf16, #tpu.memory_space<vmem>>, vector<16x1024xbf16>
    tpu.vector_store %arg11[%c0_11, %c128], %13 {strides = array<i32>} : memref<16x1217xbf16, #tpu.memory_space<vmem>>, vector<16x1024xbf16>,
    %c0_i32_12 = arith.constant 0 : i32
    %15 = arith.cmpi slt, %arg1, %c0_i32_12 : i32
    %16 = arith.select %15, %3, %4 : vector<16x64xf32>
    %17 = arith.truncf %16 : vector<16x64xf32> to vector<16x64xbf16>
    %c0_13 = arith.constant 0 : index
    %c1152 = arith.constant 1152 : index
    %18 = vector.load %arg11[%c0_13, %c1152] : memref<16x1217xbf16, #tpu.memory_space<vmem>>, vector<16x64xbf16>
    tpu.vector_store %arg11[%c0_13, %c1152], %17 {strides = array<i32>} : memref<16x1217xbf16, #tpu.memory_space<vmem>>, vector<16x64xbf16>,
    %cst_14 = arith.constant 0.000000e+00 : bf16
    %19 = vector.broadcast %cst_14 : bf16 to vector<16x1xbf16>
    %c0_15 = arith.constant 0 : index
    %c1216 = arith.constant 1216 : index
    %20 = vector.load %arg11[%c0_15, %c1216] : memref<16x1217xbf16, #tpu.memory_space<vmem>>, vector<16x1xbf16>
    tpu.vector_store %arg11[%c0_15, %c1216], %19 {strides = array<i32>} : memref<16x1217xbf16, #tpu.memory_space<vmem>>, vector<16x1xbf16>,
    %c0_16 = arith.constant 0 : index
    %c0_17 = arith.constant 0 : index
    %21 = vector.load %arg2[%c0_16, %c0_17] : memref<1x1088xi32, #tpu.memory_space<vmem>>, vector<1x1088xi32>
    %c0_i32_18 = arith.constant 0 : i32
    %22 = vector.broadcast %c0_i32_18 : i32 to vector<1x1088xi32>
    %23 = arith.cmpi sgt, %21, %22 : vector<1x1088xi32>
    %c31_i32 = arith.constant 31 : i32
    %24 = vector.broadcast %c31_i32 : i32 to vector<1x1088xi32>
    %25 = arith.cmpi slt, %21, %24 : vector<1x1088xi32>
    %c0_19 = arith.constant 0 : index
    %c0_20 = arith.constant 0 : index
    %26 = vector.load %arg6[%c0_19, %c0_20] : memref<144x16xbf16, #tpu.memory_space<vmem>>, vector<16x16xbf16>
    %c0_21 = arith.constant 0 : index
    %c63_22 = arith.constant 63 : index
    %27 = vector.load %arg11[%c0_21, %c63_22] : memref<16x1217xbf16, #tpu.memory_space<vmem>>, vector<16x1088xbf16>
    %cst_23 = arith.constant dense<0.000000e+00> : vector<16x1088xf32>
    %28 = tpu.matmul %26, %27, %cst_23 {dimension_numbers = #tpu.dot_dimension_numbers<[1], [0], [0], [1], [0, 0, 1, 1], [], []>} : vector<16x16xbf16>, vector<16x1088xbf16>, vector<16x1088xf32> -> vector<16x1088xf32>
    %c48 = arith.constant 48 : index
    %c0_24 = arith.constant 0 : index
    %29 = vector.load %arg6[%c48, %c0_24] : memref<144x16xbf16, #tpu.memory_space<vmem>>, vector<16x16xbf16>
    %c0_25 = arith.constant 0 : index
    %c95 = arith.constant 95 : index
    %30 = vector.load %arg11[%c0_25, %c95] : memref<16x1217xbf16, #tpu.memory_space<vmem>>, vector<16x1088xbf16>
    %cst_26 = arith.constant dense<0.000000e+00> : vector<16x1088xf32>
    %31 = tpu.matmul %29, %30, %cst_26 {dimension_numbers = #tpu.dot_dimension_numbers<[1], [0], [0], [1], [0, 0, 1, 1], [], []>} : vector<16x16xbf16>, vector<16x1088xbf16>, vector<16x1088xf32> -> vector<16x1088xf32>
    %32 = arith.addf %28, %31 : vector<16x1088xf32>
    %c96 = arith.constant 96 : index
    %c0_27 = arith.constant 0 : index
    %33 = vector.load %arg6[%c96, %c0_27] : memref<144x16xbf16, #tpu.memory_space<vmem>>, vector<16x16xbf16>
    %c0_28 = arith.constant 0 : index
    %c127 = arith.constant 127 : index
    %34 = vector.load %arg11[%c0_28, %c127] : memref<16x1217xbf16, #tpu.memory_space<vmem>>, vector<16x1088xbf16>
    %cst_29 = arith.constant dense<0.000000e+00> : vector<16x1088xf32>
    %35 = tpu.matmul %33, %34, %cst_29 {dimension_numbers = #tpu.dot_dimension_numbers<[1], [0], [0], [1], [0, 0, 1, 1], [], []>} : vector<16x16xbf16>, vector<16x1088xbf16>, vector<16x1088xf32> -> vector<16x1088xf32>
    %36 = arith.addf %32, %35 : vector<16x1088xf32>
    %cst_30 = arith.constant 0.000000e+00 : f32
    %37 = vector.shape_cast %23 : vector<1x1088xi1> to vector<1x1088xi1>
    %38 = vector.broadcast %37 : vector<1x1088xi1> to vector<16x1088xi1>
    %39 = vector.broadcast %cst_30 : f32 to vector<16x1088xf32>
    %40 = arith.select %38, %36, %39 : vector<16x1088xi1>, vector<16x1088xf32>
    %c16 = arith.constant 16 : index
    %c0_31 = arith.constant 0 : index
    %41 = vector.load %arg6[%c16, %c0_31] : memref<144x16xbf16, #tpu.memory_space<vmem>>, vector<16x16xbf16>
    %c0_32 = arith.constant 0 : index
    %c64_33 = arith.constant 64 : index
    %42 = vector.load %arg11[%c0_32, %c64_33] : memref<16x1217xbf16, #tpu.memory_space<vmem>>, vector<16x1088xbf16>
    %cst_34 = arith.constant dense<0.000000e+00> : vector<16x1088xf32>
    %43 = tpu.matmul %41, %42, %cst_34 {dimension_numbers = #tpu.dot_dimension_numbers<[1], [0], [0], [1], [0, 0, 1, 1], [], []>} : vector<16x16xbf16>, vector<16x1088xbf16>, vector<16x1088xf32> -> vector<16x1088xf32>
    %c64_35 = arith.constant 64 : index
    %c0_36 = arith.constant 0 : index
    %44 = vector.load %arg6[%c64_35, %c0_36] : memref<144x16xbf16, #tpu.memory_space<vmem>>, vector<16x16xbf16>
    %c0_37 = arith.constant 0 : index
    %c96_38 = arith.constant 96 : index
    %45 = vector.load %arg11[%c0_37, %c96_38] : memref<16x1217xbf16, #tpu.memory_space<vmem>>, vector<16x1088xbf16>
    %cst_39 = arith.constant dense<0.000000e+00> : vector<16x1088xf32>
    %46 = tpu.matmul %44, %45, %cst_39 {dimension_numbers = #tpu.dot_dimension_numbers<[1], [0], [0], [1], [0, 0, 1, 1], [], []>} : vector<16x16xbf16>, vector<16x1088xbf16>, vector<16x1088xf32> -> vector<16x1088xf32>
    %47 = arith.addf %43, %46 : vector<16x1088xf32>
    %c112 = arith.constant 112 : index
    %c0_40 = arith.constant 0 : index
    %48 = vector.load %arg6[%c112, %c0_40] : memref<144x16xbf16, #tpu.memory_space<vmem>>, vector<16x16xbf16>
    %c0_41 = arith.constant 0 : index
    %c128_42 = arith.constant 128 : index
    %49 = vector.load %arg11[%c0_41, %c128_42] : memref<16x1217xbf16, #tpu.memory_space<vmem>>, vector<16x1088xbf16>
    %cst_43 = arith.constant dense<0.000000e+00> : vector<16x1088xf32>
    %50 = tpu.matmul %48, %49, %cst_43 {dimension_numbers = #tpu.dot_dimension_numbers<[1], [0], [0], [1], [0, 0, 1, 1], [], []>} : vector<16x16xbf16>, vector<16x1088xbf16>, vector<16x1088xf32> -> vector<16x1088xf32>
    %51 = arith.addf %47, %50 : vector<16x1088xf32>
    %52 = arith.addf %40, %51 : vector<16x1088xf32>
    %c32 = arith.constant 32 : index
    %c0_44 = arith.constant 0 : index
    %53 = vector.load %arg6[%c32, %c0_44] : memref<144x16xbf16, #tpu.memory_space<vmem>>, vector<16x16xbf16>
    %c0_45 = arith.constant 0 : index
    %c65 = arith.constant 65 : index
    %54 = vector.load %arg11[%c0_45, %c65] : memref<16x1217xbf16, #tpu.memory_space<vmem>>, vector<16x1088xbf16>
    %cst_46 = arith.constant dense<0.000000e+00> : vector<16x1088xf32>
    %55 = tpu.matmul %53, %54, %cst_46 {dimension_numbers = #tpu.dot_dimension_numbers<[1], [0], [0], [1], [0, 0, 1, 1], [], []>} : vector<16x16xbf16>, vector<16x1088xbf16>, vector<16x1088xf32> -> vector<16x1088xf32>
    %c80 = arith.constant 80 : index
    %c0_47 = arith.constant 0 : index
    %56 = vector.load %arg6[%c80, %c0_47] : memref<144x16xbf16, #tpu.memory_space<vmem>>, vector<16x16xbf16>
    %c0_48 = arith.constant 0 : index
    %c97 = arith.constant 97 : index
    %57 = vector.load %arg11[%c0_48, %c97] : memref<16x1217xbf16, #tpu.memory_space<vmem>>, vector<16x1088xbf16>
    %cst_49 = arith.constant dense<0.000000e+00> : vector<16x1088xf32>
    %58 = tpu.matmul %56, %57, %cst_49 {dimension_numbers = #tpu.dot_dimension_numbers<[1], [0], [0], [1], [0, 0, 1, 1], [], []>} : vector<16x16xbf16>, vector<16x1088xbf16>, vector<16x1088xf32> -> vector<16x1088xf32>
    %59 = arith.addf %55, %58 : vector<16x1088xf32>
    %c128_50 = arith.constant 128 : index
    %c0_51 = arith.constant 0 : index
    %60 = vector.load %arg6[%c128_50, %c0_51] : memref<144x16xbf16, #tpu.memory_space<vmem>>, vector<16x16xbf16>
    %c0_52 = arith.constant 0 : index
    %c129 = arith.constant 129 : index
    %61 = vector.load %arg11[%c0_52, %c129] : memref<16x1217xbf16, #tpu.memory_space<vmem>>, vector<16x1088xbf16>
    %cst_53 = arith.constant dense<0.000000e+00> : vector<16x1088xf32>
    %62 = tpu.matmul %60, %61, %cst_53 {dimension_numbers = #tpu.dot_dimension_numbers<[1], [0], [0], [1], [0, 0, 1, 1], [], []>} : vector<16x16xbf16>, vector<16x1088xbf16>, vector<16x1088xf32> -> vector<16x1088xf32>
    %63 = arith.addf %59, %62 : vector<16x1088xf32>
    %cst_54 = arith.constant 0.000000e+00 : f32
    %64 = vector.shape_cast %25 : vector<1x1088xi1> to vector<1x1088xi1>
    %65 = vector.broadcast %64 : vector<1x1088xi1> to vector<16x1088xi1>
    %66 = vector.broadcast %cst_54 : f32 to vector<16x1088xf32>
    %67 = arith.select %65, %63, %66 : vector<16x1088xi1>, vector<16x1088xf32>
    %68 = arith.addf %52, %67 : vector<16x1088xf32>
    %c0_55 = arith.constant 0 : index
    %c0_56 = arith.constant 0 : index
    %69 = vector.load %arg7[%c0_55, %c0_56] : memref<16x1xf32, #tpu.memory_space<vmem>>, vector<16x1xf32>
    %70 = vector.broadcast %69 : vector<16x1xf32> to vector<16x1088xf32>
    %71 = arith.addf %68, %70 : vector<16x1088xf32>
    %cst_57 = arith.constant 0.000000e+00 : f32
    %72 = vector.broadcast %cst_57 : f32 to vector<16x1088xf32>
    %73 = arith.maximumf %71, %72 : vector<16x1088xf32>
    %cst_58 = arith.constant 0.000000e+00 : bf16
    %74 = vector.broadcast %cst_58 : bf16 to vector<16x1xbf16>
    %c0_59 = arith.constant 0 : index
    %c127_60 = arith.constant 127 : index
    %75 = vector.load %arg12[%c0_59, %c127_60] : memref<16x1217xbf16, #tpu.memory_space<vmem>>, vector<16x1xbf16>
    tpu.vector_store %arg12[%c0_59, %c127_60], %74 {strides = array<i32>} : memref<16x1217xbf16, #tpu.memory_space<vmem>>, vector<16x1xbf16>,
    %76 = arith.truncf %73 : vector<16x1088xf32> to vector<16x1088xbf16>
    %c0_61 = arith.constant 0 : index
    %c128_62 = arith.constant 128 : index
    %77 = vector.load %arg12[%c0_61, %c128_62] : memref<16x1217xbf16, #tpu.memory_space<vmem>>, vector<16x1088xbf16>
    tpu.vector_store %arg12[%c0_61, %c128_62], %76 {strides = array<i32>} : memref<16x1217xbf16, #tpu.memory_space<vmem>>, vector<16x1088xbf16>,
    %cst_63 = arith.constant 0.000000e+00 : bf16
    %78 = vector.broadcast %cst_63 : bf16 to vector<16x1xbf16>
    %c0_64 = arith.constant 0 : index
    %c1216_65 = arith.constant 1216 : index
    %79 = vector.load %arg12[%c0_64, %c1216_65] : memref<16x1217xbf16, #tpu.memory_space<vmem>>, vector<16x1xbf16>
    tpu.vector_store %arg12[%c0_64, %c1216_65], %78 {strides = array<i32>} : memref<16x1217xbf16, #tpu.memory_space<vmem>>, vector<16x1xbf16>,
    %c0_i32_66 = arith.constant 0 : i32
    %80 = arith.cmpi eq, %arg1, %c0_i32_66 : i32
    %81 = arith.extui %80 : i1 to i32
    %c0_i32_67 = arith.constant 0 : i32
    %82 = arith.cmpi ne, %81, %c0_i32_67 : i32
    scf.if %82 {
      %cst_124 = arith.constant 0.000000e+00 : bf16
      %145 = vector.broadcast %cst_124 : bf16 to vector<16x32xbf16>
      %c0_125 = arith.constant 0 : index
      %c128_126 = arith.constant 128 : index
      %146 = vector.load %arg12[%c0_125, %c128_126] : memref<16x1217xbf16, #tpu.memory_space<vmem>>, vector<16x32xbf16>
      tpu.vector_store %arg12[%c0_125, %c128_126], %145 {strides = array<i32>} : memref<16x1217xbf16, #tpu.memory_space<vmem>>, vector<16x32xbf16>,
    } else {
    }
    %c0_i32_68 = arith.constant 0 : i32
    %83 = arith.cmpi eq, %arg1, %c0_i32_68 : i32
    %84 = arith.extui %83 : i1 to i32
    %c0_i32_69 = arith.constant 0 : i32
    %85 = arith.cmpi ne, %84, %c0_i32_69 : i32
    scf.if %85 {
      %cst_124 = arith.constant 0.000000e+00 : bf16
      %145 = vector.broadcast %cst_124 : bf16 to vector<16x32xbf16>
      %c0_125 = arith.constant 0 : index
      %c1184 = arith.constant 1184 : index
      %146 = vector.load %arg12[%c0_125, %c1184] : memref<16x1217xbf16, #tpu.memory_space<vmem>>, vector<16x32xbf16>
      tpu.vector_store %arg12[%c0_125, %c1184], %145 {strides = array<i32>} : memref<16x1217xbf16, #tpu.memory_space<vmem>>, vector<16x32xbf16>,
    } else {
    }
    %c0_70 = arith.constant 0 : index
    %c0_71 = arith.constant 0 : index
    %86 = vector.load %arg2[%c0_70, %c0_71] : memref<1x1088xi32, #tpu.memory_space<vmem>>, vector<1x1024xi32>
    %c0_i32_72 = arith.constant 0 : i32
    %87 = vector.broadcast %c0_i32_72 : i32 to vector<1x1024xi32>
    %88 = arith.cmpi sgt, %86, %87 : vector<1x1024xi32>
    %c31_i32_73 = arith.constant 31 : i32
    %89 = vector.broadcast %c31_i32_73 : i32 to vector<1x1024xi32>
    %90 = arith.cmpi slt, %86, %89 : vector<1x1024xi32>
    %c0_74 = arith.constant 0 : index
    %c0_75 = arith.constant 0 : index
    %91 = vector.load %arg8[%c0_74, %c0_75] : memref<144x16xbf16, #tpu.memory_space<vmem>>, vector<16x16xbf16>
    %c0_76 = arith.constant 0 : index
    %c127_77 = arith.constant 127 : index
    %92 = vector.load %arg12[%c0_76, %c127_77] : memref<16x1217xbf16, #tpu.memory_space<vmem>>, vector<16x1024xbf16>
    %cst_78 = arith.constant dense<0.000000e+00> : vector<16x1024xf32>
    %93 = tpu.matmul %91, %92, %cst_78 {dimension_numbers = #tpu.dot_dimension_numbers<[1], [0], [0], [1], [0, 0, 1, 1], [], []>} : vector<16x16xbf16>, vector<16x1024xbf16>, vector<16x1024xf32> -> vector<16x1024xf32>
    %c48_79 = arith.constant 48 : index
    %c0_80 = arith.constant 0 : index
    %94 = vector.load %arg8[%c48_79, %c0_80] : memref<144x16xbf16, #tpu.memory_space<vmem>>, vector<16x16xbf16>
    %c0_81 = arith.constant 0 : index
    %c159 = arith.constant 159 : index
    %95 = vector.load %arg12[%c0_81, %c159] : memref<16x1217xbf16, #tpu.memory_space<vmem>>, vector<16x1024xbf16>
    %cst_82 = arith.constant dense<0.000000e+00> : vector<16x1024xf32>
    %96 = tpu.matmul %94, %95, %cst_82 {dimension_numbers = #tpu.dot_dimension_numbers<[1], [0], [0], [1], [0, 0, 1, 1], [], []>} : vector<16x16xbf16>, vector<16x1024xbf16>, vector<16x1024xf32> -> vector<16x1024xf32>
    %97 = arith.addf %93, %96 : vector<16x1024xf32>
    %c96_83 = arith.constant 96 : index
    %c0_84 = arith.constant 0 : index
    %98 = vector.load %arg8[%c96_83, %c0_84] : memref<144x16xbf16, #tpu.memory_space<vmem>>, vector<16x16xbf16>
    %c0_85 = arith.constant 0 : index
    %c191 = arith.constant 191 : index
    %99 = vector.load %arg12[%c0_85, %c191] : memref<16x1217xbf16, #tpu.memory_space<vmem>>, vector<16x1024xbf16>
    %cst_86 = arith.constant dense<0.000000e+00> : vector<16x1024xf32>
    %100 = tpu.matmul %98, %99, %cst_86 {dimension_numbers = #tpu.dot_dimension_numbers<[1], [0], [0], [1], [0, 0, 1, 1], [], []>} : vector<16x16xbf16>, vector<16x1024xbf16>, vector<16x1024xf32> -> vector<16x1024xf32>
    %101 = arith.addf %97, %100 : vector<16x1024xf32>
    %cst_87 = arith.constant 0.000000e+00 : f32
    %102 = vector.shape_cast %88 : vector<1x1024xi1> to vector<1x1024xi1>
    %103 = vector.broadcast %102 : vector<1x1024xi1> to vector<16x1024xi1>
    %104 = vector.broadcast %cst_87 : f32 to vector<16x1024xf32>
    %105 = arith.select %103, %101, %104 : vector<16x1024xi1>, vector<16x1024xf32>
    %c16_88 = arith.constant 16 : index
    %c0_89 = arith.constant 0 : index
    %106 = vector.load %arg8[%c16_88, %c0_89] : memref<144x16xbf16, #tpu.memory_space<vmem>>, vector<16x16xbf16>
    %c0_90 = arith.constant 0 : index
    %c128_91 = arith.constant 128 : index
    %107 = vector.load %arg12[%c0_90, %c128_91] : memref<16x1217xbf16, #tpu.memory_space<vmem>>, vector<16x1024xbf16>
    %cst_92 = arith.constant dense<0.000000e+00> : vector<16x1024xf32>
    %108 = tpu.matmul %106, %107, %cst_92 {dimension_numbers = #tpu.dot_dimension_numbers<[1], [0], [0], [1], [0, 0, 1, 1], [], []>} : vector<16x16xbf16>, vector<16x1024xbf16>, vector<16x1024xf32> -> vector<16x1024xf32>
    %c64_93 = arith.constant 64 : index
    %c0_94 = arith.constant 0 : index
    %109 = vector.load %arg8[%c64_93, %c0_94] : memref<144x16xbf16, #tpu.memory_space<vmem>>, vector<16x16xbf16>
    %c0_95 = arith.constant 0 : index
    %c160 = arith.constant 160 : index
    %110 = vector.load %arg12[%c0_95, %c160] : memref<16x1217xbf16, #tpu.memory_space<vmem>>, vector<16x1024xbf16>
    %cst_96 = arith.constant dense<0.000000e+00> : vector<16x1024xf32>
    %111 = tpu.matmul %109, %110, %cst_96 {dimension_numbers = #tpu.dot_dimension_numbers<[1], [0], [0], [1], [0, 0, 1, 1], [], []>} : vector<16x16xbf16>, vector<16x1024xbf16>, vector<16x1024xf32> -> vector<16x1024xf32>
    %112 = arith.addf %108, %111 : vector<16x1024xf32>
    %c112_97 = arith.constant 112 : index
    %c0_98 = arith.constant 0 : index
    %113 = vector.load %arg8[%c112_97, %c0_98] : memref<144x16xbf16, #tpu.memory_space<vmem>>, vector<16x16xbf16>
    %c0_99 = arith.constant 0 : index
    %c192 = arith.constant 192 : index
    %114 = vector.load %arg12[%c0_99, %c192] : memref<16x1217xbf16, #tpu.memory_space<vmem>>, vector<16x1024xbf16>
    %cst_100 = arith.constant dense<0.000000e+00> : vector<16x1024xf32>
    %115 = tpu.matmul %113, %114, %cst_100 {dimension_numbers = #tpu.dot_dimension_numbers<[1], [0], [0], [1], [0, 0, 1, 1], [], []>} : vector<16x16xbf16>, vector<16x1024xbf16>, vector<16x1024xf32> -> vector<16x1024xf32>
    %116 = arith.addf %112, %115 : vector<16x1024xf32>
    %117 = arith.addf %105, %116 : vector<16x1024xf32>
    %c32_101 = arith.constant 32 : index
    %c0_102 = arith.constant 0 : index
    %118 = vector.load %arg8[%c32_101, %c0_102] : memref<144x16xbf16, #tpu.memory_space<vmem>>, vector<16x16xbf16>
    %c0_103 = arith.constant 0 : index
    %c129_104 = arith.constant 129 : index
    %119 = vector.load %arg12[%c0_103, %c129_104] : memref<16x1217xbf16, #tpu.memory_space<vmem>>, vector<16x1024xbf16>
    %cst_105 = arith.constant dense<0.000000e+00> : vector<16x1024xf32>
    %120 = tpu.matmul %118, %119, %cst_105 {dimension_numbers = #tpu.dot_dimension_numbers<[1], [0], [0], [1], [0, 0, 1, 1], [], []>} : vector<16x16xbf16>, vector<16x1024xbf16>, vector<16x1024xf32> -> vector<16x1024xf32>
    %c80_106 = arith.constant 80 : index
    %c0_107 = arith.constant 0 : index
    %121 = vector.load %arg8[%c80_106, %c0_107] : memref<144x16xbf16, #tpu.memory_space<vmem>>, vector<16x16xbf16>
    %c0_108 = arith.constant 0 : index
    %c161 = arith.constant 161 : index
    %122 = vector.load %arg12[%c0_108, %c161] : memref<16x1217xbf16, #tpu.memory_space<vmem>>, vector<16x1024xbf16>
    %cst_109 = arith.constant dense<0.000000e+00> : vector<16x1024xf32>
    %123 = tpu.matmul %121, %122, %cst_109 {dimension_numbers = #tpu.dot_dimension_numbers<[1], [0], [0], [1], [0, 0, 1, 1], [], []>} : vector<16x16xbf16>, vector<16x1024xbf16>, vector<16x1024xf32> -> vector<16x1024xf32>
    %124 = arith.addf %120, %123 : vector<16x1024xf32>
    %c128_110 = arith.constant 128 : index
    %c0_111 = arith.constant 0 : index
    %125 = vector.load %arg8[%c128_110, %c0_111] : memref<144x16xbf16, #tpu.memory_space<vmem>>, vector<16x16xbf16>
    %c0_112 = arith.constant 0 : index
    %c193 = arith.constant 193 : index
    %126 = vector.load %arg12[%c0_112, %c193] : memref<16x1217xbf16, #tpu.memory_space<vmem>>, vector<16x1024xbf16>
    %cst_113 = arith.constant dense<0.000000e+00> : vector<16x1024xf32>
    %127 = tpu.matmul %125, %126, %cst_113 {dimension_numbers = #tpu.dot_dimension_numbers<[1], [0], [0], [1], [0, 0, 1, 1], [], []>} : vector<16x16xbf16>, vector<16x1024xbf16>, vector<16x1024xf32> -> vector<16x1024xf32>
    %128 = arith.addf %124, %127 : vector<16x1024xf32>
    %cst_114 = arith.constant 0.000000e+00 : f32
    %129 = vector.shape_cast %90 : vector<1x1024xi1> to vector<1x1024xi1>
    %130 = vector.broadcast %129 : vector<1x1024xi1> to vector<16x1024xi1>
    %131 = vector.broadcast %cst_114 : f32 to vector<16x1024xf32>
    %132 = arith.select %130, %128, %131 : vector<16x1024xi1>, vector<16x1024xf32>
    %133 = arith.addf %117, %132 : vector<16x1024xf32>
    %c0_115 = arith.constant 0 : index
    %c0_116 = arith.constant 0 : index
    %134 = vector.load %arg9[%c0_115, %c0_116] : memref<16x1xf32, #tpu.memory_space<vmem>>, vector<16x1xf32>
    %135 = vector.broadcast %134 : vector<16x1xf32> to vector<16x1024xf32>
    %136 = arith.addf %133, %135 : vector<16x1024xf32>
    %cst_117 = arith.constant 1.000000e+00 : f32
    %137 = vector.broadcast %cst_117 : f32 to vector<16x1024xf32>
    %138 = arith.mulf %136, %137 : vector<16x1024xf32>
    %c0_118 = arith.constant 0 : index
    %c0_119 = arith.constant 0 : index
    %c0_120 = arith.constant 0 : index
    %139 = vector.load %arg4[%c0_118, %c0_119, %c0_120] : memref<1x16x1024xf32, #tpu.memory_space<vmem>>, vector<1x16x1024xf32>
    %140 = vector.shape_cast %139 : vector<1x16x1024xf32> to vector<16x1024xf32>
    %141 = arith.addf %138, %140 : vector<16x1024xf32>
    %c0_121 = arith.constant 0 : index
    %c0_122 = arith.constant 0 : index
    %c0_123 = arith.constant 0 : index
    %142 = vector.load %arg10[%c0_121, %c0_122, %c0_123] : memref<1x16x1024xf32, #tpu.memory_space<vmem>>, vector<1x16x1024xf32>
    %143 = vector.shape_cast %142 : vector<1x16x1024xf32> to vector<16x1024xf32>
    %144 = vector.shape_cast %141 : vector<16x1024xf32> to vector<1x16x1024xf32>
    tpu.vector_store %arg10[%c0_121, %c0_122, %c0_123], %144 {strides = array<i32>} : memref<1x16x1024xf32, #tpu.memory_space<vmem>>, vector<1x16x1024xf32>,
    return
  }
  func.func @transform_0(%arg0: i32, %arg1: i32) -> (i32, i32) {
    %c0_i32 = arith.constant 0 : i32
    %c0_i32_0 = arith.constant 0 : i32
    %c0_i32_1 = arith.constant 0 : i32
    return %c0_i32, %c0_i32_0 : i32, i32
  }
  func.func @transform_1(%arg0: i32, %arg1: i32) -> (i32, i32, i32) {
    %c8_i32 = arith.constant 8 : i32
    %0 = arith.muli %arg1, %c8_i32 : i32
    %c1_i32 = arith.constant 1 : i32
    %1 = arith.subi %0, %c1_i32 : i32
    %c0_i32 = arith.constant 0 : i32
    %2 = arith.maxsi %1, %c0_i32 : i32
    %c0_i32_0 = arith.constant 0 : i32
    %c0_i32_1 = arith.constant 0 : i32
    return %arg0, %c0_i32_0, %2 : i32, i32, i32
  }
  func.func @transform_2(%arg0: i32, %arg1: i32) -> (i32, i32, i32) {
    %c0_i32 = arith.constant 0 : i32
    %c0_i32_0 = arith.constant 0 : i32
    return %arg0, %c0_i32, %arg1 : i32, i32, i32
  }
  func.func @transform_3(%arg0: i32, %arg1: i32) -> (i32, i32, i32) {
    %c1_i32 = arith.constant 1 : i32
    %0 = arith.addi %arg1, %c1_i32 : i32
    %c8_i32 = arith.constant 8 : i32
    %1 = arith.muli %0, %c8_i32 : i32
    %c7_i32 = arith.constant 7 : i32
    %2 = arith.minsi %1, %c7_i32 : i32
    %c0_i32 = arith.constant 0 : i32
    %c0_i32_0 = arith.constant 0 : i32
    return %arg0, %c0_i32, %2 : i32, i32, i32
  }
  func.func @transform_4(%arg0: i32, %arg1: i32) -> (i32, i32) {
    %c0_i32 = arith.constant 0 : i32
    %c0_i32_0 = arith.constant 0 : i32
    %c0_i32_1 = arith.constant 0 : i32
    return %c0_i32, %c0_i32_0 : i32, i32
  }
  func.func @transform_5(%arg0: i32, %arg1: i32) -> (i32, i32) {
    %c0_i32 = arith.constant 0 : i32
    %c0_i32_0 = arith.constant 0 : i32
    %c0_i32_1 = arith.constant 0 : i32
    return %c0_i32, %c0_i32_0 : i32, i32
  }
  func.func @transform_6(%arg0: i32, %arg1: i32) -> (i32, i32) {
    %c0_i32 = arith.constant 0 : i32
    %c0_i32_0 = arith.constant 0 : i32
    %c0_i32_1 = arith.constant 0 : i32
    return %c0_i32, %c0_i32_0 : i32, i32
  }
  func.func @transform_7(%arg0: i32, %arg1: i32) -> (i32, i32) {
    %c0_i32 = arith.constant 0 : i32
    %c0_i32_0 = arith.constant 0 : i32
    %c0_i32_1 = arith.constant 0 : i32
    return %c0_i32, %c0_i32_0 : i32, i32
  }
  func.func @transform_8(%arg0: i32, %arg1: i32) -> (i32, i32, i32) {
    %c0_i32 = arith.constant 0 : i32
    %c0_i32_0 = arith.constant 0 : i32
    return %arg0, %c0_i32, %arg1 : i32, i32, i32
  }
}

</mosaic_0001>

<llo_original>
// kernel: tile.9
$region0: #{tile.9}
  %s0 = inlined_call_operand.vmem [shape: s32[34,32], index: 0, kind: input, shape index: {}]
  %s1 = inlined_call_operand.vmem [shape: s32[1,1088], index: 1, kind: output, shape index: {}]
  $region1: #{tile.9} parent=0
    #allocation0 [shape = 'u8[36864]{0}', space=vmem, size = 0x9000, scoped, tag = 'scoped mem for output reshape']
    %v2 = vld [vmem:[%s0] ss:$4 sm:$0xff]
    %vm3 = vcmask 261120
    %4 = vst.msk [vmem:[#allocation0] ss:$8 sm:$0xf] %vm3, %v2
    %5 = vst.msk [vmem:[#allocation0] ss:$8 sm:$0xf0] %vm3, %v2
    %s6 = scalar_lea.vmem %s0, 32
    %v7 = vld [vmem:[%s6] sm:$0x1]
    %vm8 = vcmask 261120
    %s9 = scalar_lea.vmem [#allocation0], 64
    %10 = vst.msk [vmem:[%s9] sm:$0x1] %vm8, %v7
    %s11 = scalar_lea.vmem %s0, 3
    %v12 = vld [vmem:[%s11] ss:$4 sm:$0xff]
    %13 = vrot.lane.b32.xlu0 %v12, 96
    %v14 = vpop.permute.xlu0 %13
    %vm15 = vcmask 1048320
    %16 = vst.msk [vmem:[#allocation0] ss:$8 sm:$0xf] %vm15, %v14
    %17 = vst.msk [vmem:[#allocation0] ss:$8 sm:$0xf0] %vm15, %v14
    %s18 = scalar_lea.vmem %s0, 2
    %v19 = vld [vmem:[%s18] ss:$4 sm:$0xff]
    %20 = vrot.lane.b32.xlu0 %v19, 64
    %v21 = vpop.permute.xlu0 %20
    %vm22 = vcmask 785920
    %23 = vst.msk [vmem:[#allocation0] ss:$8 sm:$0xf] %vm22, %v21
    %24 = vst.msk [vmem:[#allocation0] ss:$8 sm:$0xf0] %vm22, %v21
    %s25 = scalar_lea.vmem %s0, 1
    %v26 = vld [vmem:[%s25] ss:$4 sm:$0xff]
    %27 = vrot.lane.b32.xlu0 %v26, 32
    %v28 = vpop.permute.xlu0 %27
    %vm29 = vcmask 523520
    %30 = vst.msk [vmem:[#allocation0] ss:$8 sm:$0xf] %vm29, %v28
    %31 = vst.msk [vmem:[#allocation0] ss:$8 sm:$0xf0] %vm29, %v28
    %s32 = scalar_lea.vmem %s0, 33
    %v33 = vld [vmem:[%s32] sm:$0x1]
    %34 = vrot.lane.b32.xlu0 %v33, 32
    %v35 = vpop.permute.xlu0 %34
    %vm36 = vcmask 523520
    %s37 = scalar_lea.vmem [#allocation0], 64
    %38 = vst.msk [vmem:[%s37] sm:$0x1] %vm36, %v35
    %s40 = ssub.s32 2, 1
    %v41 = vld [vmem:[#allocation0] sm:%s40]
    %s43 = ssub.s32 2, 1
    %44 = vst [vmem:[%s1] sm:%s43] %v41
    %s45 = scalar_lea.vmem [#allocation0], 8
    %v46 = vld [vmem:[%s45] sm:%s40]
    %s48 = ssub.s32 2, 1
    %s49 = scalar_lea.vmem %s1, 1
    %50 = vst [vmem:[%s49] sm:%s48] %v46
    %s51 = scalar_lea.vmem [#allocation0], 16
    %v52 = vld [vmem:[%s51] sm:%s40]
    %s54 = ssub.s32 2, 1
    %s55 = scalar_lea.vmem %s1, 2
    %56 = vst [vmem:[%s55] sm:%s54] %v52
    %s57 = scalar_lea.vmem [#allocation0], 24
    %v58 = vld [vmem:[%s57] sm:%s40]
    %s60 = ssub.s32 2, 1
    %s61 = scalar_lea.vmem %s1, 3
    %62 = vst [vmem:[%s61] sm:%s60] %v58
    %s63 = scalar_lea.vmem [#allocation0], 32
    %v64 = vld [vmem:[%s63] sm:%s40]
    %s66 = ssub.s32 2, 1
    %s67 = scalar_lea.vmem %s1, 4
    %68 = vst [vmem:[%s67] sm:%s66] %v64
    %s69 = scalar_lea.vmem [#allocation0], 40
    %v70 = vld [vmem:[%s69] sm:%s40]
    %s72 = ssub.s32 2, 1
    %s73 = scalar_lea.vmem %s1, 5
    %74 = vst [vmem:[%s73] sm:%s72] %v70
    %s75 = scalar_lea.vmem [#allocation0], 48
    %v76 = vld [vmem:[%s75] sm:%s40]
    %s78 = ssub.s32 2, 1
    %s79 = scalar_lea.vmem %s1, 6
    %80 = vst [vmem:[%s79] sm:%s78] %v76
    %s81 = scalar_lea.vmem [#allocation0], 56
    %v82 = vld [vmem:[%s81] sm:%s40]
    %s84 = ssub.s32 2, 1
    %s85 = scalar_lea.vmem %s1, 7
    %86 = vst [vmem:[%s85] sm:%s84] %v82
    %s87 = scalar_lea.vmem [#allocation0], 64
    %v88 = vld [vmem:[%s87] sm:%s40]
    %s90 = ssub.s32 2, 1
    %s91 = scalar_lea.vmem %s1, 8
    %92 = vst [vmem:[%s91] sm:%s90] %v88

// kernel: resblock_forward.1
$region0: #{resblock_forward.1}
  #allocation0 [shape = 'u32[]', space=smem, size = 0x4, offset = 0x4, fixed_abs, tag = 'smem constant byte address 0x4 - core index']
  #allocation1 [shape = 'u32[72,128]{1,0:T(1,128)}', space=vmem, size = 0x9000, scoped, tag = 'internal scratch']
  #allocation2 [shape = 'bf16[16,1217]{1,0:T(8,128)(2,1)}', space=vmem, size = 0xa000, scoped, tag = 'scratch operand']
  #allocation3 [shape = 'bf16[16,1217]{1,0:T(8,128)(2,1)}', space=vmem, size = 0xa000, scoped, tag = 'scratch operand']
  %s0 = inlined_call_operand.vmem [shape: s32[1,1088], index: 0, kind: input, shape index: {}]
  %s1 = inlined_call_operand.vmem [shape: f32[2,16,1024], index: 1, kind: input, shape index: {}, may-alias: {1,2,3}]
  %s2 = inlined_call_operand.vmem [shape: f32[2,16,1024], index: 2, kind: input, shape index: {}, may-alias: {1,2,3}]
  %s3 = inlined_call_operand.vmem [shape: f32[2,16,1024], index: 3, kind: input, shape index: {}, may-alias: {1,2,3}]
  %s4 = inlined_call_operand.vmem [shape: bf16[144,16], index: 4, kind: input, shape index: {}]
  %s5 = inlined_call_operand.vmem [shape: f32[16,1], index: 5, kind: input, shape index: {}]
  %s6 = inlined_call_operand.vmem [shape: bf16[144,16], index: 6, kind: input, shape index: {}]
  %s7 = inlined_call_operand.vmem [shape: f32[16,1], index: 7, kind: input, shape index: {}]
  %s8 = inlined_call_operand.vmem [shape: f32[2,16,1024], index: 8, kind: output, shape index: {}]
  %s9 = sld [smem:[#allocation0]]
  $region145: #{resblock_forward.1} parent=0
    _
  %s11 = ssub.s32 1, %s9
  %s12 = scalar_select 0, %s11, %s9
  $region1: #{resblock_forward.1} parent=0
    #allocation4 [shape = 'u8[16384]{0}', space=vmem, size = 0x4000, scoped, tag = 'input window, operand 1']
    #allocation5 [shape = 'u8[16384]{0}', space=vmem, size = 0x4000, scoped, tag = 'input window, operand 3']
    loop: start=0, step=1, limit=4
    $region2: #{resblock_forward.1} parent=1 // loop_pre_header
      _
    $region3: #{resblock_forward.1} parent=1 // loop_header
      %s14 = sphi 0, %s18
      %p15 = scmp.ge.s32.totalorder %s14, 4
      %s21 = sphi 0, %s33
      %s22 = sphi 0, %s29
      %s23 = sphi 0, %s21
      %s24 = sphi 0, %s22
      %s25 = sphi 0, %s23
      %s26 = sphi 0, %s24
      %s34 = sphi 0, %s34
      %s36 = sphi 0, %s34
      %s37 = sphi 0, %s36
      %s51 = sphi 0, %s37
      %s67 = sphi 0, %s69
      %s70 = sphi 0, %s67
      %s71 = sphi 0, %s70
      %s87 = sphi 0, %s71
      %s95 = sphi 0, %s97
      %s98 = sphi 0, %s95
      %s99 = sphi 0, %s98
      %s115 = sphi 0, %s99
      %s131 = sphi 0, %s133
      %s134 = sphi 0, %s131
      %s135 = sphi 0, %s134
      %s151 = sphi 0, %s135
      %s155 = sphi 0, %s155
      %s157 = sphi 0, %s155
      %s158 = sphi 0, %s157
      %s172 = sphi 0, %s158
      %s176 = sphi 0, %s176
      %s178 = sphi 0, %s176
      %s179 = sphi 0, %s178
      %s193 = sphi 0, %s179
      %s197 = sphi 0, %s197
      %s199 = sphi 0, %s197
      %s200 = sphi 0, %s199
      %s214 = sphi 0, %s200
      %s218 = sphi 0, %s218
      %s220 = sphi 0, %s218
      %s221 = sphi 0, %s220
      %s235 = sphi 0, %s221
      %s243 = sphi 0, %s245
      %s246 = sphi 0, %s243
      %s247 = sphi 0, %s246
      %s263 = sphi 0, %s247
    $region4: #{resblock_forward.1} parent=1 // loop_header_branch
      %17 = sbr.rel (%p15) target = $region8
    $region5: #{resblock_forward.1} parent=1 // loop_body
      %s19 = ssub.s32 %s14, 1
      %s20 = ssub.s32 %s14, 2
      %s27 = sadd.s32 1, %s22
      %p28 = scmp.ge.s32.totalorder %s27, 1
      %s29 = scalar_select %p28, 0, %s27
      %s30 = sadd.s32 1, %s21
      %s31 = scalar_select %p28, %s30, %s21
      %p32 = scmp.ge.s32.totalorder %s31, 2
      %s33 = scalar_select %p32, 0, %s31
      %s35 = sadd.s32 %s34, 1
      %p38 = scmp.eq.s32.totalorder %s14, 1
      %p39 = scmp.ne.s32.totalorder %s34, %s36
      %p40 = scmp.eq.s32.totalorder %s14, 0
      %p41 = por %p39, %p40
      %p42 = scmp.ne.s32.totalorder %s34, %s36
      %p43 = scmp.eq.s32.totalorder %s19, 1
      %p44 = por %p42, %p43
      %p45 = scmp.ne.s32.totalorder %s36, %s37
      %p46 = scmp.eq.s32.totalorder %s19, 0
      %p47 = por %p45, %p46
      %p48 = scmp.ne.s32.totalorder %s36, %s37
      %p49 = scmp.eq.s32.totalorder %s20, 1
      %p50 = por %p48, %p49
      %p52 = scmp.ne.s32.totalorder %s37, %s51
      %p53 = scmp.eq.s32.totalorder %s20, 0
      %p54 = por %p52, %p53
      %s55 = smul.u32 %s22, 8
      %s56 = ssub.s32 %s55, 1
      %p57 = scmp.gt.s32.totalorder %s56, 0
      %s58 = scalar_select %p57, %s56, 0
      %s59 = smul.u32 %s29, 8
      %s60 = ssub.s32 %s59, 1
      %p61 = scmp.gt.s32.totalorder %s60, 0
      %s62 = scalar_select %p61, %s60, 0
      %s63 = ssub.s32 %s21, %s33
      %s64 = ssub.s32 %s58, %s62
      %s65 = sor.u32 %s63, %s64
      %p66 = scmp.eq.s32.totalorder %s65, 0
      %s68 = sadd.s32 %s67, 1
      %s69 = scalar_select %p66, %s67, %s68
      %p72 = pneg %p66
      %p73 = scmp.eq.s32.totalorder %s14, 1
      %p74 = por %p72, %p73
      %p75 = scmp.ne.s32.totalorder %s67, %s70
      %p76 = scmp.eq.s32.totalorder %s14, 0
      %p77 = por %p75, %p76
      %p78 = scmp.ne.s32.totalorder %s67, %s70
      %p79 = scmp.eq.s32.totalorder %s19, 1
      %p80 = por %p78, %p79
      %p81 = scmp.ne.s32.totalorder %s70, %s71
      %p82 = scmp.eq.s32.totalorder %s19, 0
      %p83 = por %p81, %p82
      %p84 = scmp.ne.s32.totalorder %s70, %s71
      %p85 = scmp.eq.s32.totalorder %s20, 1
      %p86 = por %p84, %p85
      %p88 = scmp.ne.s32.totalorder %s71, %s87
      %p89 = scmp.eq.s32.totalorder %s20, 0
      %p90 = por %p88, %p89
      %s91 = ssub.s32 %s21, %s33
      %s92 = ssub.s32 %s22, %s29
      %s93 = sor.u32 %s91, %s92
      %p94 = scmp.eq.s32.totalorder %s93, 0
      %s96 = sadd.s32 %s95, 1
      %s97 = scalar_select %p94, %s95, %s96
      %p100 = pneg %p94
      %p101 = scmp.eq.s32.totalorder %s14, 1
      %p102 = por %p100, %p101
      %p103 = scmp.ne.s32.totalorder %s95, %s98
      %p104 = scmp.eq.s32.totalorder %s14, 0
      %p105 = por %p103, %p104
      %p106 = scmp.ne.s32.totalorder %s95, %s98
      %p107 = scmp.eq.s32.totalorder %s19, 1
      %p108 = por %p106, %p107
      %p109 = scmp.ne.s32.totalorder %s98, %s99
      %p110 = scmp.eq.s32.totalorder %s19, 0
      %p111 = por %p109, %p110
      %p112 = scmp.ne.s32.totalorder %s98, %s99
      %p113 = scmp.eq.s32.totalorder %s20, 1
      %p114 = por %p112, %p113
      %p116 = scmp.ne.s32.totalorder %s99, %s115
      %p117 = scmp.eq.s32.totalorder %s20, 0
      %p118 = por %p116, %p117
      %s119 = sadd.s32 %s22, 1
      %s120 = smul.u32 %s119, 8
      %p121 = scmp.lt.s32.totalorder %s120, 7
      %s122 = scalar_select %p121, %s120, 7
      %s123 = sadd.s32 %s29, 1
      %s124 = smul.u32 %s123, 8
      %p125 = scmp.lt.s32.totalorder %s124, 7
      %s126 = scalar_select %p125, %s124, 7
      %s127 = ssub.s32 %s21, %s33
      %s128 = ssub.s32 %s122, %s126
      %s129 = sor.u32 %s127, %s128
      %p130 = scmp.eq.s32.totalorder %s129, 0
      %s132 = sadd.s32 %s131, 1
      %s133 = scalar_select %p130, %s131, %s132
      %p136 = pneg %p130
      %p137 = scmp.eq.s32.totalorder %s14, 1
      %p138 = por %p136, %p137
      %p139 = scmp.ne.s32.totalorder %s131, %s134
      %p140 = scmp.eq.s32.totalorder %s14, 0
      %p141 = por %p139, %p140
      %p142 = scmp.ne.s32.totalorder %s131, %s134
      %p143 = scmp.eq.s32.totalorder %s19, 1
      %p144 = por %p142, %p143
      %p145 = scmp.ne.s32.totalorder %s134, %s135
      %p146 = scmp.eq.s32.totalorder %s19, 0
      %p147 = por %p145, %p146
      %p148 = scmp.ne.s32.totalorder %s134, %s135
      %p149 = scmp.eq.s32.totalorder %s20, 1
      %p150 = por %p148, %p149
      %p152 = scmp.ne.s32.totalorder %s135, %s151
      %p153 = scmp.eq.s32.totalorder %s20, 0
      %p154 = por %p152, %p153
      %s156 = sadd.s32 %s155, 1
      %p159 = scmp.eq.s32.totalorder %s14, 1
      %p160 = scmp.ne.s32.totalorder %s155, %s157
      %p161 = scmp.eq.s32.totalorder %s14, 0
      %p162 = por %p160, %p161
      %p163 = scmp.ne.s32.totalorder %s155, %s157
      %p164 = scmp.eq.s32.totalorder %s19, 1
      %p165 = por %p163, %p164
      %p166 = scmp.ne.s32.totalorder %s157, %s158
      %p167 = scmp.eq.s32.totalorder %s19, 0
      %p168 = por %p166, %p167
      %p169 = scmp.ne.s32.totalorder %s157, %s158
      %p170 = scmp.eq.s32.totalorder %s20, 1
      %p171 = por %p169, %p170
      %p173 = scmp.ne.s32.totalorder %s158, %s172
      %p174 = scmp.eq.s32.totalorder %s20, 0
      %p175 = por %p173, %p174
      %s177 = sadd.s32 %s176, 1
      %p180 = scmp.eq.s32.totalorder %s14, 1
      %p181 = scmp.ne.s32.totalorder %s176, %s178
      %p182 = scmp.eq.s32.totalorder %s14, 0
      %p183 = por %p181, %p182
      %p184 = scmp.ne.s32.totalorder %s176, %s178
      %p185 = scmp.eq.s32.totalorder %s19, 1
      %p186 = por %p184, %p185
      %p187 = scmp.ne.s32.totalorder %s178, %s179
      %p188 = scmp.eq.s32.totalorder %s19, 0
      %p189 = por %p187, %p188
      %p190 = scmp.ne.s32.totalorder %s178, %s179
      %p191 = scmp.eq.s32.totalorder %s20, 1
      %p192 = por %p190, %p191
      %p194 = scmp.ne.s32.totalorder %s179, %s193
      %p195 = scmp.eq.s32.totalorder %s20, 0
      %p196 = por %p194, %p195
      %s198 = sadd.s32 %s197, 1
      %p201 = scmp.eq.s32.totalorder %s14, 1
      %p202 = scmp.ne.s32.totalorder %s197, %s199
      %p203 = scmp.eq.s32.totalorder %s14, 0
      %p204 = por %p202, %p203
      %p205 = scmp.ne.s32.totalorder %s197, %s199
      %p206 = scmp.eq.s32.totalorder %s19, 1
      %p207 = por %p205, %p206
      %p208 = scmp.ne.s32.totalorder %s199, %s200
      %p209 = scmp.eq.s32.totalorder %s19, 0
      %p210 = por %p208, %p209
      %p211 = scmp.ne.s32.totalorder %s199, %s200
      %p212 = scmp.eq.s32.totalorder %s20, 1
      %p213 = por %p211, %p212
      %p215 = scmp.ne.s32.totalorder %s200, %s214
      %p216 = scmp.eq.s32.totalorder %s20, 0
      %p217 = por %p215, %p216
      %s219 = sadd.s32 %s218, 1
      %p222 = scmp.eq.s32.totalorder %s14, 1
      %p223 = scmp.ne.s32.totalorder %s218, %s220
      %p224 = scmp.eq.s32.totalorder %s14, 0
      %p225 = por %p223, %p224
      %p226 = scmp.ne.s32.totalorder %s218, %s220
      %p227 = scmp.eq.s32.totalorder %s19, 1
      %p228 = por %p226, %p227
      %p229 = scmp.ne.s32.totalorder %s220, %s221
      %p230 = scmp.eq.s32.totalorder %s19, 0
      %p231 = por %p229, %p230
      %p232 = scmp.ne.s32.totalorder %s220, %s221
      %p233 = scmp.eq.s32.totalorder %s20, 1
      %p234 = por %p232, %p233
      %p236 = scmp.ne.s32.totalorder %s221, %s235
      %p237 = scmp.eq.s32.totalorder %s20, 0
      %p238 = por %p236, %p237
      %s239 = ssub.s32 %s21, %s33
      %s240 = ssub.s32 %s22, %s29
      %s241 = sor.u32 %s239, %s240
      %p242 = scmp.eq.s32.totalorder %s241, 0
      %s244 = sadd.s32 %s243, 1
      %s245 = scalar_select %p242, %s243, %s244
      %p248 = pneg %p242
      %p249 = scmp.eq.s32.totalorder %s14, 1
      %p250 = por %p248, %p249
      %p251 = scmp.ne.s32.totalorder %s243, %s246
      %p252 = scmp.eq.s32.totalorder %s14, 0
      %p253 = por %p251, %p252
      %p254 = scmp.ne.s32.totalorder %s243, %s246
      %p255 = scmp.eq.s32.totalorder %s19, 1
      %p256 = por %p254, %p255
      %p257 = scmp.ne.s32.totalorder %s246, %s247
      %p258 = scmp.eq.s32.totalorder %s19, 0
      %p259 = por %p257, %p258
      %p260 = scmp.ne.s32.totalorder %s246, %s247
      %p261 = scmp.eq.s32.totalorder %s20, 1
      %p262 = por %p260, %p261
      %p264 = scmp.ne.s32.totalorder %s247, %s263
      %p265 = scmp.eq.s32.totalorder %s20, 0
      %p266 = por %p264, %p265
      %p267 = scmp.le.s32.totalorder 1, %s14
      %p268 = scmp.lt.s32.totalorder %s14, 3
      %p269 = pnand %p267, %p268
      %p270 = pneg %p269
      // Predicated region
      $region9: #{resblock_forward.1} parent=5 // pred_check
        _
      $region10: #{resblock_forward.1} parent=5 // pred_check_branch
        %272 = sbr.rel (%p269) target = $region12
      $region11: #{resblock_forward.1} parent=5 // pred_region
        %s273 = ssub.s32 %s14, 1
        // Predicated region
        $region13: #{resblock_forward.1} parent=11 // pred_check
          %p274 = pneg %p47
        $region14: #{resblock_forward.1} parent=11 // pred_check_branch
          %276 = sbr.rel (%p274) target = $region16
        $region15: #{resblock_forward.1} parent=11 // pred_region
          _
        $region16: #{resblock_forward.1} parent=11 // pred_fallthru
          _
        // Predicated region
        $region17: #{resblock_forward.1} parent=11 // pred_check
          %p277 = pneg %p168
        $region18: #{resblock_forward.1} parent=11 // pred_check_branch
          %279 = sbr.rel (%p277) target = $region20
        $region19: #{resblock_forward.1} parent=11 // pred_region
          _
        $region20: #{resblock_forward.1} parent=11 // pred_fallthru
          _
        // Predicated region
        $region21: #{resblock_forward.1} parent=11 // pred_check
          %p280 = pneg %p189
        $region22: #{resblock_forward.1} parent=11 // pred_check_branch
          %282 = sbr.rel (%p280) target = $region24
        $region23: #{resblock_forward.1} parent=11 // pred_region
          _
        $region24: #{resblock_forward.1} parent=11 // pred_fallthru
          _
        // Predicated region
        $region25: #{resblock_forward.1} parent=11 // pred_check
          %p283 = pneg %p210
        $region26: #{resblock_forward.1} parent=11 // pred_check_branch
          %285 = sbr.rel (%p283) target = $region28
        $region27: #{resblock_forward.1} parent=11 // pred_region
          _
        $region28: #{resblock_forward.1} parent=11 // pred_fallthru
          _
        // Predicated region
        $region29: #{resblock_forward.1} parent=11 // pred_check
          %p286 = pneg %p231
        $region30: #{resblock_forward.1} parent=11 // pred_check_branch
          %288 = sbr.rel (%p286) target = $region32
        $region31: #{resblock_forward.1} parent=11 // pred_region
          _
        $region32: #{resblock_forward.1} parent=11 // pred_fallthru
          _
      $region12: #{resblock_forward.1} parent=5 // pred_fallthru
        _
      %p289 = scmp.lt.s32.totalorder %s14, 2
      // Predicated region
      $region33: #{resblock_forward.1} parent=5 // pred_check
        %p290 = pneg %p289
      $region34: #{resblock_forward.1} parent=5 // pred_check_branch
        %292 = sbr.rel (%p290) target = $region36
      $region35: #{resblock_forward.1} parent=5 // pred_region
        // Predicated region
        $region37: #{resblock_forward.1} parent=35 // pred_check
          %p293 = pneg %p77
        $region38: #{resblock_forward.1} parent=35 // pred_check_branch
          %295 = sbr.rel (%p293) target = $region40
        $region39: #{resblock_forward.1} parent=35 // pred_region
          %s296 = sand.u32 %s67, 1
          %s297 = sand.u32 %s67, 1
          %s298 = smul.addr %s297, 16
          %s299 = scalar_lea.vmem [#allocation4], %s298
          %s300 = smul.u32 %s22, 8
          %s301 = ssub.s32 %s300, 1
          %p302 = scmp.gt.s32.totalorder %s301, 0
          %s303 = scalar_select %p302, %s301, 0
          %s304 = smul.addr %s21, 16
          %s305 = sadd.s32 %s303, %s304
          %s306 = smul.addr %s305, 8
          %s307 = scalar_lea.vmem %s1, %s306
          // Predicated region
          $region41: #{resblock_forward.1} parent=39 // pred_check
            _
          $region42: #{resblock_forward.1} parent=39 // pred_check_branch
            %309 = sbr.rel (0) target = $region44
          $region43: #{resblock_forward.1} parent=39 // pred_region
            // Predicated region
            $region45: #{resblock_forward.1} parent=43 // pred_check
              _
            $region46: #{resblock_forward.1} parent=43 // pred_check_branch
              %311 = sbr.rel (0) target = $region48
            $region47: #{resblock_forward.1} parent=43 // pred_region
              // Predicated region
              $region60: #{resblock_forward.1} parent=47 // pred_check
                _
              $region61: #{resblock_forward.1} parent=47 // pred_check_branch
                %329 = sbr.rel (0) target = $region63
              $region62: #{resblock_forward.1} parent=47 // pred_region
                loop: start=0, step=1, limit=1
                $region64: #{resblock_forward.1} parent=62 // loop_pre_header
                  _
                $region65: #{resblock_forward.1} parent=62 // loop_header
                  %s331 = sphi 0, %s335
                  %p332 = scmp.ge.s32.totalorder %s331, 1
                  %s336 = sphi %s307, %s307
                  %s337 = sphi %s299, %s299
                $region66: #{resblock_forward.1} parent=62 // loop_header_branch
                  %334 = sbr.rel (%p332) target = $region70
                $region67: #{resblock_forward.1} parent=62 // loop_body
                  %v338 = vld [vmem:[%s336] sm:$0xff]
                  %339 = vst [vmem:[%s337] sm:$0xff] %v338
                  %v340 = vld [vmem:[%s336 + $0x40] sm:$0xff]
                  %341 = vst [vmem:[%s337 + $0x8] sm:$0xff] %v340
                $region68: #{resblock_forward.1} parent=62 // loop_footer
                  %s335 = sadd.s32 1, %s331
                $region69: #{resblock_forward.1} parent=62 // loop_footer_branch
                  %330 = sbr.rel target = $region65
                $region70: #{resblock_forward.1} parent=62 // loop_exit
                  _
              $region63: #{resblock_forward.1} parent=47 // pred_fallthru
                _
              // Predicated region
              $region71: #{resblock_forward.1} parent=47 // pred_check
                _
              $region72: #{resblock_forward.1} parent=47 // pred_check_branch
                %343 = sbr.rel target = $region74
              $region73: #{resblock_forward.1} parent=47 // pred_region
                _
              $region74: #{resblock_forward.1} parent=47 // pred_fallthru
                _
            $region48: #{resblock_forward.1} parent=43 // pred_fallthru
              _
            // Predicated region
            $region49: #{resblock_forward.1} parent=43 // pred_check
              _
            $region50: #{resblock_forward.1} parent=43 // pred_check_branch
              %313 = sbr.rel target = $region52
            $region51: #{resblock_forward.1} parent=43 // pred_region
              %s315 = ssub.s32 256, 1
              loop: start=0, step=1, limit=1
              $region53: #{resblock_forward.1} parent=51 // loop_pre_header
                _
              $region54: #{resblock_forward.1} parent=51 // loop_header
                %s317 = sphi 0, %s321
                %p318 = scmp.ge.s32.totalorder %s317, 1
                %s322 = sphi %s307, %s307
                %s323 = sphi %s299, %s299
              $region55: #{resblock_forward.1} parent=51 // loop_header_branch
                %320 = sbr.rel (%p318) target = $region59
              $region56: #{resblock_forward.1} parent=51 // loop_body
                %v324 = vld [vmem:[%s322] sm:%s315]
                %325 = vst [vmem:[%s323] sm:%s315] %v324
                %v326 = vld [vmem:[%s322 + $0x40] sm:%s315]
                %327 = vst [vmem:[%s323 + $0x8] sm:%s315] %v326
              $region57: #{resblock_forward.1} parent=51 // loop_footer
                %s321 = sadd.s32 1, %s317
              $region58: #{resblock_forward.1} parent=51 // loop_footer_branch
                %316 = sbr.rel target = $region54
              $region59: #{resblock_forward.1} parent=51 // loop_exit
                _
            $region52: #{resblock_forward.1} parent=43 // pred_fallthru
              _
          $region44: #{resblock_forward.1} parent=39 // pred_fallthru
            _
          %344 = vnop
        $region40: #{resblock_forward.1} parent=35 // pred_fallthru
          _
        // Predicated region
        $region75: #{resblock_forward.1} parent=35 // pred_check
          %p345 = pneg %p105
        $region76: #{resblock_forward.1} parent=35 // pred_check_branch
          %347 = sbr.rel (%p345) target = $region78
        $region77: #{resblock_forward.1} parent=35 // pred_region
          %s348 = smul.u32 8, %s22
          %p349 = scmp.lt.s32.totalorder %s21, 1
          %s350 = scalar_select %p349, %s21, 1
          %p351 = scmp.lt.s32.totalorder %s348, 7
          %s352 = scalar_select %p351, %s348, 7
          %s353 = smul.addr %s350, 16
          %s354 = sadd.s32 %s352, %s353
          %s355 = smul.addr %s354, 8
          %s356 = scalar_lea.vmem %s2, %s355
          %s357 = smul.u32 8, %s22
        $region78: #{resblock_forward.1} parent=35 // pred_fallthru
          _
        // Predicated region
        $region79: #{resblock_forward.1} parent=35 // pred_check
          %p358 = pneg %p141
        $region80: #{resblock_forward.1} parent=35 // pred_check_branch
          %360 = sbr.rel (%p358) target = $region82
        $region81: #{resblock_forward.1} parent=35 // pred_region
          %s361 = sand.u32 %s131, 1
          %s362 = sand.u32 %s131, 1
          %s363 = smul.addr %s362, 16
          %s364 = scalar_lea.vmem [#allocation5], %s363
          %s365 = sadd.s32 %s22, 1
          %s366 = smul.u32 %s365, 8
          %p367 = scmp.lt.s32.totalorder %s366, 7
          %s368 = scalar_select %p367, %s366, 7
          %s369 = smul.addr %s21, 16
          %s370 = sadd.s32 %s368, %s369
          %s371 = smul.addr %s370, 8
          %s372 = scalar_lea.vmem %s3, %s371
          // Predicated region
          $region83: #{resblock_forward.1} parent=81 // pred_check
            _
          $region84: #{resblock_forward.1} parent=81 // pred_check_branch
            %374 = sbr.rel (0) target = $region86
          $region85: #{resblock_forward.1} parent=81 // pred_region
            // Predicated region
            $region87: #{resblock_forward.1} parent=85 // pred_check
              _
            $region88: #{resblock_forward.1} parent=85 // pred_check_branch
              %376 = sbr.rel (0) target = $region90
            $region89: #{resblock_forward.1} parent=85 // pred_region
              // Predicated region
              $region102: #{resblock_forward.1} parent=89 // pred_check
                _
              $region103: #{resblock_forward.1} parent=89 // pred_check_branch
                %394 = sbr.rel (0) target = $region105
              $region104: #{resblock_forward.1} parent=89 // pred_region
                loop: start=0, step=1, limit=1
                $region106: #{resblock_forward.1} parent=104 // loop_pre_header
                  _
                $region107: #{resblock_forward.1} parent=104 // loop_header
                  %s396 = sphi 0, %s400
                  %p397 = scmp.ge.s32.totalorder %s396, 1
                  %s401 = sphi %s372, %s372
                  %s402 = sphi %s364, %s364
                $region108: #{resblock_forward.1} parent=104 // loop_header_branch
                  %399 = sbr.rel (%p397) target = $region112
                $region109: #{resblock_forward.1} parent=104 // loop_body
                  %v403 = vld [vmem:[%s401] sm:$0xff]
                  %404 = vst [vmem:[%s402] sm:$0xff] %v403
                  %v405 = vld [vmem:[%s401 + $0x40] sm:$0xff]
                  %406 = vst [vmem:[%s402 + $0x8] sm:$0xff] %v405
                $region110: #{resblock_forward.1} parent=104 // loop_footer
                  %s400 = sadd.s32 1, %s396
                $region111: #{resblock_forward.1} parent=104 // loop_footer_branch
                  %395 = sbr.rel target = $region107
                $region112: #{resblock_forward.1} parent=104 // loop_exit
                  _
              $region105: #{resblock_forward.1} parent=89 // pred_fallthru
                _
              // Predicated region
              $region113: #{resblock_forward.1} parent=89 // pred_check
                _
              $region114: #{resblock_forward.1} parent=89 // pred_check_branch
                %408 = sbr.rel target = $region116
              $region115: #{resblock_forward.1} parent=89 // pred_region
                _
              $region116: #{resblock_forward.1} parent=89 // pred_fallthru
                _
            $region90: #{resblock_forward.1} parent=85 // pred_fallthru
              _
            // Predicated region
            $region91: #{resblock_forward.1} parent=85 // pred_check
              _
            $region92: #{resblock_forward.1} parent=85 // pred_check_branch
              %378 = sbr.rel target = $region94
            $region93: #{resblock_forward.1} parent=85 // pred_region
              %s380 = ssub.s32 256, 1
              loop: start=0, step=1, limit=1
              $region95: #{resblock_forward.1} parent=93 // loop_pre_header
                _
              $region96: #{resblock_forward.1} parent=93 // loop_header
                %s382 = sphi 0, %s386
                %p383 = scmp.ge.s32.totalorder %s382, 1
                %s387 = sphi %s372, %s372
                %s388 = sphi %s364, %s364
              $region97: #{resblock_forward.1} parent=93 // loop_header_branch
                %385 = sbr.rel (%p383) target = $region101
              $region98: #{resblock_forward.1} parent=93 // loop_body
                %v389 = vld [vmem:[%s387] sm:%s380]
                %390 = vst [vmem:[%s388] sm:%s380] %v389
                %v391 = vld [vmem:[%s387 + $0x40] sm:%s380]
                %392 = vst [vmem:[%s388 + $0x8] sm:%s380] %v391
              $region99: #{resblock_forward.1} parent=93 // loop_footer
                %s386 = sadd.s32 1, %s382
              $region100: #{resblock_forward.1} parent=93 // loop_footer_branch
                %381 = sbr.rel target = $region96
              $region101: #{resblock_forward.1} parent=93 // loop_exit
                _
            $region94: #{resblock_forward.1} parent=85 // pred_fallthru
              _
          $region86: #{resblock_forward.1} parent=81 // pred_fallthru
            _
          %409 = vnop
        $region82: #{resblock_forward.1} parent=35 // pred_fallthru
          _
      $region36: #{resblock_forward.1} parent=5 // pred_fallthru
        _
      %p410 = scmp.le.s32.totalorder 1, %s14
      %p411 = scmp.lt.s32.totalorder %s14, 3
      %p412 = pnand %p410, %p411
      %p413 = pneg %p412
      // Predicated region
      $region117: #{resblock_forward.1} parent=5 // pred_check
        _
      $region118: #{resblock_forward.1} parent=5 // pred_check_branch
        %415 = sbr.rel (%p412) target = $region120
      $region119: #{resblock_forward.1} parent=5 // pred_region
        %s416 = ssub.s32 %s14, 1
        %s417 = sand.u32 %s70, 1
        %s418 = sand.u32 %s70, 1
        %s419 = smul.addr %s418, 16
        %s420 = scalar_lea.vmem [#allocation4], %s419
        // Predicated region
        $region121: #{resblock_forward.1} parent=119 // pred_check
          %p421 = pneg %p83
        $region122: #{resblock_forward.1} parent=119 // pred_check_branch
          %423 = sbr.rel (%p421) target = $region124
        $region123: #{resblock_forward.1} parent=119 // pred_region
          _
        $region124: #{resblock_forward.1} parent=119 // pred_fallthru
          _
        %s424 = sand.u32 %s134, 1
        %s425 = sand.u32 %s134, 1
        %s426 = smul.addr %s425, 16
        %s427 = scalar_lea.vmem [#allocation5], %s426
        // Predicated region
        $region125: #{resblock_forward.1} parent=119 // pred_check
          %p428 = pneg %p147
        $region126: #{resblock_forward.1} parent=119 // pred_check_branch
          %430 = sbr.rel (%p428) target = $region128
        $region127: #{resblock_forward.1} parent=119 // pred_region
          _
        $region128: #{resblock_forward.1} parent=119 // pred_fallthru
          _
        %p431 = pneg %p47
        %p432 = pneg %p44
        %s433 = sand.u32 %s70, 1
        %s434 = sand.u32 %s70, 1
        %s435 = smul.addr %s434, 16
        %s436 = scalar_lea.vmem [#allocation4], %s435
        %p437 = pneg %p83
        %p438 = pneg %p80
        %s439 = smul.u32 8, %s24
        %p440 = scmp.lt.s32.totalorder %s23, 1
        %s441 = scalar_select %p440, %s23, 1
        %p442 = scmp.lt.s32.totalorder %s439, 7
        %s443 = scalar_select %p442, %s439, 7
        %s444 = smul.addr %s441, 16
        %s445 = sadd.s32 %s443, %s444
        %s446 = smul.addr %s445, 8
        %s447 = scalar_lea.vmem %s2, %s446
        %p448 = pneg %p111
        %p449 = pneg %p108
        %s450 = sand.u32 %s134, 1
        %s451 = sand.u32 %s134, 1
        %s452 = smul.addr %s451, 16
        %s453 = scalar_lea.vmem [#allocation5], %s452
        %p454 = pneg %p147
        %p455 = pneg %p144
        %p456 = pneg %p168
        %p457 = pneg %p165
        %p458 = pneg %p189
        %p459 = pneg %p186
        %p460 = pneg %p210
        %p461 = pneg %p207
        %p462 = pneg %p231
        %p463 = pneg %p228
        %p464 = pneg %p259
        %p465 = pneg %p256
        %s466 = smul.u32 8, %s24
        %p467 = scmp.lt.s32.totalorder %s23, 1
        %s468 = scalar_select %p467, %s23, 1
        %p469 = scmp.lt.s32.totalorder %s466, 7
        %s470 = scalar_select %p469, %s466, 7
        %s471 = smul.addr %s468, 16
        %s472 = sadd.s32 %s470, %s471
        %s473 = smul.addr %s472, 8
        %s474 = scalar_lea.vmem %s8, %s473
        %s475 = smul.u32 %s24, 8
        %s476 = ssub.s32 %s475, 1
        %p477 = scmp.gt.s32.totalorder %s476, 0
        %s478 = scalar_select %p477, %s476, 0
        %s479 = smul.u32 8, %s24
        %p480 = scmp.lt.s32.totalorder %s23, 1
        %s481 = scalar_select %p480, %s23, 1
        %p482 = scmp.lt.s32.totalorder %s479, 7
        %s483 = scalar_select %p482, %s479, 7
        %s484 = smul.addr %s481, 16
        %s485 = sadd.s32 %s483, %s484
        %s486 = smul.addr %s485, 8
        %s487 = scalar_lea.vmem %s2, %s486
        %s488 = smul.u32 8, %s24
        %s489 = sadd.s32 %s24, 1
        %s490 = smul.u32 %s489, 8
        %p491 = scmp.lt.s32.totalorder %s490, 7
        %s492 = scalar_select %p491, %s490, 7
        %s493 = smul.u32 8, %s24
        %p494 = scmp.lt.s32.totalorder %s23, 1
        %s495 = scalar_select %p494, %s23, 1
        %p496 = scmp.lt.s32.totalorder %s493, 7
        %s497 = scalar_select %p496, %s493, 7
        %s498 = smul.addr %s495, 16
        %s499 = sadd.s32 %s497, %s498
        %s500 = smul.addr %s499, 8
        %s501 = scalar_lea.vmem %s8, %s500
        %s502 = smul.u32 8, %s24
        %v504 = vld [vmem:[%s420] sm:$0xff]
        %v505 = vld [vmem:[%s420 + $0x8] sm:$0xff]
        %v506 = vld [vmem:[%s427] sm:$0xff]
        %v507 = vld [vmem:[%s427 + $0x8] sm:$0xff]
        %vm508 = vcmask 519672
        %509 = vst.msk [vmem:[#allocation2] sm:$0xf] %vm508, 0
        %510 = vst.msk [vmem:[#allocation2 + $0x28] sm:$0xf] %vm508, 0
        %p511 = scmp.gt.s32.totalorder %s24, 0
        %s512 = scalar_select %p511, 1, 0
        %v513 = vstv %s512
        %vm514 = vcmp.eq.s32.totalorder %v513, 1
        %v515 = vsel %vm514, %v504, 0.0
        %v516 = vsel %vm514, %v505, 0.0
        %v517 = vpack.c.bf16 %v515, %v515
        %v518 = vpack.c.bf16 %v516, %v516
        %vm519 = vcmask 1043968
        %520 = vst.msk [vmem:[#allocation2] sm:$0xf] %vm519, %v517
        %521 = vst.msk [vmem:[#allocation2 + $0x28] sm:$0xf] %vm519, %v518
        %v522 = vld [vmem:[%s487] sm:$0xff]
        %v523 = vld [vmem:[%s487 + $0x8] sm:$0xff]
        %v524 = vld [vmem:[%s487 + $0x10] sm:$0xff]
        %v525 = vld [vmem:[%s487 + $0x18] sm:$0xff]
        %v526 = vld [vmem:[%s487 + $0x20] sm:$0xff]
        %v527 = vld [vmem:[%s487 + $0x28] sm:$0xff]
        %v528 = vld [vmem:[%s487 + $0x30] sm:$0xff]
        %v529 = vld [vmem:[%s487 + $0x38] sm:$0xff]
        %v530 = vld [vmem:[%s487 + $0x40] sm:$0xff]
        %v531 = vld [vmem:[%s487 + $0x48] sm:$0xff]
        %v532 = vld [vmem:[%s487 + $0x50] sm:$0xff]
        %v533 = vld [vmem:[%s487 + $0x58] sm:$0xff]
        %v534 = vld [vmem:[%s487 + $0x60] sm:$0xff]
        %v535 = vld [vmem:[%s487 + $0x68] sm:$0xff]
        %v536 = vld [vmem:[%s487 + $0x70] sm:$0xff]
        %v537 = vld [vmem:[%s487 + $0x78] sm:$0xff]
        %v538 = vpack.c.bf16 %v523, %v522
        %v539 = vpack.c.bf16 %v525, %v524
        %v540 = vpack.c.bf16 %v527, %v526
        %v541 = vpack.c.bf16 %v529, %v528
        %v542 = vpack.c.bf16 %v531, %v530
        %v543 = vpack.c.bf16 %v533, %v532
        %v544 = vpack.c.bf16 %v535, %v534
        %v545 = vpack.c.bf16 %v537, %v536
        %546 = vst [vmem:[#allocation2 + $0x4] sm:$0xff] %v538
        %547 = vst [vmem:[#allocation2 + $0xc] sm:$0xff] %v539
        %548 = vst [vmem:[#allocation2 + $0x14] sm:$0xff] %v540
        %549 = vst [vmem:[#allocation2 + $0x1c] sm:$0xff] %v541
        %550 = vst [vmem:[#allocation2 + $0x2c] sm:$0xff] %v542
        %551 = vst [vmem:[#allocation2 + $0x34] sm:$0xff] %v543
        %552 = vst [vmem:[#allocation2 + $0x3c] sm:$0xff] %v544
        %553 = vst [vmem:[#allocation2 + $0x44] sm:$0xff] %v545
        %p554 = scmp.lt.s32.totalorder %s24, 0
        %s555 = scalar_select %p554, 1, 0
        %v556 = vstv %s555
        %vm557 = vcmp.eq.s32.totalorder %v556, 1
        %v558 = vsel %vm557, %v506, 0.0
        %v559 = vsel %vm557, %v507, 0.0
        %v560 = vpack.c.bf16 %v558, %v558
        %v561 = vpack.c.bf16 %v559, %v559
        %vm562 = vcmask 519168
        %563 = vst.msk [vmem:[#allocation2 + $0x24] sm:$0xf] %vm562, %v560
        %564 = vst.msk [vmem:[#allocation2 + $0x4c] sm:$0xf] %vm562, %v561
        %vm565 = vcmask 527872
        %566 = vst.msk [vmem:[#allocation2 + $0x24] sm:$0xf] %vm565, 0
        %567 = vst.msk [vmem:[#allocation2 + $0x4c] sm:$0xf] %vm565, 0
        %v568 = vld [vmem:[%s0] sm:$0xff]
        %v569 = vld [vmem:[%s0 + $0x8] sm:$0x1]
        %vm570 = vcmp.gt.s32.totalorder %v568, 0
        %vm571 = vcmp.gt.s32.totalorder %v569, 0
        %vm572 = vcmp.lt.s32.totalorder %v568, 31
        %vm573 = vcmp.lt.s32.totalorder %v569, 31
        %v574 = vld [vmem:[%s4] sm:$0xf]
        %v575 = vld [vmem:[%s4 + $0x4] sm:$0xf]
        %v576 = vld [vmem:[#allocation2] sm:$0xff]
        %v577 = vld [vmem:[#allocation2 + $0x8] sm:$0xff]
        %v578 = vld [vmem:[#allocation2 + $0x10] sm:$0xff]
        %v579 = vld [vmem:[#allocation2 + $0x18] sm:$0xff]
        %v580 = vld [vmem:[#allocation2 + $0x20] sm:$0xf]
        %v581 = vld [vmem:[#allocation2 + $0x28] sm:$0xff]
        %v582 = vld [vmem:[#allocation2 + $0x30] sm:$0xff]
        %v583 = vld [vmem:[#allocation2 + $0x38] sm:$0xff]
        %v584 = vld [vmem:[#allocation2 + $0x40] sm:$0xff]
        %v585 = vld [vmem:[#allocation2 + $0x48] sm:$0xf]
        %v586 = vld [vmem:[%s4 + $0x18] sm:$0xf]
        %v587 = vld [vmem:[%s4 + $0x1c] sm:$0xf]
        %v588 = vld [vmem:[#allocation2 + $0x20] sm:$0xff]
        %v589 = vld [vmem:[#allocation2 + $0x48] sm:$0xff]
        %v592 = vunpack.c.l.b16 %v586
        %v593 = vunpack.c.l.b16 %v587
        %v594 = vpack.c.b16 %v593, %v592
        %v605 = vunpack.c.l.b16 %v576
        %v606 = vunpack.c.h.b16 %v576
        %v607 = vunpack.c.l.b16 %v577
        %v608 = vunpack.c.h.b16 %v577
        %v609 = vunpack.c.l.b16 %v578
        %v610 = vunpack.c.h.b16 %v578
        %v611 = vunpack.c.l.b16 %v579
        %v612 = vunpack.c.h.b16 %v579
        %v613 = vunpack.c.l.b16 %v588
        %v614 = vunpack.c.h.b16 %v588
        %v615 = vunpack.c.l.b16 %v581
        %v616 = vunpack.c.h.b16 %v581
        %v617 = vunpack.c.l.b16 %v582
        %v618 = vunpack.c.h.b16 %v582
        %v619 = vunpack.c.l.b16 %v583
        %v620 = vunpack.c.h.b16 %v583
        %v621 = vunpack.c.l.b16 %v584
        %v622 = vunpack.c.h.b16 %v584
        %v623 = vunpack.c.l.b16 %v589
        %v624 = vunpack.c.h.b16 %v589
        %v625 = vpack.c.b16 %v615, %v605
        %v626 = vpack.c.b16 %v616, %v606
        %v627 = vpack.c.b16 %v617, %v607
        %v628 = vpack.c.b16 %v618, %v608
        %v629 = vpack.c.b16 %v619, %v609
        %v630 = vpack.c.b16 %v620, %v610
        %v631 = vpack.c.b16 %v621, %v611
        %v632 = vpack.c.b16 %v622, %v612
        %v633 = vpack.c.b16 %v623, %v613
        %v634 = vpack.c.b16 %v624, %v614
        %635 = vrot.lane.b32.xlu0 %v625, 33
        %v636 = vpop.permute.xlu0 %635
        %637 = vrot.lane.b32.xlu0 %v626, 33
        %v638 = vpop.permute.xlu0 %637
        %639 = vrot.lane.b32.xlu0 %v627, 33
        %v640 = vpop.permute.xlu0 %639
        %641 = vrot.lane.b32.xlu0 %v628, 33
        %v642 = vpop.permute.xlu0 %641
        %643 = vrot.lane.b32.xlu0 %v629, 33
        %v644 = vpop.permute.xlu0 %643
        %645 = vrot.lane.b32.xlu0 %v630, 33
        %v646 = vpop.permute.xlu0 %645
        %647 = vrot.lane.b32.xlu0 %v631, 33
        %v648 = vpop.permute.xlu0 %647
        %649 = vrot.lane.b32.xlu0 %v632, 33
        %v650 = vpop.permute.xlu0 %649
        %651 = vrot.lane.b32.xlu0 %v633, 33
        %v652 = vpop.permute.xlu0 %651
        %653 = vrot.lane.b32.xlu0 %v634, 33
        %v654 = vpop.permute.xlu0 %653
        %vm655 = vcmask 269312
        %v656 = vsel %vm655, %v636, %v638
        %v657 = vsel %vm655, %v638, %v640
        %v658 = vsel %vm655, %v640, %v642
        %v659 = vsel %vm655, %v642, %v644
        %v660 = vsel %vm655, %v644, %v646
        %v661 = vsel %vm655, %v646, %v648
        %v662 = vsel %vm655, %v648, %v650
        %v663 = vsel %vm655, %v650, %v652
        %v664 = vsel %vm655, %v652, %v654
        %vm674 = vcmask 130048
        %v676 = vsel %vm674, %v594, 0
        %678 = vmatpush.bf16.msra.mxu0 0
        %679 = vmatpush.bf16.msra.mxu0 0
        %680 = vmatpush.bf16.msra.mxu0 0
        %681 = vmatpush.bf16.msra.mxu0 0
        %682 = vmatpush.bf16.msra.mxu0 0
        %683 = vmatpush.bf16.msra.mxu0 0
        %684 = vmatpush.bf16.msra.mxu0 0
        %685 = vmatpush.bf16.msra.mxu0 %v656
        %686 = vmatmul.bf16.gmra.mxu0 %v676
        %v687 = vpop.f32.mrf.mxu0
        %v688 = vadd.f32 0.0, %v687
        %v689 = vpop.f32.mrf.mxu0
        %v690 = vadd.f32 0.0, %v689
        %691 = vdwg.mxu0
        %692 = vmatpush.bf16.msra.mxu0 0
        %693 = vmatpush.bf16.msra.mxu0 0
        %694 = vmatpush.bf16.msra.mxu0 0
        %695 = vmatpush.bf16.msra.mxu0 0
        %696 = vmatpush.bf16.msra.mxu0 0
        %697 = vmatpush.bf16.msra.mxu0 0
        %698 = vmatpush.bf16.msra.mxu0 0
        %699 = vmatpush.bf16.msra.mxu0 %v657
        %700 = vmatmul.bf16.gmra.mxu0 %v676
        %v701 = vpop.f32.mrf.mxu0
        %v702 = vadd.f32 0.0, %v701
        %v703 = vpop.f32.mrf.mxu0
        %v704 = vadd.f32 0.0, %v703
        %705 = vdwg.mxu0
        %706 = vmatpush.bf16.msra.mxu0 0
        %707 = vmatpush.bf16.msra.mxu0 0
        %708 = vmatpush.bf16.msra.mxu0 0
        %709 = vmatpush.bf16.msra.mxu0 0
        %710 = vmatpush.bf16.msra.mxu0 0
        %711 = vmatpush.bf16.msra.mxu0 0
        %712 = vmatpush.bf16.msra.mxu0 0
        %713 = vmatpush.bf16.msra.mxu0 %v658
        %714 = vmatmul.bf16.gmra.mxu0 %v676
        %v715 = vpop.f32.mrf.mxu0
        %v716 = vadd.f32 0.0, %v715
        %v717 = vpop.f32.mrf.mxu0
        %v718 = vadd.f32 0.0, %v717
        %719 = vdwg.mxu0
        %720 = vmatpush.bf16.msra.mxu0 0
        %721 = vmatpush.bf16.msra.mxu0 0
        %722 = vmatpush.bf16.msra.mxu0 0
        %723 = vmatpush.bf16.msra.mxu0 0
        %724 = vmatpush.bf16.msra.mxu0 0
        %725 = vmatpush.bf16.msra.mxu0 0
        %726 = vmatpush.bf16.msra.mxu0 0
        %727 = vmatpush.bf16.msra.mxu0 %v659
        %728 = vmatmul.bf16.gmra.mxu0 %v676
        %v729 = vpop.f32.mrf.mxu0
        %v730 = vadd.f32 0.0, %v729
        %v731 = vpop.f32.mrf.mxu0
        %v732 = vadd.f32 0.0, %v731
        %733 = vdwg.mxu0
        %734 = vmatpush.bf16.msra.mxu0 0
        %735 = vmatpush.bf16.msra.mxu0 0
        %736 = vmatpush.bf16.msra.mxu0 0
        %737 = vmatpush.bf16.msra.mxu0 0
        %738 = vmatpush.bf16.msra.mxu0 0
        %739 = vmatpush.bf16.msra.mxu0 0
        %740 = vmatpush.bf16.msra.mxu0 0
        %741 = vmatpush.bf16.msra.mxu0 %v660
        %742 = vmatmul.bf16.gmra.mxu0 %v676
        %v743 = vpop.f32.mrf.mxu0
        %v744 = vadd.f32 0.0, %v743
        %v745 = vpop.f32.mrf.mxu0
        %v746 = vadd.f32 0.0, %v745
        %747 = vdwg.mxu0
        %748 = vmatpush.bf16.msra.mxu0 0
        %749 = vmatpush.bf16.msra.mxu0 0
        %750 = vmatpush.bf16.msra.mxu0 0
        %751 = vmatpush.bf16.msra.mxu0 0
        %752 = vmatpush.bf16.msra.mxu0 0
        %753 = vmatpush.bf16.msra.mxu0 0
        %754 = vmatpush.bf16.msra.mxu0 0
        %755 = vmatpush.bf16.msra.mxu0 %v661
        %756 = vmatmul.bf16.gmra.mxu0 %v676
        %v757 = vpop.f32.mrf.mxu0
        %v758 = vadd.f32 0.0, %v757
        %v759 = vpop.f32.mrf.mxu0
        %v760 = vadd.f32 0.0, %v759
        %761 = vdwg.mxu0
        %762 = vmatpush.bf16.msra.mxu0 0
        %763 = vmatpush.bf16.msra.mxu0 0
        %764 = vmatpush.bf16.msra.mxu0 0
        %765 = vmatpush.bf16.msra.mxu0 0
        %766 = vmatpush.bf16.msra.mxu0 0
        %767 = vmatpush.bf16.msra.mxu0 0
        %768 = vmatpush.bf16.msra.mxu0 0
        %769 = vmatpush.bf16.msra.mxu0 %v662
        %770 = vmatmul.bf16.gmra.mxu0 %v676
        %v771 = vpop.f32.mrf.mxu0
        %v772 = vadd.f32 0.0, %v771
        %v773 = vpop.f32.mrf.mxu0
        %v774 = vadd.f32 0.0, %v773
        %775 = vdwg.mxu0
        %776 = vmatpush.bf16.msra.mxu0 0
        %777 = vmatpush.bf16.msra.mxu0 0
        %778 = vmatpush.bf16.msra.mxu0 0
        %779 = vmatpush.bf16.msra.mxu0 0
        %780 = vmatpush.bf16.msra.mxu0 0
        %781 = vmatpush.bf16.msra.mxu0 0
        %782 = vmatpush.bf16.msra.mxu0 0
        %783 = vmatpush.bf16.msra.mxu0 %v663
        %784 = vmatmul.bf16.gmra.mxu0 %v676
        %v785 = vpop.f32.mrf.mxu0
        %v786 = vadd.f32 0.0, %v785
        %v787 = vpop.f32.mrf.mxu0
        %v788 = vadd.f32 0.0, %v787
        %789 = vdwg.mxu0
        %790 = vmatpush.bf16.msra.mxu0 0
        %791 = vmatpush.bf16.msra.mxu0 0
        %792 = vmatpush.bf16.msra.mxu0 0
        %793 = vmatpush.bf16.msra.mxu0 0
        %794 = vmatpush.bf16.msra.mxu0 0
        %795 = vmatpush.bf16.msra.mxu0 0
        %796 = vmatpush.bf16.msra.mxu0 0
        %797 = vmatpush.bf16.msra.mxu0 %v664
        %798 = vmatmul.bf16.gmra.mxu0 %v676
        %v799 = vpop.f32.mrf.mxu0
        %v800 = vadd.f32 0.0, %v799
        %v801 = vpop.f32.mrf.mxu0
        %v802 = vadd.f32 0.0, %v801
        %803 = vdwg.mxu0
        %v806 = vunpack.c.l.b16 %v574
        %v807 = vunpack.c.l.b16 %v575
        %v808 = vpack.c.b16 %v807, %v806
        %v811 = vunpack.c.l.b16 %v580
        %v812 = vunpack.c.l.b16 %v585
        %v813 = vpack.c.b16 %v812, %v811
        %814 = vrot.lane.b32.xlu0 %v625, 65
        %v815 = vpop.permute.xlu0 %814
        %816 = vrot.lane.b32.xlu0 %v626, 65
        %v817 = vpop.permute.xlu0 %816
        %818 = vrot.lane.b32.xlu0 %v627, 65
        %v819 = vpop.permute.xlu0 %818
        %820 = vrot.lane.b32.xlu0 %v628, 65
        %v821 = vpop.permute.xlu0 %820
        %822 = vrot.lane.b32.xlu0 %v629, 65
        %v823 = vpop.permute.xlu0 %822
        %824 = vrot.lane.b32.xlu0 %v630, 65
        %v825 = vpop.permute.xlu0 %824
        %826 = vrot.lane.b32.xlu0 %v631, 65
        %v827 = vpop.permute.xlu0 %826
        %828 = vrot.lane.b32.xlu0 %v632, 65
        %v829 = vpop.permute.xlu0 %828
        %830 = vrot.lane.b32.xlu0 %v813, 65
        %v831 = vpop.permute.xlu0 %830
        %vm832 = vcmask 531456
        %v833 = vsel %vm832, %v815, %v817
        %v834 = vsel %vm832, %v817, %v819
        %v835 = vsel %vm832, %v819, %v821
        %v836 = vsel %vm832, %v821, %v823
        %v837 = vsel %vm832, %v823, %v825
        %v838 = vsel %vm832, %v825, %v827
        %v839 = vsel %vm832, %v827, %v829
        %v840 = vsel %vm832, %v829, %v831
        %v851 = vsel %vm674, %v808, 0
        %853 = vmatpush.bf16.msra.mxu0 0
        %854 = vmatpush.bf16.msra.mxu0 0
        %855 = vmatpush.bf16.msra.mxu0 0
        %856 = vmatpush.bf16.msra.mxu0 0
        %857 = vmatpush.bf16.msra.mxu0 0
        %858 = vmatpush.bf16.msra.mxu0 0
        %859 = vmatpush.bf16.msra.mxu0 0
        %860 = vmatpush.bf16.msra.mxu0 %v833
        %861 = vmatmul.bf16.gmra.mxu0 %v851
        %v862 = vpop.f32.mrf.mxu0
        %v863 = vadd.f32 %v688, %v862
        %v864 = vpop.f32.mrf.mxu0
        %v865 = vadd.f32 %v690, %v864
        %866 = vdwg.mxu0
        %867 = vmatpush.bf16.msra.mxu0 0
        %868 = vmatpush.bf16.msra.mxu0 0
        %869 = vmatpush.bf16.msra.mxu0 0
        %870 = vmatpush.bf16.msra.mxu0 0
        %871 = vmatpush.bf16.msra.mxu0 0
        %872 = vmatpush.bf16.msra.mxu0 0
        %873 = vmatpush.bf16.msra.mxu0 0
        %874 = vmatpush.bf16.msra.mxu0 %v834
        %875 = vmatmul.bf16.gmra.mxu0 %v851
        %v876 = vpop.f32.mrf.mxu0
        %v877 = vadd.f32 %v702, %v876
        %v878 = vpop.f32.mrf.mxu0
        %v879 = vadd.f32 %v704, %v878
        %880 = vdwg.mxu0
        %881 = vmatpush.bf16.msra.mxu0 0
        %882 = vmatpush.bf16.msra.mxu0 0
        %883 = vmatpush.bf16.msra.mxu0 0
        %884 = vmatpush.bf16.msra.mxu0 0
        %885 = vmatpush.bf16.msra.mxu0 0
        %886 = vmatpush.bf16.msra.mxu0 0
        %887 = vmatpush.bf16.msra.mxu0 0
        %888 = vmatpush.bf16.msra.mxu0 %v835
        %889 = vmatmul.bf16.gmra.mxu0 %v851
        %v890 = vpop.f32.mrf.mxu0
        %v891 = vadd.f32 %v716, %v890
        %v892 = vpop.f32.mrf.mxu0
        %v893 = vadd.f32 %v718, %v892
        %894 = vdwg.mxu0
        %895 = vmatpush.bf16.msra.mxu0 0
        %896 = vmatpush.bf16.msra.mxu0 0
        %897 = vmatpush.bf16.msra.mxu0 0
        %898 = vmatpush.bf16.msra.mxu0 0
        %899 = vmatpush.bf16.msra.mxu0 0
        %900 = vmatpush.bf16.msra.mxu0 0
        %901 = vmatpush.bf16.msra.mxu0 0
        %902 = vmatpush.bf16.msra.mxu0 %v836
        %903 = vmatmul.bf16.gmra.mxu0 %v851
        %v904 = vpop.f32.mrf.mxu0
        %v905 = vadd.f32 %v730, %v904
        %v906 = vpop.f32.mrf.mxu0
        %v907 = vadd.f32 %v732, %v906
        %908 = vdwg.mxu0
        %909 = vmatpush.bf16.msra.mxu0 0
        %910 = vmatpush.bf16.msra.mxu0 0
        %911 = vmatpush.bf16.msra.mxu0 0
        %912 = vmatpush.bf16.msra.mxu0 0
        %913 = vmatpush.bf16.msra.mxu0 0
        %914 = vmatpush.bf16.msra.mxu0 0
        %915 = vmatpush.bf16.msra.mxu0 0
        %916 = vmatpush.bf16.msra.mxu0 %v837
        %917 = vmatmul.bf16.gmra.mxu0 %v851
        %v918 = vpop.f32.mrf.mxu0
        %v919 = vadd.f32 %v744, %v918
        %v920 = vpop.f32.mrf.mxu0
        %v921 = vadd.f32 %v746, %v920
        %922 = vdwg.mxu0
        %923 = vmatpush.bf16.msra.mxu0 0
        %924 = vmatpush.bf16.msra.mxu0 0
        %925 = vmatpush.bf16.msra.mxu0 0
        %926 = vmatpush.bf16.msra.mxu0 0
        %927 = vmatpush.bf16.msra.mxu0 0
        %928 = vmatpush.bf16.msra.mxu0 0
        %929 = vmatpush.bf16.msra.mxu0 0
        %930 = vmatpush.bf16.msra.mxu0 %v838
        %931 = vmatmul.bf16.gmra.mxu0 %v851
        %v932 = vpop.f32.mrf.mxu0
        %v933 = vadd.f32 %v758, %v932
        %v934 = vpop.f32.mrf.mxu0
        %v935 = vadd.f32 %v760, %v934
        %936 = vdwg.mxu0
        %937 = vmatpush.bf16.msra.mxu0 0
        %938 = vmatpush.bf16.msra.mxu0 0
        %939 = vmatpush.bf16.msra.mxu0 0
        %940 = vmatpush.bf16.msra.mxu0 0
        %941 = vmatpush.bf16.msra.mxu0 0
        %942 = vmatpush.bf16.msra.mxu0 0
        %943 = vmatpush.bf16.msra.mxu0 0
        %944 = vmatpush.bf16.msra.mxu0 %v839
        %945 = vmatmul.bf16.gmra.mxu0 %v851
        %v946 = vpop.f32.mrf.mxu0
        %v947 = vadd.f32 %v772, %v946
        %v948 = vpop.f32.mrf.mxu0
        %v949 = vadd.f32 %v774, %v948
        %950 = vdwg.mxu0
        %951 = vmatpush.bf16.msra.mxu0 0
        %952 = vmatpush.bf16.msra.mxu0 0
        %953 = vmatpush.bf16.msra.mxu0 0
        %954 = vmatpush.bf16.msra.mxu0 0
        %955 = vmatpush.bf16.msra.mxu0 0
        %956 = vmatpush.bf16.msra.mxu0 0
        %957 = vmatpush.bf16.msra.mxu0 0
        %958 = vmatpush.bf16.msra.mxu0 %v840
        %959 = vmatmul.bf16.gmra.mxu0 %v851
        %v960 = vpop.f32.mrf.mxu0
        %v961 = vadd.f32 %v786, %v960
        %v962 = vpop.f32.mrf.mxu0
        %v963 = vadd.f32 %v788, %v962
        %964 = vdwg.mxu0
        %965 = vmatpush.bf16.msra.mxu0 0
        %966 = vmatpush.bf16.msra.mxu0 0
        %967 = vmatpush.bf16.msra.mxu0 0
        %968 = vmatpush.bf16.msra.mxu0 0
        %969 = vmatpush.bf16.msra.mxu0 0
        %970 = vmatpush.bf16.msra.mxu0 0
        %971 = vmatpush.bf16.msra.mxu0 0
        %972 = vmatpush.bf16.msra.mxu0 %v831
        %973 = vmatmul.bf16.gmra.mxu0 %v851
        %v974 = vpop.f32.mrf.mxu0
        %v975 = vadd.f32 %v800, %v974
        %v976 = vpop.f32.mrf.mxu0
        %v977 = vadd.f32 %v802, %v976
        %978 = vdwg.mxu0
        %v979 = vld [vmem:[%s4 + $0x30] sm:$0xf]
        %v980 = vld [vmem:[%s4 + $0x34] sm:$0xf]
        %v983 = vunpack.c.l.b16 %v979
        %v984 = vunpack.c.l.b16 %v980
        %v985 = vpack.c.b16 %v984, %v983
        %986 = vrot.lane.b32.xlu0 %v625, 1
        %v987 = vpop.permute.xlu0 %986
        %988 = vrot.lane.b32.xlu0 %v626, 1
        %v989 = vpop.permute.xlu0 %988
        %990 = vrot.lane.b32.xlu0 %v627, 1
        %v991 = vpop.permute.xlu0 %990
        %992 = vrot.lane.b32.xlu0 %v628, 1
        %v993 = vpop.permute.xlu0 %992
        %994 = vrot.lane.b32.xlu0 %v629, 1
        %v995 = vpop.permute.xlu0 %994
        %996 = vrot.lane.b32.xlu0 %v630, 1
        %v997 = vpop.permute.xlu0 %996
        %998 = vrot.lane.b32.xlu0 %v631, 1
        %v999 = vpop.permute.xlu0 %998
        %1000 = vrot.lane.b32.xlu0 %v632, 1
        %v1001 = vpop.permute.xlu0 %1000
        %1002 = vrot.lane.b32.xlu0 %v633, 1
        %v1003 = vpop.permute.xlu0 %1002
        %1004 = vrot.lane.b32.xlu0 %v634, 1
        %v1005 = vpop.permute.xlu0 %1004
        %vm1006 = vcmask 7168
        %v1007 = vsel %vm1006, %v987, %v989
        %v1008 = vsel %vm1006, %v989, %v991
        %v1009 = vsel %vm1006, %v991, %v993
        %v1010 = vsel %vm1006, %v993, %v995
        %v1011 = vsel %vm1006, %v995, %v997
        %v1012 = vsel %vm1006, %v997, %v999
        %v1013 = vsel %vm1006, %v999, %v1001
        %v1014 = vsel %vm1006, %v1001, %v1003
        %v1015 = vsel %vm1006, %v1003, %v1005
        %v1026 = vsel %vm674, %v985, 0
        %1028 = vmatpush.bf16.msra.mxu0 0
        %1029 = vmatpush.bf16.msra.mxu0 0
        %1030 = vmatpush.bf16.msra.mxu0 0
        %1031 = vmatpush.bf16.msra.mxu0 0
        %1032 = vmatpush.bf16.msra.mxu0 0
        %1033 = vmatpush.bf16.msra.mxu0 0
        %1034 = vmatpush.bf16.msra.mxu0 0
        %1035 = vmatpush.bf16.msra.mxu0 %v1007
        %1036 = vmatmul.bf16.gmra.mxu0 %v1026
        %v1037 = vpop.f32.mrf.mxu0
        %v1038 = vadd.f32 0.0, %v1037
        %v1039 = vpop.f32.mrf.mxu0
        %v1040 = vadd.f32 0.0, %v1039
        %1041 = vdwg.mxu0
        %1042 = vmatpush.bf16.msra.mxu0 0
        %1043 = vmatpush.bf16.msra.mxu0 0
        %1044 = vmatpush.bf16.msra.mxu0 0
        %1045 = vmatpush.bf16.msra.mxu0 0
        %1046 = vmatpush.bf16.msra.mxu0 0
        %1047 = vmatpush.bf16.msra.mxu0 0
        %1048 = vmatpush.bf16.msra.mxu0 0
        %1049 = vmatpush.bf16.msra.mxu0 %v1008
        %1050 = vmatmul.bf16.gmra.mxu0 %v1026
        %v1051 = vpop.f32.mrf.mxu0
        %v1052 = vadd.f32 0.0, %v1051
        %v1053 = vpop.f32.mrf.mxu0
        %v1054 = vadd.f32 0.0, %v1053
        %1055 = vdwg.mxu0
        %1056 = vmatpush.bf16.msra.mxu0 0
        %1057 = vmatpush.bf16.msra.mxu0 0
        %1058 = vmatpush.bf16.msra.mxu0 0
        %1059 = vmatpush.bf16.msra.mxu0 0
        %1060 = vmatpush.bf16.msra.mxu0 0
        %1061 = vmatpush.bf16.msra.mxu0 0
        %1062 = vmatpush.bf16.msra.mxu0 0
        %1063 = vmatpush.bf16.msra.mxu0 %v1009
        %1064 = vmatmul.bf16.gmra.mxu0 %v1026
        %v1065 = vpop.f32.mrf.mxu0
        %v1066 = vadd.f32 0.0, %v1065
        %v1067 = vpop.f32.mrf.mxu0
        %v1068 = vadd.f32 0.0, %v1067
        %1069 = vdwg.mxu0
        %1070 = vmatpush.bf16.msra.mxu0 0
        %1071 = vmatpush.bf16.msra.mxu0 0
        %1072 = vmatpush.bf16.msra.mxu0 0
        %1073 = vmatpush.bf16.msra.mxu0 0
        %1074 = vmatpush.bf16.msra.mxu0 0
        %1075 = vmatpush.bf16.msra.mxu0 0
        %1076 = vmatpush.bf16.msra.mxu0 0
        %1077 = vmatpush.bf16.msra.mxu0 %v1010
        %1078 = vmatmul.bf16.gmra.mxu0 %v1026
        %v1079 = vpop.f32.mrf.mxu0
        %v1080 = vadd.f32 0.0, %v1079
        %v1081 = vpop.f32.mrf.mxu0
        %v1082 = vadd.f32 0.0, %v1081
        %1083 = vdwg.mxu0
        %1084 = vmatpush.bf16.msra.mxu0 0
        %1085 = vmatpush.bf16.msra.mxu0 0
        %1086 = vmatpush.bf16.msra.mxu0 0
        %1087 = vmatpush.bf16.msra.mxu0 0
        %1088 = vmatpush.bf16.msra.mxu0 0
        %1089 = vmatpush.bf16.msra.mxu0 0
        %1090 = vmatpush.bf16.msra.mxu0 0
        %1091 = vmatpush.bf16.msra.mxu0 %v1011
        %1092 = vmatmul.bf16.gmra.mxu0 %v1026
        %v1093 = vpop.f32.mrf.mxu0
        %v1094 = vadd.f32 0.0, %v1093
        %v1095 = vpop.f32.mrf.mxu0
        %v1096 = vadd.f32 0.0, %v1095
        %1097 = vdwg.mxu0
        %1098 = vmatpush.bf16.msra.mxu0 0
        %1099 = vmatpush.bf16.msra.mxu0 0
        %1100 = vmatpush.bf16.msra.mxu0 0
        %1101 = vmatpush.bf16.msra.mxu0 0
        %1102 = vmatpush.bf16.msra.mxu0 0
        %1103 = vmatpush.bf16.msra.mxu0 0
        %1104 = vmatpush.bf16.msra.mxu0 0
        %1105 = vmatpush.bf16.msra.mxu0 %v1012
        %1106 = vmatmul.bf16.gmra.mxu0 %v1026
        %v1107 = vpop.f32.mrf.mxu0
        %v1108 = vadd.f32 0.0, %v1107
        %v1109 = vpop.f32.mrf.mxu0
        %v1110 = vadd.f32 0.0, %v1109
        %1111 = vdwg.mxu0
        %1112 = vmatpush.bf16.msra.mxu0 0
        %1113 = vmatpush.bf16.msra.mxu0 0
        %1114 = vmatpush.bf16.msra.mxu0 0
        %1115 = vmatpush.bf16.msra.mxu0 0
        %1116 = vmatpush.bf16.msra.mxu0 0
        %1117 = vmatpush.bf16.msra.mxu0 0
        %1118 = vmatpush.bf16.msra.mxu0 0
        %1119 = vmatpush.bf16.msra.mxu0 %v1013
        %1120 = vmatmul.bf16.gmra.mxu0 %v1026
        %v1121 = vpop.f32.mrf.mxu0
        %v1122 = vadd.f32 0.0, %v1121
        %v1123 = vpop.f32.mrf.mxu0
        %v1124 = vadd.f32 0.0, %v1123
        %1125 = vdwg.mxu0
        %1126 = vmatpush.bf16.msra.mxu0 0
        %1127 = vmatpush.bf16.msra.mxu0 0
        %1128 = vmatpush.bf16.msra.mxu0 0
        %1129 = vmatpush.bf16.msra.mxu0 0
        %1130 = vmatpush.bf16.msra.mxu0 0
        %1131 = vmatpush.bf16.msra.mxu0 0
        %1132 = vmatpush.bf16.msra.mxu0 0
        %1133 = vmatpush.bf16.msra.mxu0 %v1014
        %1134 = vmatmul.bf16.gmra.mxu0 %v1026
        %v1135 = vpop.f32.mrf.mxu0
        %v1136 = vadd.f32 0.0, %v1135
        %v1137 = vpop.f32.mrf.mxu0
        %v1138 = vadd.f32 0.0, %v1137
        %1139 = vdwg.mxu0
        %1140 = vmatpush.bf16.msra.mxu0 0
        %1141 = vmatpush.bf16.msra.mxu0 0
        %1142 = vmatpush.bf16.msra.mxu0 0
        %1143 = vmatpush.bf16.msra.mxu0 0
        %1144 = vmatpush.bf16.msra.mxu0 0
        %1145 = vmatpush.bf16.msra.mxu0 0
        %1146 = vmatpush.bf16.msra.mxu0 0
        %1147 = vmatpush.bf16.msra.mxu0 %v1015
        %1148 = vmatmul.bf16.gmra.mxu0 %v1026
        %v1149 = vpop.f32.mrf.mxu0
        %v1150 = vadd.f32 0.0, %v1149
        %v1151 = vpop.f32.mrf.mxu0
        %v1152 = vadd.f32 0.0, %v1151
        %1153 = vdwg.mxu0
        %v1154 = vadd.f32 %v863, %v1038
        %v1155 = vadd.f32 %v877, %v1052
        %v1156 = vadd.f32 %v891, %v1066
        %v1157 = vadd.f32 %v905, %v1080
        %v1158 = vadd.f32 %v919, %v1094
        %v1159 = vadd.f32 %v933, %v1108
        %v1160 = vadd.f32 %v947, %v1122
        %v1161 = vadd.f32 %v961, %v1136
        %v1162 = vadd.f32 %v975, %v1150
        %v1163 = vadd.f32 %v865, %v1040
        %v1164 = vadd.f32 %v879, %v1054
        %v1165 = vadd.f32 %v893, %v1068
        %v1166 = vadd.f32 %v907, %v1082
        %v1167 = vadd.f32 %v921, %v1096
        %v1168 = vadd.f32 %v935, %v1110
        %v1169 = vadd.f32 %v949, %v1124
        %v1170 = vadd.f32 %v963, %v1138
        %v1171 = vadd.f32 %v977, %v1152
        %v1172 = vsel %vm570, 1, 0
        %v1173 = vsel %vm571, 1, 0
        %v1174 = vperm.slane %v1172, 0
        %v1175 = vperm.slane %v1172, 1
        %v1176 = vperm.slane %v1172, 2
        %v1177 = vperm.slane %v1172, 3
        %v1178 = vperm.slane %v1172, 4
        %v1179 = vperm.slane %v1172, 5
        %v1180 = vperm.slane %v1172, 6
        %v1181 = vperm.slane %v1172, 7
        %v1182 = vperm.slane %v1173, 0
        %vm1183 = vcmp.eq.s32.totalorder %v1174, 1
        %vm1184 = vcmp.eq.s32.totalorder %v1175, 1
        %vm1185 = vcmp.eq.s32.totalorder %v1176, 1
        %vm1186 = vcmp.eq.s32.totalorder %v1177, 1
        %vm1187 = vcmp.eq.s32.totalorder %v1178, 1
        %vm1188 = vcmp.eq.s32.totalorder %v1179, 1
        %vm1189 = vcmp.eq.s32.totalorder %v1180, 1
        %vm1190 = vcmp.eq.s32.totalorder %v1181, 1
        %vm1191 = vcmp.eq.s32.totalorder %v1182, 1
        %v1192 = vsel %vm1183, %v1154, 0.0
        %v1193 = vsel %vm1184, %v1155, 0.0
        %v1194 = vsel %vm1185, %v1156, 0.0
        %v1195 = vsel %vm1186, %v1157, 0.0
        %v1196 = vsel %vm1187, %v1158, 0.0
        %v1197 = vsel %vm1188, %v1159, 0.0
        %v1198 = vsel %vm1189, %v1160, 0.0
        %v1199 = vsel %vm1190, %v1161, 0.0
        %v1200 = vsel %vm1191, %v1162, 0.0
        %v1201 = vsel %vm1183, %v1163, 0.0
        %v1202 = vsel %vm1184, %v1164, 0.0
        %v1203 = vsel %vm1185, %v1165, 0.0
        %v1204 = vsel %vm1186, %v1166, 0.0
        %v1205 = vsel %vm1187, %v1167, 0.0
        %v1206 = vsel %vm1188, %v1168, 0.0
        %v1207 = vsel %vm1189, %v1169, 0.0
        %v1208 = vsel %vm1190, %v1170, 0.0
        %v1209 = vsel %vm1191, %v1171, 0.0
        %v1210 = vld [vmem:[%s4 + $0x8] sm:$0xf]
        %v1211 = vld [vmem:[%s4 + $0xc] sm:$0xf]
        %v1212 = vld [vmem:[%s4 + $0x20] sm:$0xf]
        %v1213 = vld [vmem:[%s4 + $0x24] sm:$0xf]
        %v1216 = vunpack.c.l.b16 %v1212
        %v1217 = vunpack.c.l.b16 %v1213
        %v1218 = vpack.c.b16 %v1217, %v1216
        %1219 = vrot.lane.b32.xlu0 %v625, 32
        %v1220 = vpop.permute.xlu0 %1219
        %1221 = vrot.lane.b32.xlu0 %v626, 32
        %v1222 = vpop.permute.xlu0 %1221
        %1223 = vrot.lane.b32.xlu0 %v627, 32
        %v1224 = vpop.permute.xlu0 %1223
        %1225 = vrot.lane.b32.xlu0 %v628, 32
        %v1226 = vpop.permute.xlu0 %1225
        %1227 = vrot.lane.b32.xlu0 %v629, 32
        %v1228 = vpop.permute.xlu0 %1227
        %1229 = vrot.lane.b32.xlu0 %v630, 32
        %v1230 = vpop.permute.xlu0 %1229
        %1231 = vrot.lane.b32.xlu0 %v631, 32
        %v1232 = vpop.permute.xlu0 %1231
        %1233 = vrot.lane.b32.xlu0 %v632, 32
        %v1234 = vpop.permute.xlu0 %1233
        %1235 = vrot.lane.b32.xlu0 %v633, 32
        %v1236 = vpop.permute.xlu0 %1235
        %1237 = vrot.lane.b32.xlu0 %v634, 32
        %v1238 = vpop.permute.xlu0 %1237
        %vm1239 = vcmask 261120
        %v1240 = vsel %vm1239, %v1220, %v1222
        %v1241 = vsel %vm1239, %v1222, %v1224
        %v1242 = vsel %vm1239, %v1224, %v1226
        %v1243 = vsel %vm1239, %v1226, %v1228
        %v1244 = vsel %vm1239, %v1228, %v1230
        %v1245 = vsel %vm1239, %v1230, %v1232
        %v1246 = vsel %vm1239, %v1232, %v1234
        %v1247 = vsel %vm1239, %v1234, %v1236
        %v1248 = vsel %vm1239, %v1236, %v1238
        %v1259 = vsel %vm674, %v1218, 0
        %1261 = vmatpush.bf16.msra.mxu0 0
        %1262 = vmatpush.bf16.msra.mxu0 0
        %1263 = vmatpush.bf16.msra.mxu0 0
        %1264 = vmatpush.bf16.msra.mxu0 0
        %1265 = vmatpush.bf16.msra.mxu0 0
        %1266 = vmatpush.bf16.msra.mxu0 0
        %1267 = vmatpush.bf16.msra.mxu0 0
        %1268 = vmatpush.bf16.msra.mxu0 %v1240
        %1269 = vmatmul.bf16.gmra.mxu0 %v1259
        %v1270 = vpop.f32.mrf.mxu0
        %v1271 = vadd.f32 0.0, %v1270
        %v1272 = vpop.f32.mrf.mxu0
        %v1273 = vadd.f32 0.0, %v1272
        %1274 = vdwg.mxu0
        %1275 = vmatpush.bf16.msra.mxu0 0
        %1276 = vmatpush.bf16.msra.mxu0 0
        %1277 = vmatpush.bf16.msra.mxu0 0
        %1278 = vmatpush.bf16.msra.mxu0 0
        %1279 = vmatpush.bf16.msra.mxu0 0
        %1280 = vmatpush.bf16.msra.mxu0 0
        %1281 = vmatpush.bf16.msra.mxu0 0
        %1282 = vmatpush.bf16.msra.mxu0 %v1241
        %1283 = vmatmul.bf16.gmra.mxu0 %v1259
        %v1284 = vpop.f32.mrf.mxu0
        %v1285 = vadd.f32 0.0, %v1284
        %v1286 = vpop.f32.mrf.mxu0
        %v1287 = vadd.f32 0.0, %v1286
        %1288 = vdwg.mxu0
        %1289 = vmatpush.bf16.msra.mxu0 0
        %1290 = vmatpush.bf16.msra.mxu0 0
        %1291 = vmatpush.bf16.msra.mxu0 0
        %1292 = vmatpush.bf16.msra.mxu0 0
        %1293 = vmatpush.bf16.msra.mxu0 0
        %1294 = vmatpush.bf16.msra.mxu0 0
        %1295 = vmatpush.bf16.msra.mxu0 0
        %1296 = vmatpush.bf16.msra.mxu0 %v1242
        %1297 = vmatmul.bf16.gmra.mxu0 %v1259
        %v1298 = vpop.f32.mrf.mxu0
        %v1299 = vadd.f32 0.0, %v1298
        %v1300 = vpop.f32.mrf.mxu0
        %v1301 = vadd.f32 0.0, %v1300
        %1302 = vdwg.mxu0
        %1303 = vmatpush.bf16.msra.mxu0 0
        %1304 = vmatpush.bf16.msra.mxu0 0
        %1305 = vmatpush.bf16.msra.mxu0 0
        %1306 = vmatpush.bf16.msra.mxu0 0
        %1307 = vmatpush.bf16.msra.mxu0 0
        %1308 = vmatpush.bf16.msra.mxu0 0
        %1309 = vmatpush.bf16.msra.mxu0 0
        %1310 = vmatpush.bf16.msra.mxu0 %v1243
        %1311 = vmatmul.bf16.gmra.mxu0 %v1259
        %v1312 = vpop.f32.mrf.mxu0
        %v1313 = vadd.f32 0.0, %v1312
        %v1314 = vpop.f32.mrf.mxu0
        %v1315 = vadd.f32 0.0, %v1314
        %1316 = vdwg.mxu0
        %1317 = vmatpush.bf16.msra.mxu0 0
        %1318 = vmatpush.bf16.msra.mxu0 0
        %1319 = vmatpush.bf16.msra.mxu0 0
        %1320 = vmatpush.bf16.msra.mxu0 0
        %1321 = vmatpush.bf16.msra.mxu0 0
        %1322 = vmatpush.bf16.msra.mxu0 0
        %1323 = vmatpush.bf16.msra.mxu0 0
        %1324 = vmatpush.bf16.msra.mxu0 %v1244
        %1325 = vmatmul.bf16.gmra.mxu0 %v1259
        %v1326 = vpop.f32.mrf.mxu0
        %v1327 = vadd.f32 0.0, %v1326
        %v1328 = vpop.f32.mrf.mxu0
        %v1329 = vadd.f32 0.0, %v1328
        %1330 = vdwg.mxu0
        %1331 = vmatpush.bf16.msra.mxu0 0
        %1332 = vmatpush.bf16.msra.mxu0 0
        %1333 = vmatpush.bf16.msra.mxu0 0
        %1334 = vmatpush.bf16.msra.mxu0 0
        %1335 = vmatpush.bf16.msra.mxu0 0
        %1336 = vmatpush.bf16.msra.mxu0 0
        %1337 = vmatpush.bf16.msra.mxu0 0
        %1338 = vmatpush.bf16.msra.mxu0 %v1245
        %1339 = vmatmul.bf16.gmra.mxu0 %v1259
        %v1340 = vpop.f32.mrf.mxu0
        %v1341 = vadd.f32 0.0, %v1340
        %v1342 = vpop.f32.mrf.mxu0
        %v1343 = vadd.f32 0.0, %v1342
        %1344 = vdwg.mxu0
        %1345 = vmatpush.bf16.msra.mxu0 0
        %1346 = vmatpush.bf16.msra.mxu0 0
        %1347 = vmatpush.bf16.msra.mxu0 0
        %1348 = vmatpush.bf16.msra.mxu0 0
        %1349 = vmatpush.bf16.msra.mxu0 0
        %1350 = vmatpush.bf16.msra.mxu0 0
        %1351 = vmatpush.bf16.msra.mxu0 0
        %1352 = vmatpush.bf16.msra.mxu0 %v1246
        %1353 = vmatmul.bf16.gmra.mxu0 %v1259
        %v1354 = vpop.f32.mrf.mxu0
        %v1355 = vadd.f32 0.0, %v1354
        %v1356 = vpop.f32.mrf.mxu0
        %v1357 = vadd.f32 0.0, %v1356
        %1358 = vdwg.mxu0
        %1359 = vmatpush.bf16.msra.mxu0 0
        %1360 = vmatpush.bf16.msra.mxu0 0
        %1361 = vmatpush.bf16.msra.mxu0 0
        %1362 = vmatpush.bf16.msra.mxu0 0
        %1363 = vmatpush.bf16.msra.mxu0 0
        %1364 = vmatpush.bf16.msra.mxu0 0
        %1365 = vmatpush.bf16.msra.mxu0 0
        %1366 = vmatpush.bf16.msra.mxu0 %v1247
        %1367 = vmatmul.bf16.gmra.mxu0 %v1259
        %v1368 = vpop.f32.mrf.mxu0
        %v1369 = vadd.f32 0.0, %v1368
        %v1370 = vpop.f32.mrf.mxu0
        %v1371 = vadd.f32 0.0, %v1370
        %1372 = vdwg.mxu0
        %1373 = vmatpush.bf16.msra.mxu0 0
        %1374 = vmatpush.bf16.msra.mxu0 0
        %1375 = vmatpush.bf16.msra.mxu0 0
        %1376 = vmatpush.bf16.msra.mxu0 0
        %1377 = vmatpush.bf16.msra.mxu0 0
        %1378 = vmatpush.bf16.msra.mxu0 0
        %1379 = vmatpush.bf16.msra.mxu0 0
        %1380 = vmatpush.bf16.msra.mxu0 %v1248
        %1381 = vmatmul.bf16.gmra.mxu0 %v1259
        %v1382 = vpop.f32.mrf.mxu0
        %v1383 = vadd.f32 0.0, %v1382
        %v1384 = vpop.f32.mrf.mxu0
        %v1385 = vadd.f32 0.0, %v1384
        %1386 = vdwg.mxu0
        %v1389 = vunpack.c.l.b16 %v1210
        %v1390 = vunpack.c.l.b16 %v1211
        %v1391 = vpack.c.b16 %v1390, %v1389
        %1392 = vrot.lane.b32.xlu0 %v625, 64
        %v1393 = vpop.permute.xlu0 %1392
        %1394 = vrot.lane.b32.xlu0 %v626, 64
        %v1395 = vpop.permute.xlu0 %1394
        %1396 = vrot.lane.b32.xlu0 %v627, 64
        %v1397 = vpop.permute.xlu0 %1396
        %1398 = vrot.lane.b32.xlu0 %v628, 64
        %v1399 = vpop.permute.xlu0 %1398
        %1400 = vrot.lane.b32.xlu0 %v629, 64
        %v1401 = vpop.permute.xlu0 %1400
        %1402 = vrot.lane.b32.xlu0 %v630, 64
        %v1403 = vpop.permute.xlu0 %1402
        %1404 = vrot.lane.b32.xlu0 %v631, 64
        %v1405 = vpop.permute.xlu0 %1404
        %1406 = vrot.lane.b32.xlu0 %v632, 64
        %v1407 = vpop.permute.xlu0 %1406
        %1408 = vrot.lane.b32.xlu0 %v813, 64
        %v1409 = vpop.permute.xlu0 %1408
        %vm1410 = vcmask 523264
        %v1411 = vsel %vm1410, %v1393, %v1395
        %v1412 = vsel %vm1410, %v1395, %v1397
        %v1413 = vsel %vm1410, %v1397, %v1399
        %v1414 = vsel %vm1410, %v1399, %v1401
        %v1415 = vsel %vm1410, %v1401, %v1403
        %v1416 = vsel %vm1410, %v1403, %v1405
        %v1417 = vsel %vm1410, %v1405, %v1407
        %v1418 = vsel %vm1410, %v1407, %v1409
        %v1429 = vsel %vm674, %v1391, 0
        %1431 = vmatpush.bf16.msra.mxu0 0
        %1432 = vmatpush.bf16.msra.mxu0 0
        %1433 = vmatpush.bf16.msra.mxu0 0
        %1434 = vmatpush.bf16.msra.mxu0 0
        %1435 = vmatpush.bf16.msra.mxu0 0
        %1436 = vmatpush.bf16.msra.mxu0 0
        %1437 = vmatpush.bf16.msra.mxu0 0
        %1438 = vmatpush.bf16.msra.mxu0 %v1411
        %1439 = vmatmul.bf16.gmra.mxu0 %v1429
        %v1440 = vpop.f32.mrf.mxu0
        %v1441 = vadd.f32 %v1271, %v1440
        %v1442 = vpop.f32.mrf.mxu0
        %v1443 = vadd.f32 %v1273, %v1442
        %1444 = vdwg.mxu0
        %1445 = vmatpush.bf16.msra.mxu0 0
        %1446 = vmatpush.bf16.msra.mxu0 0
        %1447 = vmatpush.bf16.msra.mxu0 0
        %1448 = vmatpush.bf16.msra.mxu0 0
        %1449 = vmatpush.bf16.msra.mxu0 0
        %1450 = vmatpush.bf16.msra.mxu0 0
        %1451 = vmatpush.bf16.msra.mxu0 0
        %1452 = vmatpush.bf16.msra.mxu0 %v1412
        %1453 = vmatmul.bf16.gmra.mxu0 %v1429
        %v1454 = vpop.f32.mrf.mxu0
        %v1455 = vadd.f32 %v1285, %v1454
        %v1456 = vpop.f32.mrf.mxu0
        %v1457 = vadd.f32 %v1287, %v1456
        %1458 = vdwg.mxu0
        %1459 = vmatpush.bf16.msra.mxu0 0
        %1460 = vmatpush.bf16.msra.mxu0 0
        %1461 = vmatpush.bf16.msra.mxu0 0
        %1462 = vmatpush.bf16.msra.mxu0 0
        %1463 = vmatpush.bf16.msra.mxu0 0
        %1464 = vmatpush.bf16.msra.mxu0 0
        %1465 = vmatpush.bf16.msra.mxu0 0
        %1466 = vmatpush.bf16.msra.mxu0 %v1413
        %1467 = vmatmul.bf16.gmra.mxu0 %v1429
        %v1468 = vpop.f32.mrf.mxu0
        %v1469 = vadd.f32 %v1299, %v1468
        %v1470 = vpop.f32.mrf.mxu0
        %v1471 = vadd.f32 %v1301, %v1470
        %1472 = vdwg.mxu0
        %1473 = vmatpush.bf16.msra.mxu0 0
        %1474 = vmatpush.bf16.msra.mxu0 0
        %1475 = vmatpush.bf16.msra.mxu0 0
        %1476 = vmatpush.bf16.msra.mxu0 0
        %1477 = vmatpush.bf16.msra.mxu0 0
        %1478 = vmatpush.bf16.msra.mxu0 0
        %1479 = vmatpush.bf16.msra.mxu0 0
        %1480 = vmatpush.bf16.msra.mxu0 %v1414
        %1481 = vmatmul.bf16.gmra.mxu0 %v1429
        %v1482 = vpop.f32.mrf.mxu0
        %v1483 = vadd.f32 %v1313, %v1482
        %v1484 = vpop.f32.mrf.mxu0
        %v1485 = vadd.f32 %v1315, %v1484
        %1486 = vdwg.mxu0
        %1487 = vmatpush.bf16.msra.mxu0 0
        %1488 = vmatpush.bf16.msra.mxu0 0
        %1489 = vmatpush.bf16.msra.mxu0 0
        %1490 = vmatpush.bf16.msra.mxu0 0
        %1491 = vmatpush.bf16.msra.mxu0 0
        %1492 = vmatpush.bf16.msra.mxu0 0
        %1493 = vmatpush.bf16.msra.mxu0 0
        %1494 = vmatpush.bf16.msra.mxu0 %v1415
        %1495 = vmatmul.bf16.gmra.mxu0 %v1429
        %v1496 = vpop.f32.mrf.mxu0
        %v1497 = vadd.f32 %v1327, %v1496
        %v1498 = vpop.f32.mrf.mxu0
        %v1499 = vadd.f32 %v1329, %v1498
        %1500 = vdwg.mxu0
        %1501 = vmatpush.bf16.msra.mxu0 0
        %1502 = vmatpush.bf16.msra.mxu0 0
        %1503 = vmatpush.bf16.msra.mxu0 0
        %1504 = vmatpush.bf16.msra.mxu0 0
        %1505 = vmatpush.bf16.msra.mxu0 0
        %1506 = vmatpush.bf16.msra.mxu0 0
        %1507 = vmatpush.bf16.msra.mxu0 0
        %1508 = vmatpush.bf16.msra.mxu0 %v1416
        %1509 = vmatmul.bf16.gmra.mxu0 %v1429
        %v1510 = vpop.f32.mrf.mxu0
        %v1511 = vadd.f32 %v1341, %v1510
        %v1512 = vpop.f32.mrf.mxu0
        %v1513 = vadd.f32 %v1343, %v1512
        %1514 = vdwg.mxu0
        %1515 = vmatpush.bf16.msra.mxu0 0
        %1516 = vmatpush.bf16.msra.mxu0 0
        %1517 = vmatpush.bf16.msra.mxu0 0
        %1518 = vmatpush.bf16.msra.mxu0 0
        %1519 = vmatpush.bf16.msra.mxu0 0
        %1520 = vmatpush.bf16.msra.mxu0 0
        %1521 = vmatpush.bf16.msra.mxu0 0
        %1522 = vmatpush.bf16.msra.mxu0 %v1417
        %1523 = vmatmul.bf16.gmra.mxu0 %v1429
        %v1524 = vpop.f32.mrf.mxu0
        %v1525 = vadd.f32 %v1355, %v1524
        %v1526 = vpop.f32.mrf.mxu0
        %v1527 = vadd.f32 %v1357, %v1526
        %1528 = vdwg.mxu0
        %1529 = vmatpush.bf16.msra.mxu0 0
        %1530 = vmatpush.bf16.msra.mxu0 0
        %1531 = vmatpush.bf16.msra.mxu0 0
        %1532 = vmatpush.bf16.msra.mxu0 0
        %1533 = vmatpush.bf16.msra.mxu0 0
        %1534 = vmatpush.bf16.msra.mxu0 0
        %1535 = vmatpush.bf16.msra.mxu0 0
        %1536 = vmatpush.bf16.msra.mxu0 %v1418
        %1537 = vmatmul.bf16.gmra.mxu0 %v1429
        %v1538 = vpop.f32.mrf.mxu0
        %v1539 = vadd.f32 %v1369, %v1538
        %v1540 = vpop.f32.mrf.mxu0
        %v1541 = vadd.f32 %v1371, %v1540
        %1542 = vdwg.mxu0
        %1543 = vmatpush.bf16.msra.mxu0 0
        %1544 = vmatpush.bf16.msra.mxu0 0
        %1545 = vmatpush.bf16.msra.mxu0 0
        %1546 = vmatpush.bf16.msra.mxu0 0
        %1547 = vmatpush.bf16.msra.mxu0 0
        %1548 = vmatpush.bf16.msra.mxu0 0
        %1549 = vmatpush.bf16.msra.mxu0 0
        %1550 = vmatpush.bf16.msra.mxu0 %v1409
        %1551 = vmatmul.bf16.gmra.mxu0 %v1429
        %v1552 = vpop.f32.mrf.mxu0
        %v1553 = vadd.f32 %v1383, %v1552
        %v1554 = vpop.f32.mrf.mxu0
        %v1555 = vadd.f32 %v1385, %v1554
        %1556 = vdwg.mxu0
        %v1557 = vld [vmem:[%s4 + $0x38] sm:$0xf]
        %v1558 = vld [vmem:[%s4 + $0x3c] sm:$0xf]
        %v1559 = vld [vmem:[#allocation2 + $0x4] sm:$0xff]
        %v1560 = vld [vmem:[#allocation2 + $0xc] sm:$0xff]
        %v1561 = vld [vmem:[#allocation2 + $0x14] sm:$0xff]
        %v1562 = vld [vmem:[#allocation2 + $0x1c] sm:$0xff]
        %v1563 = vld [vmem:[#allocation2 + $0x24] sm:$0xf]
        %v1564 = vld [vmem:[#allocation2 + $0x2c] sm:$0xff]
        %v1565 = vld [vmem:[#allocation2 + $0x34] sm:$0xff]
        %v1566 = vld [vmem:[#allocation2 + $0x3c] sm:$0xff]
        %v1567 = vld [vmem:[#allocation2 + $0x44] sm:$0xff]
        %v1568 = vld [vmem:[#allocation2 + $0x4c] sm:$0xf]
        %v1571 = vunpack.c.l.b16 %v1557
        %v1572 = vunpack.c.l.b16 %v1558
        %v1573 = vpack.c.b16 %v1572, %v1571
        %v1584 = vunpack.c.l.b16 %v1559
        %v1585 = vunpack.c.h.b16 %v1559
        %v1586 = vunpack.c.l.b16 %v1560
        %v1587 = vunpack.c.h.b16 %v1560
        %v1588 = vunpack.c.l.b16 %v1561
        %v1589 = vunpack.c.h.b16 %v1561
        %v1590 = vunpack.c.l.b16 %v1562
        %v1591 = vunpack.c.h.b16 %v1562
        %v1592 = vunpack.c.l.b16 %v1563
        %v1593 = vunpack.c.l.b16 %v1564
        %v1594 = vunpack.c.h.b16 %v1564
        %v1595 = vunpack.c.l.b16 %v1565
        %v1596 = vunpack.c.h.b16 %v1565
        %v1597 = vunpack.c.l.b16 %v1566
        %v1598 = vunpack.c.h.b16 %v1566
        %v1599 = vunpack.c.l.b16 %v1567
        %v1600 = vunpack.c.h.b16 %v1567
        %v1601 = vunpack.c.l.b16 %v1568
        %v1602 = vpack.c.b16 %v1593, %v1584
        %v1603 = vpack.c.b16 %v1594, %v1585
        %v1604 = vpack.c.b16 %v1595, %v1586
        %v1605 = vpack.c.b16 %v1596, %v1587
        %v1606 = vpack.c.b16 %v1597, %v1588
        %v1607 = vpack.c.b16 %v1598, %v1589
        %v1608 = vpack.c.b16 %v1599, %v1590
        %v1609 = vpack.c.b16 %v1600, %v1591
        %v1610 = vpack.c.b16 %v1601, %v1592
        %v1621 = vsel %vm674, %v1573, 0
        %1623 = vmatpush.bf16.msra.mxu0 0
        %1624 = vmatpush.bf16.msra.mxu0 0
        %1625 = vmatpush.bf16.msra.mxu0 0
        %1626 = vmatpush.bf16.msra.mxu0 0
        %1627 = vmatpush.bf16.msra.mxu0 0
        %1628 = vmatpush.bf16.msra.mxu0 0
        %1629 = vmatpush.bf16.msra.mxu0 0
        %1630 = vmatpush.bf16.msra.mxu0 %v1602
        %1631 = vmatmul.bf16.gmra.mxu0 %v1621
        %v1632 = vpop.f32.mrf.mxu0
        %v1633 = vadd.f32 0.0, %v1632
        %v1634 = vpop.f32.mrf.mxu0
        %v1635 = vadd.f32 0.0, %v1634
        %1636 = vdwg.mxu0
        %1637 = vmatpush.bf16.msra.mxu0 0
        %1638 = vmatpush.bf16.msra.mxu0 0
        %1639 = vmatpush.bf16.msra.mxu0 0
        %1640 = vmatpush.bf16.msra.mxu0 0
        %1641 = vmatpush.bf16.msra.mxu0 0
        %1642 = vmatpush.bf16.msra.mxu0 0
        %1643 = vmatpush.bf16.msra.mxu0 0
        %1644 = vmatpush.bf16.msra.mxu0 %v1603
        %1645 = vmatmul.bf16.gmra.mxu0 %v1621
        %v1646 = vpop.f32.mrf.mxu0
        %v1647 = vadd.f32 0.0, %v1646
        %v1648 = vpop.f32.mrf.mxu0
        %v1649 = vadd.f32 0.0, %v1648
        %1650 = vdwg.mxu0
        %1651 = vmatpush.bf16.msra.mxu0 0
        %1652 = vmatpush.bf16.msra.mxu0 0
        %1653 = vmatpush.bf16.msra.mxu0 0
        %1654 = vmatpush.bf16.msra.mxu0 0
        %1655 = vmatpush.bf16.msra.mxu0 0
        %1656 = vmatpush.bf16.msra.mxu0 0
        %1657 = vmatpush.bf16.msra.mxu0 0
        %1658 = vmatpush.bf16.msra.mxu0 %v1604
        %1659 = vmatmul.bf16.gmra.mxu0 %v1621
        %v1660 = vpop.f32.mrf.mxu0
        %v1661 = vadd.f32 0.0, %v1660
        %v1662 = vpop.f32.mrf.mxu0
        %v1663 = vadd.f32 0.0, %v1662
        %1664 = vdwg.mxu0
        %1665 = vmatpush.bf16.msra.mxu0 0
        %1666 = vmatpush.bf16.msra.mxu0 0
        %1667 = vmatpush.bf16.msra.mxu0 0
        %1668 = vmatpush.bf16.msra.mxu0 0
        %1669 = vmatpush.bf16.msra.mxu0 0
        %1670 = vmatpush.bf16.msra.mxu0 0
        %1671 = vmatpush.bf16.msra.mxu0 0
        %1672 = vmatpush.bf16.msra.mxu0 %v1605
        %1673 = vmatmul.bf16.gmra.mxu0 %v1621
        %v1674 = vpop.f32.mrf.mxu0
        %v1675 = vadd.f32 0.0, %v1674
        %v1676 = vpop.f32.mrf.mxu0
        %v1677 = vadd.f32 0.0, %v1676
        %1678 = vdwg.mxu0
        %1679 = vmatpush.bf16.msra.mxu0 0
        %1680 = vmatpush.bf16.msra.mxu0 0
        %1681 = vmatpush.bf16.msra.mxu0 0
        %1682 = vmatpush.bf16.msra.mxu0 0
        %1683 = vmatpush.bf16.msra.mxu0 0
        %1684 = vmatpush.bf16.msra.mxu0 0
        %1685 = vmatpush.bf16.msra.mxu0 0
        %1686 = vmatpush.bf16.msra.mxu0 %v1606
        %1687 = vmatmul.bf16.gmra.mxu0 %v1621
        %v1688 = vpop.f32.mrf.mxu0
        %v1689 = vadd.f32 0.0, %v1688
        %v1690 = vpop.f32.mrf.mxu0
        %v1691 = vadd.f32 0.0, %v1690
        %1692 = vdwg.mxu0
        %1693 = vmatpush.bf16.msra.mxu0 0
        %1694 = vmatpush.bf16.msra.mxu0 0
        %1695 = vmatpush.bf16.msra.mxu0 0
        %1696 = vmatpush.bf16.msra.mxu0 0
        %1697 = vmatpush.bf16.msra.mxu0 0
        %1698 = vmatpush.bf16.msra.mxu0 0
        %1699 = vmatpush.bf16.msra.mxu0 0
        %1700 = vmatpush.bf16.msra.mxu0 %v1607
        %1701 = vmatmul.bf16.gmra.mxu0 %v1621
        %v1702 = vpop.f32.mrf.mxu0
        %v1703 = vadd.f32 0.0, %v1702
        %v1704 = vpop.f32.mrf.mxu0
        %v1705 = vadd.f32 0.0, %v1704
        %1706 = vdwg.mxu0
        %1707 = vmatpush.bf16.msra.mxu0 0
        %1708 = vmatpush.bf16.msra.mxu0 0
        %1709 = vmatpush.bf16.msra.mxu0 0
        %1710 = vmatpush.bf16.msra.mxu0 0
        %1711 = vmatpush.bf16.msra.mxu0 0
        %1712 = vmatpush.bf16.msra.mxu0 0
        %1713 = vmatpush.bf16.msra.mxu0 0
        %1714 = vmatpush.bf16.msra.mxu0 %v1608
        %1715 = vmatmul.bf16.gmra.mxu0 %v1621
        %v1716 = vpop.f32.mrf.mxu0
        %v1717 = vadd.f32 0.0, %v1716
        %v1718 = vpop.f32.mrf.mxu0
        %v1719 = vadd.f32 0.0, %v1718
        %1720 = vdwg.mxu0
        %1721 = vmatpush.bf16.msra.mxu0 0
        %1722 = vmatpush.bf16.msra.mxu0 0
        %1723 = vmatpush.bf16.msra.mxu0 0
        %1724 = vmatpush.bf16.msra.mxu0 0
        %1725 = vmatpush.bf16.msra.mxu0 0
        %1726 = vmatpush.bf16.msra.mxu0 0
        %1727 = vmatpush.bf16.msra.mxu0 0
        %1728 = vmatpush.bf16.msra.mxu0 %v1609
        %1729 = vmatmul.bf16.gmra.mxu0 %v1621
        %v1730 = vpop.f32.mrf.mxu0
        %v1731 = vadd.f32 0.0, %v1730
        %v1732 = vpop.f32.mrf.mxu0
        %v1733 = vadd.f32 0.0, %v1732
        %1734 = vdwg.mxu0
        %1735 = vmatpush.bf16.msra.mxu0 0
        %1736 = vmatpush.bf16.msra.mxu0 0
        %1737 = vmatpush.bf16.msra.mxu0 0
        %1738 = vmatpush.bf16.msra.mxu0 0
        %1739 = vmatpush.bf16.msra.mxu0 0
        %1740 = vmatpush.bf16.msra.mxu0 0
        %1741 = vmatpush.bf16.msra.mxu0 0
        %1742 = vmatpush.bf16.msra.mxu0 %v1610
        %1743 = vmatmul.bf16.gmra.mxu0 %v1621
        %v1744 = vpop.f32.mrf.mxu0
        %v1745 = vadd.f32 0.0, %v1744
        %v1746 = vpop.f32.mrf.mxu0
        %v1747 = vadd.f32 0.0, %v1746
        %1748 = vdwg.mxu0
        %v1749 = vadd.f32 %v1441, %v1633
        %v1750 = vadd.f32 %v1455, %v1647
        %v1751 = vadd.f32 %v1469, %v1661
        %v1752 = vadd.f32 %v1483, %v1675
        %v1753 = vadd.f32 %v1497, %v1689
        %v1754 = vadd.f32 %v1511, %v1703
        %v1755 = vadd.f32 %v1525, %v1717
        %v1756 = vadd.f32 %v1539, %v1731
        %v1757 = vadd.f32 %v1553, %v1745
        %v1758 = vadd.f32 %v1443, %v1635
        %v1759 = vadd.f32 %v1457, %v1649
        %v1760 = vadd.f32 %v1471, %v1663
        %v1761 = vadd.f32 %v1485, %v1677
        %v1762 = vadd.f32 %v1499, %v1691
        %v1763 = vadd.f32 %v1513, %v1705
        %v1764 = vadd.f32 %v1527, %v1719
        %v1765 = vadd.f32 %v1541, %v1733
        %v1766 = vadd.f32 %v1555, %v1747
        %v1767 = vadd.f32 %v1192, %v1749
        %v1768 = vadd.f32 %v1193, %v1750
        %v1769 = vadd.f32 %v1194, %v1751
        %v1770 = vadd.f32 %v1195, %v1752
        %v1771 = vadd.f32 %v1196, %v1753
        %v1772 = vadd.f32 %v1197, %v1754
        %v1773 = vadd.f32 %v1198, %v1755
        %v1774 = vadd.f32 %v1199, %v1756
        %v1775 = vadd.f32 %v1200, %v1757
        %v1776 = vadd.f32 %v1201, %v1758
        %v1777 = vadd.f32 %v1202, %v1759
        %v1778 = vadd.f32 %v1203, %v1760
        %v1779 = vadd.f32 %v1204, %v1761
        %v1780 = vadd.f32 %v1205, %v1762
        %v1781 = vadd.f32 %v1206, %v1763
        %v1782 = vadd.f32 %v1207, %v1764
        %v1783 = vadd.f32 %v1208, %v1765
        %v1784 = vadd.f32 %v1209, %v1766
        %v1785 = vld [vmem:[%s4 + $0x10] sm:$0xf]
        %v1786 = vld [vmem:[%s4 + $0x14] sm:$0xf]
        %v1787 = vld [vmem:[%s4 + $0x28] sm:$0xf]
        %v1788 = vld [vmem:[%s4 + $0x2c] sm:$0xf]
        %v1791 = vunpack.c.l.b16 %v1787
        %v1792 = vunpack.c.l.b16 %v1788
        %v1793 = vpack.c.b16 %v1792, %v1791
        %1794 = vrot.lane.b32.xlu0 %v625, 31
        %v1795 = vpop.permute.xlu0 %1794
        %1796 = vrot.lane.b32.xlu0 %v626, 31
        %v1797 = vpop.permute.xlu0 %1796
        %1798 = vrot.lane.b32.xlu0 %v627, 31
        %v1799 = vpop.permute.xlu0 %1798
        %1800 = vrot.lane.b32.xlu0 %v628, 31
        %v1801 = vpop.permute.xlu0 %1800
        %1802 = vrot.lane.b32.xlu0 %v629, 31
        %v1803 = vpop.permute.xlu0 %1802
        %1804 = vrot.lane.b32.xlu0 %v630, 31
        %v1805 = vpop.permute.xlu0 %1804
        %1806 = vrot.lane.b32.xlu0 %v631, 31
        %v1807 = vpop.permute.xlu0 %1806
        %1808 = vrot.lane.b32.xlu0 %v632, 31
        %v1809 = vpop.permute.xlu0 %1808
        %1810 = vrot.lane.b32.xlu0 %v633, 31
        %v1811 = vpop.permute.xlu0 %1810
        %1812 = vrot.lane.b32.xlu0 %v634, 31
        %v1813 = vpop.permute.xlu0 %1812
        %vm1814 = vcmask 252928
        %v1815 = vsel %vm1814, %v1795, %v1797
        %v1816 = vsel %vm1814, %v1797, %v1799
        %v1817 = vsel %vm1814, %v1799, %v1801
        %v1818 = vsel %vm1814, %v1801, %v1803
        %v1819 = vsel %vm1814, %v1803, %v1805
        %v1820 = vsel %vm1814, %v1805, %v1807
        %v1821 = vsel %vm1814, %v1807, %v1809
        %v1822 = vsel %vm1814, %v1809, %v1811
        %v1823 = vsel %vm1814, %v1811, %v1813
        %v1834 = vsel %vm674, %v1793, 0
        %1836 = vmatpush.bf16.msra.mxu0 0
        %1837 = vmatpush.bf16.msra.mxu0 0
        %1838 = vmatpush.bf16.msra.mxu0 0
        %1839 = vmatpush.bf16.msra.mxu0 0
        %1840 = vmatpush.bf16.msra.mxu0 0
        %1841 = vmatpush.bf16.msra.mxu0 0
        %1842 = vmatpush.bf16.msra.mxu0 0
        %1843 = vmatpush.bf16.msra.mxu0 %v1815
        %1844 = vmatmul.bf16.gmra.mxu0 %v1834
        %v1845 = vpop.f32.mrf.mxu0
        %v1846 = vadd.f32 0.0, %v1845
        %v1847 = vpop.f32.mrf.mxu0
        %v1848 = vadd.f32 0.0, %v1847
        %1849 = vdwg.mxu0
        %1850 = vmatpush.bf16.msra.mxu0 0
        %1851 = vmatpush.bf16.msra.mxu0 0
        %1852 = vmatpush.bf16.msra.mxu0 0
        %1853 = vmatpush.bf16.msra.mxu0 0
        %1854 = vmatpush.bf16.msra.mxu0 0
        %1855 = vmatpush.bf16.msra.mxu0 0
        %1856 = vmatpush.bf16.msra.mxu0 0
        %1857 = vmatpush.bf16.msra.mxu0 %v1816
        %1858 = vmatmul.bf16.gmra.mxu0 %v1834
        %v1859 = vpop.f32.mrf.mxu0
        %v1860 = vadd.f32 0.0, %v1859
        %v1861 = vpop.f32.mrf.mxu0
        %v1862 = vadd.f32 0.0, %v1861
        %1863 = vdwg.mxu0
        %1864 = vmatpush.bf16.msra.mxu0 0
        %1865 = vmatpush.bf16.msra.mxu0 0
        %1866 = vmatpush.bf16.msra.mxu0 0
        %1867 = vmatpush.bf16.msra.mxu0 0
        %1868 = vmatpush.bf16.msra.mxu0 0
        %1869 = vmatpush.bf16.msra.mxu0 0
        %1870 = vmatpush.bf16.msra.mxu0 0
        %1871 = vmatpush.bf16.msra.mxu0 %v1817
        %1872 = vmatmul.bf16.gmra.mxu0 %v1834
        %v1873 = vpop.f32.mrf.mxu0
        %v1874 = vadd.f32 0.0, %v1873
        %v1875 = vpop.f32.mrf.mxu0
        %v1876 = vadd.f32 0.0, %v1875
        %1877 = vdwg.mxu0
        %1878 = vmatpush.bf16.msra.mxu0 0
        %1879 = vmatpush.bf16.msra.mxu0 0
        %1880 = vmatpush.bf16.msra.mxu0 0
        %1881 = vmatpush.bf16.msra.mxu0 0
        %1882 = vmatpush.bf16.msra.mxu0 0
        %1883 = vmatpush.bf16.msra.mxu0 0
        %1884 = vmatpush.bf16.msra.mxu0 0
        %1885 = vmatpush.bf16.msra.mxu0 %v1818
        %1886 = vmatmul.bf16.gmra.mxu0 %v1834
        %v1887 = vpop.f32.mrf.mxu0
        %v1888 = vadd.f32 0.0, %v1887
        %v1889 = vpop.f32.mrf.mxu0
        %v1890 = vadd.f32 0.0, %v1889
        %1891 = vdwg.mxu0
        %1892 = vmatpush.bf16.msra.mxu0 0
        %1893 = vmatpush.bf16.msra.mxu0 0
        %1894 = vmatpush.bf16.msra.mxu0 0
        %1895 = vmatpush.bf16.msra.mxu0 0
        %1896 = vmatpush.bf16.msra.mxu0 0
        %1897 = vmatpush.bf16.msra.mxu0 0
        %1898 = vmatpush.bf16.msra.mxu0 0
        %1899 = vmatpush.bf16.msra.mxu0 %v1819
        %1900 = vmatmul.bf16.gmra.mxu0 %v1834
        %v1901 = vpop.f32.mrf.mxu0
        %v1902 = vadd.f32 0.0, %v1901
        %v1903 = vpop.f32.mrf.mxu0
        %v1904 = vadd.f32 0.0, %v1903
        %1905 = vdwg.mxu0
        %1906 = vmatpush.bf16.msra.mxu0 0
        %1907 = vmatpush.bf16.msra.mxu0 0
        %1908 = vmatpush.bf16.msra.mxu0 0
        %1909 = vmatpush.bf16.msra.mxu0 0
        %1910 = vmatpush.bf16.msra.mxu0 0
        %1911 = vmatpush.bf16.msra.mxu0 0
        %1912 = vmatpush.bf16.msra.mxu0 0
        %1913 = vmatpush.bf16.msra.mxu0 %v1820
        %1914 = vmatmul.bf16.gmra.mxu0 %v1834
        %v1915 = vpop.f32.mrf.mxu0
        %v1916 = vadd.f32 0.0, %v1915
        %v1917 = vpop.f32.mrf.mxu0
        %v1918 = vadd.f32 0.0, %v1917
        %1919 = vdwg.mxu0
        %1920 = vmatpush.bf16.msra.mxu0 0
        %1921 = vmatpush.bf16.msra.mxu0 0
        %1922 = vmatpush.bf16.msra.mxu0 0
        %1923 = vmatpush.bf16.msra.mxu0 0
        %1924 = vmatpush.bf16.msra.mxu0 0
        %1925 = vmatpush.bf16.msra.mxu0 0
        %1926 = vmatpush.bf16.msra.mxu0 0
        %1927 = vmatpush.bf16.msra.mxu0 %v1821
        %1928 = vmatmul.bf16.gmra.mxu0 %v1834
        %v1929 = vpop.f32.mrf.mxu0
        %v1930 = vadd.f32 0.0, %v1929
        %v1931 = vpop.f32.mrf.mxu0
        %v1932 = vadd.f32 0.0, %v1931
        %1933 = vdwg.mxu0
        %1934 = vmatpush.bf16.msra.mxu0 0
        %1935 = vmatpush.bf16.msra.mxu0 0
        %1936 = vmatpush.bf16.msra.mxu0 0
        %1937 = vmatpush.bf16.msra.mxu0 0
        %1938 = vmatpush.bf16.msra.mxu0 0
        %1939 = vmatpush.bf16.msra.mxu0 0
        %1940 = vmatpush.bf16.msra.mxu0 0
        %1941 = vmatpush.bf16.msra.mxu0 %v1822
        %1942 = vmatmul.bf16.gmra.mxu0 %v1834
        %v1943 = vpop.f32.mrf.mxu0
        %v1944 = vadd.f32 0.0, %v1943
        %v1945 = vpop.f32.mrf.mxu0
        %v1946 = vadd.f32 0.0, %v1945
        %1947 = vdwg.mxu0
        %1948 = vmatpush.bf16.msra.mxu0 0
        %1949 = vmatpush.bf16.msra.mxu0 0
        %1950 = vmatpush.bf16.msra.mxu0 0
        %1951 = vmatpush.bf16.msra.mxu0 0
        %1952 = vmatpush.bf16.msra.mxu0 0
        %1953 = vmatpush.bf16.msra.mxu0 0
        %1954 = vmatpush.bf16.msra.mxu0 0
        %1955 = vmatpush.bf16.msra.mxu0 %v1823
        %1956 = vmatmul.bf16.gmra.mxu0 %v1834
        %v1957 = vpop.f32.mrf.mxu0
        %v1958 = vadd.f32 0.0, %v1957
        %v1959 = vpop.f32.mrf.mxu0
        %v1960 = vadd.f32 0.0, %v1959
        %1961 = vdwg.mxu0
        %v1964 = vunpack.c.l.b16 %v1785
        %v1965 = vunpack.c.l.b16 %v1786
        %v1966 = vpack.c.b16 %v1965, %v1964
        %1967 = vrot.lane.b32.xlu0 %v625, 63
        %v1968 = vpop.permute.xlu0 %1967
        %1969 = vrot.lane.b32.xlu0 %v626, 63
        %v1970 = vpop.permute.xlu0 %1969
        %1971 = vrot.lane.b32.xlu0 %v627, 63
        %v1972 = vpop.permute.xlu0 %1971
        %1973 = vrot.lane.b32.xlu0 %v628, 63
        %v1974 = vpop.permute.xlu0 %1973
        %1975 = vrot.lane.b32.xlu0 %v629, 63
        %v1976 = vpop.permute.xlu0 %1975
        %1977 = vrot.lane.b32.xlu0 %v630, 63
        %v1978 = vpop.permute.xlu0 %1977
        %1979 = vrot.lane.b32.xlu0 %v631, 63
        %v1980 = vpop.permute.xlu0 %1979
        %1981 = vrot.lane.b32.xlu0 %v632, 63
        %v1982 = vpop.permute.xlu0 %1981
        %1983 = vrot.lane.b32.xlu0 %v633, 63
        %v1984 = vpop.permute.xlu0 %1983
        %1985 = vrot.lane.b32.xlu0 %v634, 63
        %v1986 = vpop.permute.xlu0 %1985
        %vm1987 = vcmask 515072
        %v1988 = vsel %vm1987, %v1968, %v1970
        %v1989 = vsel %vm1987, %v1970, %v1972
        %v1990 = vsel %vm1987, %v1972, %v1974
        %v1991 = vsel %vm1987, %v1974, %v1976
        %v1992 = vsel %vm1987, %v1976, %v1978
        %v1993 = vsel %vm1987, %v1978, %v1980
        %v1994 = vsel %vm1987, %v1980, %v1982
        %v1995 = vsel %vm1987, %v1982, %v1984
        %v1996 = vsel %vm1987, %v1984, %v1986
        %v2007 = vsel %vm674, %v1966, 0
        %2009 = vmatpush.bf16.msra.mxu0 0
        %2010 = vmatpush.bf16.msra.mxu0 0
        %2011 = vmatpush.bf16.msra.mxu0 0
        %2012 = vmatpush.bf16.msra.mxu0 0
        %2013 = vmatpush.bf16.msra.mxu0 0
        %2014 = vmatpush.bf16.msra.mxu0 0
        %2015 = vmatpush.bf16.msra.mxu0 0
        %2016 = vmatpush.bf16.msra.mxu0 %v1988
        %2017 = vmatmul.bf16.gmra.mxu0 %v2007
        %v2018 = vpop.f32.mrf.mxu0
        %v2019 = vadd.f32 %v1846, %v2018
        %v2020 = vpop.f32.mrf.mxu0
        %v2021 = vadd.f32 %v1848, %v2020
        %2022 = vdwg.mxu0
        %2023 = vmatpush.bf16.msra.mxu0 0
        %2024 = vmatpush.bf16.msra.mxu0 0
        %2025 = vmatpush.bf16.msra.mxu0 0
        %2026 = vmatpush.bf16.msra.mxu0 0
        %2027 = vmatpush.bf16.msra.mxu0 0
        %2028 = vmatpush.bf16.msra.mxu0 0
        %2029 = vmatpush.bf16.msra.mxu0 0
        %2030 = vmatpush.bf16.msra.mxu0 %v1989
        %2031 = vmatmul.bf16.gmra.mxu0 %v2007
        %v2032 = vpop.f32.mrf.mxu0
        %v2033 = vadd.f32 %v1860, %v2032
        %v2034 = vpop.f32.mrf.mxu0
        %v2035 = vadd.f32 %v1862, %v2034
        %2036 = vdwg.mxu0
        %2037 = vmatpush.bf16.msra.mxu0 0
        %2038 = vmatpush.bf16.msra.mxu0 0
        %2039 = vmatpush.bf16.msra.mxu0 0
        %2040 = vmatpush.bf16.msra.mxu0 0
        %2041 = vmatpush.bf16.msra.mxu0 0
        %2042 = vmatpush.bf16.msra.mxu0 0
        %2043 = vmatpush.bf16.msra.mxu0 0
        %2044 = vmatpush.bf16.msra.mxu0 %v1990
        %2045 = vmatmul.bf16.gmra.mxu0 %v2007
        %v2046 = vpop.f32.mrf.mxu0
        %v2047 = vadd.f32 %v1874, %v2046
        %v2048 = vpop.f32.mrf.mxu0
        %v2049 = vadd.f32 %v1876, %v2048
        %2050 = vdwg.mxu0
        %2051 = vmatpush.bf16.msra.mxu0 0
        %2052 = vmatpush.bf16.msra.mxu0 0
        %2053 = vmatpush.bf16.msra.mxu0 0
        %2054 = vmatpush.bf16.msra.mxu0 0
        %2055 = vmatpush.bf16.msra.mxu0 0
        %2056 = vmatpush.bf16.msra.mxu0 0
        %2057 = vmatpush.bf16.msra.mxu0 0
        %2058 = vmatpush.bf16.msra.mxu0 %v1991
        %2059 = vmatmul.bf16.gmra.mxu0 %v2007
        %v2060 = vpop.f32.mrf.mxu0
        %v2061 = vadd.f32 %v1888, %v2060
        %v2062 = vpop.f32.mrf.mxu0
        %v2063 = vadd.f32 %v1890, %v2062
        %2064 = vdwg.mxu0
        %2065 = vmatpush.bf16.msra.mxu0 0
        %2066 = vmatpush.bf16.msra.mxu0 0
        %2067 = vmatpush.bf16.msra.mxu0 0
        %2068 = vmatpush.bf16.msra.mxu0 0
        %2069 = vmatpush.bf16.msra.mxu0 0
        %2070 = vmatpush.bf16.msra.mxu0 0
        %2071 = vmatpush.bf16.msra.mxu0 0
        %2072 = vmatpush.bf16.msra.mxu0 %v1992
        %2073 = vmatmul.bf16.gmra.mxu0 %v2007
        %v2074 = vpop.f32.mrf.mxu0
        %v2075 = vadd.f32 %v1902, %v2074
        %v2076 = vpop.f32.mrf.mxu0
        %v2077 = vadd.f32 %v1904, %v2076
        %2078 = vdwg.mxu0
        %2079 = vmatpush.bf16.msra.mxu0 0
        %2080 = vmatpush.bf16.msra.mxu0 0
        %2081 = vmatpush.bf16.msra.mxu0 0
        %2082 = vmatpush.bf16.msra.mxu0 0
        %2083 = vmatpush.bf16.msra.mxu0 0
        %2084 = vmatpush.bf16.msra.mxu0 0
        %2085 = vmatpush.bf16.msra.mxu0 0
        %2086 = vmatpush.bf16.msra.mxu0 %v1993
        %2087 = vmatmul.bf16.gmra.mxu0 %v2007
        %v2088 = vpop.f32.mrf.mxu0
        %v2089 = vadd.f32 %v1916, %v2088
        %v2090 = vpop.f32.mrf.mxu0
        %v2091 = vadd.f32 %v1918, %v2090
        %2092 = vdwg.mxu0
        %2093 = vmatpush.bf16.msra.mxu0 0
        %2094 = vmatpush.bf16.msra.mxu0 0
        %2095 = vmatpush.bf16.msra.mxu0 0
        %2096 = vmatpush.bf16.msra.mxu0 0
        %2097 = vmatpush.bf16.msra.mxu0 0
        %2098 = vmatpush.bf16.msra.mxu0 0
        %2099 = vmatpush.bf16.msra.mxu0 0
        %2100 = vmatpush.bf16.msra.mxu0 %v1994
        %2101 = vmatmul.bf16.gmra.mxu0 %v2007
        %v2102 = vpop.f32.mrf.mxu0
        %v2103 = vadd.f32 %v1930, %v2102
        %v2104 = vpop.f32.mrf.mxu0
        %v2105 = vadd.f32 %v1932, %v2104
        %2106 = vdwg.mxu0
        %2107 = vmatpush.bf16.msra.mxu0 0
        %2108 = vmatpush.bf16.msra.mxu0 0
        %2109 = vmatpush.bf16.msra.mxu0 0
        %2110 = vmatpush.bf16.msra.mxu0 0
        %2111 = vmatpush.bf16.msra.mxu0 0
        %2112 = vmatpush.bf16.msra.mxu0 0
        %2113 = vmatpush.bf16.msra.mxu0 0
        %2114 = vmatpush.bf16.msra.mxu0 %v1995
        %2115 = vmatmul.bf16.gmra.mxu0 %v2007
        %v2116 = vpop.f32.mrf.mxu0
        %v2117 = vadd.f32 %v1944, %v2116
        %v2118 = vpop.f32.mrf.mxu0
        %v2119 = vadd.f32 %v1946, %v2118
        %2120 = vdwg.mxu0
        %2121 = vmatpush.bf16.msra.mxu0 0
        %2122 = vmatpush.bf16.msra.mxu0 0
        %2123 = vmatpush.bf16.msra.mxu0 0
        %2124 = vmatpush.bf16.msra.mxu0 0
        %2125 = vmatpush.bf16.msra.mxu0 0
        %2126 = vmatpush.bf16.msra.mxu0 0
        %2127 = vmatpush.bf16.msra.mxu0 0
        %2128 = vmatpush.bf16.msra.mxu0 %v1996
        %2129 = vmatmul.bf16.gmra.mxu0 %v2007
        %v2130 = vpop.f32.mrf.mxu0
        %v2131 = vadd.f32 %v1958, %v2130
        %v2132 = vpop.f32.mrf.mxu0
        %v2133 = vadd.f32 %v1960, %v2132
        %2134 = vdwg.mxu0
        %v2135 = vld [vmem:[%s4 + $0x40] sm:$0xf]
        %v2136 = vld [vmem:[%s4 + $0x44] sm:$0xf]
        %v2139 = vunpack.c.l.b16 %v2135
        %v2140 = vunpack.c.l.b16 %v2136
        %v2141 = vpack.c.b16 %v2140, %v2139
        %2142 = vrot.lane.b32.xlu0 %v1602, 127
        %v2143 = vpop.permute.xlu0 %2142
        %2144 = vrot.lane.b32.xlu0 %v1603, 127
        %v2145 = vpop.permute.xlu0 %2144
        %2146 = vrot.lane.b32.xlu0 %v1604, 127
        %v2147 = vpop.permute.xlu0 %2146
        %2148 = vrot.lane.b32.xlu0 %v1605, 127
        %v2149 = vpop.permute.xlu0 %2148
        %2150 = vrot.lane.b32.xlu0 %v1606, 127
        %v2151 = vpop.permute.xlu0 %2150
        %2152 = vrot.lane.b32.xlu0 %v1607, 127
        %v2153 = vpop.permute.xlu0 %2152
        %2154 = vrot.lane.b32.xlu0 %v1608, 127
        %v2155 = vpop.permute.xlu0 %2154
        %2156 = vrot.lane.b32.xlu0 %v1609, 127
        %v2157 = vpop.permute.xlu0 %2156
        %2158 = vrot.lane.b32.xlu0 %v1610, 127
        %v2159 = vpop.permute.xlu0 %2158
        %vm2160 = vcmask 1039360
        %v2161 = vsel %vm2160, %v2143, %v2145
        %v2162 = vsel %vm2160, %v2145, %v2147
        %v2163 = vsel %vm2160, %v2147, %v2149
        %v2164 = vsel %vm2160, %v2149, %v2151
        %v2165 = vsel %vm2160, %v2151, %v2153
        %v2166 = vsel %vm2160, %v2153, %v2155
        %v2167 = vsel %vm2160, %v2155, %v2157
        %v2168 = vsel %vm2160, %v2157, %v2159
        %v2179 = vsel %vm674, %v2141, 0
        %2181 = vmatpush.bf16.msra.mxu0 0
        %2182 = vmatpush.bf16.msra.mxu0 0
        %2183 = vmatpush.bf16.msra.mxu0 0
        %2184 = vmatpush.bf16.msra.mxu0 0
        %2185 = vmatpush.bf16.msra.mxu0 0
        %2186 = vmatpush.bf16.msra.mxu0 0
        %2187 = vmatpush.bf16.msra.mxu0 0
        %2188 = vmatpush.bf16.msra.mxu0 %v2161
        %2189 = vmatmul.bf16.gmra.mxu0 %v2179
        %v2190 = vpop.f32.mrf.mxu0
        %v2191 = vadd.f32 0.0, %v2190
        %v2192 = vpop.f32.mrf.mxu0
        %v2193 = vadd.f32 0.0, %v2192
        %2194 = vdwg.mxu0
        %2195 = vmatpush.bf16.msra.mxu0 0
        %2196 = vmatpush.bf16.msra.mxu0 0
        %2197 = vmatpush.bf16.msra.mxu0 0
        %2198 = vmatpush.bf16.msra.mxu0 0
        %2199 = vmatpush.bf16.msra.mxu0 0
        %2200 = vmatpush.bf16.msra.mxu0 0
        %2201 = vmatpush.bf16.msra.mxu0 0
        %2202 = vmatpush.bf16.msra.mxu0 %v2162
        %2203 = vmatmul.bf16.gmra.mxu0 %v2179
        %v2204 = vpop.f32.mrf.mxu0
        %v2205 = vadd.f32 0.0, %v2204
        %v2206 = vpop.f32.mrf.mxu0
        %v2207 = vadd.f32 0.0, %v2206
        %2208 = vdwg.mxu0
        %2209 = vmatpush.bf16.msra.mxu0 0
        %2210 = vmatpush.bf16.msra.mxu0 0
        %2211 = vmatpush.bf16.msra.mxu0 0
        %2212 = vmatpush.bf16.msra.mxu0 0
        %2213 = vmatpush.bf16.msra.mxu0 0
        %2214 = vmatpush.bf16.msra.mxu0 0
        %2215 = vmatpush.bf16.msra.mxu0 0
        %2216 = vmatpush.bf16.msra.mxu0 %v2163
        %2217 = vmatmul.bf16.gmra.mxu0 %v2179
        %v2218 = vpop.f32.mrf.mxu0
        %v2219 = vadd.f32 0.0, %v2218
        %v2220 = vpop.f32.mrf.mxu0
        %v2221 = vadd.f32 0.0, %v2220
        %2222 = vdwg.mxu0
        %2223 = vmatpush.bf16.msra.mxu0 0
        %2224 = vmatpush.bf16.msra.mxu0 0
        %2225 = vmatpush.bf16.msra.mxu0 0
        %2226 = vmatpush.bf16.msra.mxu0 0
        %2227 = vmatpush.bf16.msra.mxu0 0
        %2228 = vmatpush.bf16.msra.mxu0 0
        %2229 = vmatpush.bf16.msra.mxu0 0
        %2230 = vmatpush.bf16.msra.mxu0 %v2164
        %2231 = vmatmul.bf16.gmra.mxu0 %v2179
        %v2232 = vpop.f32.mrf.mxu0
        %v2233 = vadd.f32 0.0, %v2232
        %v2234 = vpop.f32.mrf.mxu0
        %v2235 = vadd.f32 0.0, %v2234
        %2236 = vdwg.mxu0
        %2237 = vmatpush.bf16.msra.mxu0 0
        %2238 = vmatpush.bf16.msra.mxu0 0
        %2239 = vmatpush.bf16.msra.mxu0 0
        %2240 = vmatpush.bf16.msra.mxu0 0
        %2241 = vmatpush.bf16.msra.mxu0 0
        %2242 = vmatpush.bf16.msra.mxu0 0
        %2243 = vmatpush.bf16.msra.mxu0 0
        %2244 = vmatpush.bf16.msra.mxu0 %v2165
        %2245 = vmatmul.bf16.gmra.mxu0 %v2179
        %v2246 = vpop.f32.mrf.mxu0
        %v2247 = vadd.f32 0.0, %v2246
        %v2248 = vpop.f32.mrf.mxu0
        %v2249 = vadd.f32 0.0, %v2248
        %2250 = vdwg.mxu0
        %2251 = vmatpush.bf16.msra.mxu0 0
        %2252 = vmatpush.bf16.msra.mxu0 0
        %2253 = vmatpush.bf16.msra.mxu0 0
        %2254 = vmatpush.bf16.msra.mxu0 0
        %2255 = vmatpush.bf16.msra.mxu0 0
        %2256 = vmatpush.bf16.msra.mxu0 0
        %2257 = vmatpush.bf16.msra.mxu0 0
        %2258 = vmatpush.bf16.msra.mxu0 %v2166
        %2259 = vmatmul.bf16.gmra.mxu0 %v2179
        %v2260 = vpop.f32.mrf.mxu0
        %v2261 = vadd.f32 0.0, %v2260
        %v2262 = vpop.f32.mrf.mxu0
        %v2263 = vadd.f32 0.0, %v2262
        %2264 = vdwg.mxu0
        %2265 = vmatpush.bf16.msra.mxu0 0
        %2266 = vmatpush.bf16.msra.mxu0 0
        %2267 = vmatpush.bf16.msra.mxu0 0
        %2268 = vmatpush.bf16.msra.mxu0 0
        %2269 = vmatpush.bf16.msra.mxu0 0
        %2270 = vmatpush.bf16.msra.mxu0 0
        %2271 = vmatpush.bf16.msra.mxu0 0
        %2272 = vmatpush.bf16.msra.mxu0 %v2167
        %2273 = vmatmul.bf16.gmra.mxu0 %v2179
        %v2274 = vpop.f32.mrf.mxu0
        %v2275 = vadd.f32 0.0, %v2274
        %v2276 = vpop.f32.mrf.mxu0
        %v2277 = vadd.f32 0.0, %v2276
        %2278 = vdwg.mxu0
        %2279 = vmatpush.bf16.msra.mxu0 0
        %2280 = vmatpush.bf16.msra.mxu0 0
        %2281 = vmatpush.bf16.msra.mxu0 0
        %2282 = vmatpush.bf16.msra.mxu0 0
        %2283 = vmatpush.bf16.msra.mxu0 0
        %2284 = vmatpush.bf16.msra.mxu0 0
        %2285 = vmatpush.bf16.msra.mxu0 0
        %2286 = vmatpush.bf16.msra.mxu0 %v2168
        %2287 = vmatmul.bf16.gmra.mxu0 %v2179
        %v2288 = vpop.f32.mrf.mxu0
        %v2289 = vadd.f32 0.0, %v2288
        %v2290 = vpop.f32.mrf.mxu0
        %v2291 = vadd.f32 0.0, %v2290
        %2292 = vdwg.mxu0
        %2293 = vmatpush.bf16.msra.mxu0 0
        %2294 = vmatpush.bf16.msra.mxu0 0
        %2295 = vmatpush.bf16.msra.mxu0 0
        %2296 = vmatpush.bf16.msra.mxu0 0
        %2297 = vmatpush.bf16.msra.mxu0 0
        %2298 = vmatpush.bf16.msra.mxu0 0
        %2299 = vmatpush.bf16.msra.mxu0 0
        %2300 = vmatpush.bf16.msra.mxu0 %v2159
        %2301 = vmatmul.bf16.gmra.mxu0 %v2179
        %v2302 = vpop.f32.mrf.mxu0
        %v2303 = vadd.f32 0.0, %v2302
        %v2304 = vpop.f32.mrf.mxu0
        %v2305 = vadd.f32 0.0, %v2304
        %2306 = vdwg.mxu0
        %v2307 = vadd.f32 %v2019, %v2191
        %v2308 = vadd.f32 %v2033, %v2205
        %v2309 = vadd.f32 %v2047, %v2219
        %v2310 = vadd.f32 %v2061, %v2233
        %v2311 = vadd.f32 %v2075, %v2247
        %v2312 = vadd.f32 %v2089, %v2261
        %v2313 = vadd.f32 %v2103, %v2275
        %v2314 = vadd.f32 %v2117, %v2289
        %v2315 = vadd.f32 %v2131, %v2303
        %v2316 = vadd.f32 %v2021, %v2193
        %v2317 = vadd.f32 %v2035, %v2207
        %v2318 = vadd.f32 %v2049, %v2221
        %v2319 = vadd.f32 %v2063, %v2235
        %v2320 = vadd.f32 %v2077, %v2249
        %v2321 = vadd.f32 %v2091, %v2263
        %v2322 = vadd.f32 %v2105, %v2277
        %v2323 = vadd.f32 %v2119, %v2291
        %v2324 = vadd.f32 %v2133, %v2305
        %v2325 = vsel %vm572, 1, 0
        %v2326 = vsel %vm573, 1, 0
        %v2327 = vperm.slane %v2325, 0
        %v2328 = vperm.slane %v2325, 1
        %v2329 = vperm.slane %v2325, 2
        %v2330 = vperm.slane %v2325, 3
        %v2331 = vperm.slane %v2325, 4
        %v2332 = vperm.slane %v2325, 5
        %v2333 = vperm.slane %v2325, 6
        %v2334 = vperm.slane %v2325, 7
        %v2335 = vperm.slane %v2326, 0
        %vm2336 = vcmp.eq.s32.totalorder %v2327, 1
        %vm2337 = vcmp.eq.s32.totalorder %v2328, 1
        %vm2338 = vcmp.eq.s32.totalorder %v2329, 1
        %vm2339 = vcmp.eq.s32.totalorder %v2330, 1
        %vm2340 = vcmp.eq.s32.totalorder %v2331, 1
        %vm2341 = vcmp.eq.s32.totalorder %v2332, 1
        %vm2342 = vcmp.eq.s32.totalorder %v2333, 1
        %vm2343 = vcmp.eq.s32.totalorder %v2334, 1
        %vm2344 = vcmp.eq.s32.totalorder %v2335, 1
        %v2345 = vsel %vm2336, %v2307, 0.0
        %v2346 = vsel %vm2337, %v2308, 0.0
        %v2347 = vsel %vm2338, %v2309, 0.0
        %v2348 = vsel %vm2339, %v2310, 0.0
        %v2349 = vsel %vm2340, %v2311, 0.0
        %v2350 = vsel %vm2341, %v2312, 0.0
        %v2351 = vsel %vm2342, %v2313, 0.0
        %v2352 = vsel %vm2343, %v2314, 0.0
        %v2353 = vsel %vm2344, %v2315, 0.0
        %v2354 = vsel %vm2336, %v2316, 0.0
        %v2355 = vsel %vm2337, %v2317, 0.0
        %v2356 = vsel %vm2338, %v2318, 0.0
        %v2357 = vsel %vm2339, %v2319, 0.0
        %v2358 = vsel %vm2340, %v2320, 0.0
        %v2359 = vsel %vm2341, %v2321, 0.0
        %v2360 = vsel %vm2342, %v2322, 0.0
        %v2361 = vsel %vm2343, %v2323, 0.0
        %v2362 = vsel %vm2344, %v2324, 0.0
        %v2363 = vadd.f32 %v1767, %v2345
        %v2364 = vadd.f32 %v1768, %v2346
        %v2365 = vadd.f32 %v1769, %v2347
        %v2366 = vadd.f32 %v1770, %v2348
        %v2367 = vadd.f32 %v1771, %v2349
        %v2368 = vadd.f32 %v1772, %v2350
        %v2369 = vadd.f32 %v1773, %v2351
        %v2370 = vadd.f32 %v1774, %v2352
        %v2371 = vadd.f32 %v1775, %v2353
        %v2372 = vadd.f32 %v1776, %v2354
        %v2373 = vadd.f32 %v1777, %v2355
        %v2374 = vadd.f32 %v1778, %v2356
        %v2375 = vadd.f32 %v1779, %v2357
        %v2376 = vadd.f32 %v1780, %v2358
        %v2377 = vadd.f32 %v1781, %v2359
        %v2378 = vadd.f32 %v1782, %v2360
        %v2379 = vadd.f32 %v1783, %v2361
        %v2380 = vadd.f32 %v1784, %v2362
        %v2381 = vld [vmem:[%s5] sm:$0xff]
        %v2382 = vld [vmem:[%s5 + $0x8] sm:$0xff]
        %2384 = vset.pattern.permute.xlu0 0
        %2385 = vperm.xlu0 %2384, %v2381
        %v2386 = vpop.permute.xlu0 %2385
        %2389 = vset.pattern.permute.xlu0 0
        %2390 = vperm.xlu0 %2389, %v2382
        %v2391 = vpop.permute.xlu0 %2390
        %v2393 = vadd.f32 %v2363, %v2386
        %v2394 = vadd.f32 %v2364, %v2386
        %v2395 = vadd.f32 %v2365, %v2386
        %v2396 = vadd.f32 %v2366, %v2386
        %v2397 = vadd.f32 %v2367, %v2386
        %v2398 = vadd.f32 %v2368, %v2386
        %v2399 = vadd.f32 %v2369, %v2386
        %v2400 = vadd.f32 %v2370, %v2386
        %v2401 = vadd.f32 %v2371, %v2386
        %v2402 = vadd.f32 %v2372, %v2391
        %v2403 = vadd.f32 %v2373, %v2391
        %v2404 = vadd.f32 %v2374, %v2391
        %v2405 = vadd.f32 %v2375, %v2391
        %v2406 = vadd.f32 %v2376, %v2391
        %v2407 = vadd.f32 %v2377, %v2391
        %v2408 = vadd.f32 %v2378, %v2391
        %v2409 = vadd.f32 %v2379, %v2391
        %v2410 = vadd.f32 %v2380, %v2391
        %v2411 = vmax.f32 %v2393, 0.0
        %v2412 = vmax.f32 %v2394, 0.0
        %v2413 = vmax.f32 %v2395, 0.0
        %v2414 = vmax.f32 %v2396, 0.0
        %v2415 = vmax.f32 %v2397, 0.0
        %v2416 = vmax.f32 %v2398, 0.0
        %v2417 = vmax.f32 %v2399, 0.0
        %v2418 = vmax.f32 %v2400, 0.0
        %v2419 = vmax.f32 %v2401, 0.0
        %v2420 = vmax.f32 %v2402, 0.0
        %v2421 = vmax.f32 %v2403, 0.0
        %v2422 = vmax.f32 %v2404, 0.0
        %v2423 = vmax.f32 %v2405, 0.0
        %v2424 = vmax.f32 %v2406, 0.0
        %v2425 = vmax.f32 %v2407, 0.0
        %v2426 = vmax.f32 %v2408, 0.0
        %v2427 = vmax.f32 %v2409, 0.0
        %v2428 = vmax.f32 %v2410, 0.0
        %vm2429 = vcmask 1044472
        %2430 = vst.msk [vmem:[#allocation3] sm:$0xf] %vm2429, 0
        %2431 = vst.msk [vmem:[#allocation3 + $0x28] sm:$0xf] %vm2429, 0
        %v2432 = vpack.c.bf16 %v2412, %v2411
        %v2433 = vpack.c.bf16 %v2414, %v2413
        %v2434 = vpack.c.bf16 %v2416, %v2415
        %v2435 = vpack.c.bf16 %v2418, %v2417
        %v2436 = vpack.c.bf16 %v2419, %v2419
        %v2437 = vpack.c.bf16 %v2421, %v2420
        %v2438 = vpack.c.bf16 %v2423, %v2422
        %v2439 = vpack.c.bf16 %v2425, %v2424
        %v2440 = vpack.c.bf16 %v2427, %v2426
        %v2441 = vpack.c.bf16 %v2428, %v2428
        %2442 = vst [vmem:[#allocation3 + $0x4] sm:$0xff] %v2432
        %2443 = vst [vmem:[#allocation3 + $0xc] sm:$0xff] %v2433
        %2444 = vst [vmem:[#allocation3 + $0x14] sm:$0xff] %v2434
        %2445 = vst [vmem:[#allocation3 + $0x1c] sm:$0xff] %v2435
        %2446 = vst.msk [vmem:[#allocation3 + $0x24] sm:$0xf] %vm562, %v2436
        %2447 = vst [vmem:[#allocation3 + $0x2c] sm:$0xff] %v2437
        %2448 = vst [vmem:[#allocation3 + $0x34] sm:$0xff] %v2438
        %2449 = vst [vmem:[#allocation3 + $0x3c] sm:$0xff] %v2439
        %2450 = vst [vmem:[#allocation3 + $0x44] sm:$0xff] %v2440
        %2451 = vst.msk [vmem:[#allocation3 + $0x4c] sm:$0xf] %vm562, %v2441
        %2452 = vst.msk [vmem:[#allocation3 + $0x24] sm:$0xf] %vm565, 0
        %2453 = vst.msk [vmem:[#allocation3 + $0x4c] sm:$0xf] %vm565, 0
        %p2454 = scmp.eq.s32.totalorder %s24, 0
        // Predicated region
        $region129: #{resblock_forward.1} parent=119 // pred_check
          %p2455 = pneg %p2454
        $region130: #{resblock_forward.1} parent=119 // pred_check_branch
          %2457 = sbr.rel (%p2455) target = $region132
        $region131: #{resblock_forward.1} parent=119 // pred_region
          %vm2458 = vcmask 257024
          %2459 = vst.msk [vmem:[#allocation3 + $0x4] sm:$0xf] %vm2458, 0
          %2460 = vst.msk [vmem:[#allocation3 + $0x2c] sm:$0xf] %vm2458, 0
          %vm2461 = vcmask 519424
          %2462 = vst.msk [vmem:[#allocation3 + $0x24] sm:$0xf] %vm2461, 0
          %2463 = vst.msk [vmem:[#allocation3 + $0x4c] sm:$0xf] %vm2461, 0
        $region132: #{resblock_forward.1} parent=119 // pred_fallthru
          _
        %v2464 = vld [vmem:[%s0] sm:$0xff]
        %vm2465 = vcmp.gt.s32.totalorder %v2464, 0
        %vm2466 = vcmp.lt.s32.totalorder %v2464, 31
        %v2467 = vld [vmem:[%s6] sm:$0xf]
        %v2468 = vld [vmem:[%s6 + $0x4] sm:$0xf]
        %v2469 = vld [vmem:[#allocation3] sm:$0xff]
        %v2470 = vld [vmem:[#allocation3 + $0x8] sm:$0xff]
        %v2471 = vld [vmem:[#allocation3 + $0x10] sm:$0xff]
        %v2472 = vld [vmem:[#allocation3 + $0x18] sm:$0xff]
        %v2473 = vld [vmem:[#allocation3 + $0x20] sm:$0xf]
        %v2474 = vld [vmem:[#allocation3 + $0x28] sm:$0xff]
        %v2475 = vld [vmem:[#allocation3 + $0x30] sm:$0xff]
        %v2476 = vld [vmem:[#allocation3 + $0x38] sm:$0xff]
        %v2477 = vld [vmem:[#allocation3 + $0x40] sm:$0xff]
        %v2478 = vld [vmem:[#allocation3 + $0x48] sm:$0xf]
        %v2479 = vld [vmem:[%s6 + $0x18] sm:$0xf]
        %v2480 = vld [vmem:[%s6 + $0x1c] sm:$0xf]
        %v2481 = vld [vmem:[#allocation3 + $0x4] sm:$0xff]
        %v2482 = vld [vmem:[#allocation3 + $0xc] sm:$0xff]
        %v2483 = vld [vmem:[#allocation3 + $0x14] sm:$0xff]
        %v2484 = vld [vmem:[#allocation3 + $0x1c] sm:$0xff]
        %v2485 = vld [vmem:[#allocation3 + $0x24] sm:$0xf]
        %v2486 = vld [vmem:[#allocation3 + $0x2c] sm:$0xff]
        %v2487 = vld [vmem:[#allocation3 + $0x34] sm:$0xff]
        %v2488 = vld [vmem:[#allocation3 + $0x3c] sm:$0xff]
        %v2489 = vld [vmem:[#allocation3 + $0x44] sm:$0xff]
        %v2490 = vld [vmem:[#allocation3 + $0x4c] sm:$0xf]
        %v2493 = vunpack.c.l.b16 %v2479
        %v2494 = vunpack.c.l.b16 %v2480
        %v2495 = vpack.c.b16 %v2494, %v2493
        %v2506 = vunpack.c.l.b16 %v2481
        %v2507 = vunpack.c.h.b16 %v2481
        %v2508 = vunpack.c.l.b16 %v2482
        %v2509 = vunpack.c.h.b16 %v2482
        %v2510 = vunpack.c.l.b16 %v2483
        %v2511 = vunpack.c.h.b16 %v2483
        %v2512 = vunpack.c.l.b16 %v2484
        %v2513 = vunpack.c.h.b16 %v2484
        %v2514 = vunpack.c.l.b16 %v2485
        %v2515 = vunpack.c.l.b16 %v2486
        %v2516 = vunpack.c.h.b16 %v2486
        %v2517 = vunpack.c.l.b16 %v2487
        %v2518 = vunpack.c.h.b16 %v2487
        %v2519 = vunpack.c.l.b16 %v2488
        %v2520 = vunpack.c.h.b16 %v2488
        %v2521 = vunpack.c.l.b16 %v2489
        %v2522 = vunpack.c.h.b16 %v2489
        %v2523 = vunpack.c.l.b16 %v2490
        %v2524 = vpack.c.b16 %v2515, %v2506
        %v2525 = vpack.c.b16 %v2516, %v2507
        %v2526 = vpack.c.b16 %v2517, %v2508
        %v2527 = vpack.c.b16 %v2518, %v2509
        %v2528 = vpack.c.b16 %v2519, %v2510
        %v2529 = vpack.c.b16 %v2520, %v2511
        %v2530 = vpack.c.b16 %v2521, %v2512
        %v2531 = vpack.c.b16 %v2522, %v2513
        %v2532 = vpack.c.b16 %v2523, %v2514
        %2533 = vrot.lane.b32.xlu0 %v2524, 97
        %v2534 = vpop.permute.xlu0 %2533
        %2535 = vrot.lane.b32.xlu0 %v2525, 97
        %v2536 = vpop.permute.xlu0 %2535
        %2537 = vrot.lane.b32.xlu0 %v2526, 97
        %v2538 = vpop.permute.xlu0 %2537
        %2539 = vrot.lane.b32.xlu0 %v2527, 97
        %v2540 = vpop.permute.xlu0 %2539
        %2541 = vrot.lane.b32.xlu0 %v2528, 97
        %v2542 = vpop.permute.xlu0 %2541
        %2543 = vrot.lane.b32.xlu0 %v2529, 97
        %v2544 = vpop.permute.xlu0 %2543
        %2545 = vrot.lane.b32.xlu0 %v2530, 97
        %v2546 = vpop.permute.xlu0 %2545
        %2547 = vrot.lane.b32.xlu0 %v2531, 97
        %v2548 = vpop.permute.xlu0 %2547
        %2549 = vrot.lane.b32.xlu0 %v2532, 97
        %v2550 = vpop.permute.xlu0 %2549
        %vm2551 = vcmask 793600
        %v2552 = vsel %vm2551, %v2534, %v2536
        %v2553 = vsel %vm2551, %v2536, %v2538
        %v2554 = vsel %vm2551, %v2538, %v2540
        %v2555 = vsel %vm2551, %v2540, %v2542
        %v2556 = vsel %vm2551, %v2542, %v2544
        %v2557 = vsel %vm2551, %v2544, %v2546
        %v2558 = vsel %vm2551, %v2546, %v2548
        %v2559 = vsel %vm2551, %v2548, %v2550
        %v2569 = vsel %vm674, %v2495, 0
        %2571 = vmatpush.bf16.msra.mxu0 0
        %2572 = vmatpush.bf16.msra.mxu0 0
        %2573 = vmatpush.bf16.msra.mxu0 0
        %2574 = vmatpush.bf16.msra.mxu0 0
        %2575 = vmatpush.bf16.msra.mxu0 0
        %2576 = vmatpush.bf16.msra.mxu0 0
        %2577 = vmatpush.bf16.msra.mxu0 0
        %2578 = vmatpush.bf16.msra.mxu0 %v2552
        %2579 = vmatmul.bf16.gmra.mxu0 %v2569
        %v2580 = vpop.f32.mrf.mxu0
        %v2581 = vadd.f32 0.0, %v2580
        %v2582 = vpop.f32.mrf.mxu0
        %v2583 = vadd.f32 0.0, %v2582
        %2584 = vdwg.mxu0
        %2585 = vmatpush.bf16.msra.mxu0 0
        %2586 = vmatpush.bf16.msra.mxu0 0
        %2587 = vmatpush.bf16.msra.mxu0 0
        %2588 = vmatpush.bf16.msra.mxu0 0
        %2589 = vmatpush.bf16.msra.mxu0 0
        %2590 = vmatpush.bf16.msra.mxu0 0
        %2591 = vmatpush.bf16.msra.mxu0 0
        %2592 = vmatpush.bf16.msra.mxu0 %v2553
        %2593 = vmatmul.bf16.gmra.mxu0 %v2569
        %v2594 = vpop.f32.mrf.mxu0
        %v2595 = vadd.f32 0.0, %v2594
        %v2596 = vpop.f32.mrf.mxu0
        %v2597 = vadd.f32 0.0, %v2596
        %2598 = vdwg.mxu0
        %2599 = vmatpush.bf16.msra.mxu0 0
        %2600 = vmatpush.bf16.msra.mxu0 0
        %2601 = vmatpush.bf16.msra.mxu0 0
        %2602 = vmatpush.bf16.msra.mxu0 0
        %2603 = vmatpush.bf16.msra.mxu0 0
        %2604 = vmatpush.bf16.msra.mxu0 0
        %2605 = vmatpush.bf16.msra.mxu0 0
        %2606 = vmatpush.bf16.msra.mxu0 %v2554
        %2607 = vmatmul.bf16.gmra.mxu0 %v2569
        %v2608 = vpop.f32.mrf.mxu0
        %v2609 = vadd.f32 0.0, %v2608
        %v2610 = vpop.f32.mrf.mxu0
        %v2611 = vadd.f32 0.0, %v2610
        %2612 = vdwg.mxu0
        %2613 = vmatpush.bf16.msra.mxu0 0
        %2614 = vmatpush.bf16.msra.mxu0 0
        %2615 = vmatpush.bf16.msra.mxu0 0
        %2616 = vmatpush.bf16.msra.mxu0 0
        %2617 = vmatpush.bf16.msra.mxu0 0
        %2618 = vmatpush.bf16.msra.mxu0 0
        %2619 = vmatpush.bf16.msra.mxu0 0
        %2620 = vmatpush.bf16.msra.mxu0 %v2555
        %2621 = vmatmul.bf16.gmra.mxu0 %v2569
        %v2622 = vpop.f32.mrf.mxu0
        %v2623 = vadd.f32 0.0, %v2622
        %v2624 = vpop.f32.mrf.mxu0
        %v2625 = vadd.f32 0.0, %v2624
        %2626 = vdwg.mxu0
        %2627 = vmatpush.bf16.msra.mxu0 0
        %2628 = vmatpush.bf16.msra.mxu0 0
        %2629 = vmatpush.bf16.msra.mxu0 0
        %2630 = vmatpush.bf16.msra.mxu0 0
        %2631 = vmatpush.bf16.msra.mxu0 0
        %2632 = vmatpush.bf16.msra.mxu0 0
        %2633 = vmatpush.bf16.msra.mxu0 0
        %2634 = vmatpush.bf16.msra.mxu0 %v2556
        %2635 = vmatmul.bf16.gmra.mxu0 %v2569
        %v2636 = vpop.f32.mrf.mxu0
        %v2637 = vadd.f32 0.0, %v2636
        %v2638 = vpop.f32.mrf.mxu0
        %v2639 = vadd.f32 0.0, %v2638
        %2640 = vdwg.mxu0
        %2641 = vmatpush.bf16.msra.mxu0 0
        %2642 = vmatpush.bf16.msra.mxu0 0
        %2643 = vmatpush.bf16.msra.mxu0 0
        %2644 = vmatpush.bf16.msra.mxu0 0
        %2645 = vmatpush.bf16.msra.mxu0 0
        %2646 = vmatpush.bf16.msra.mxu0 0
        %2647 = vmatpush.bf16.msra.mxu0 0
        %2648 = vmatpush.bf16.msra.mxu0 %v2557
        %2649 = vmatmul.bf16.gmra.mxu0 %v2569
        %v2650 = vpop.f32.mrf.mxu0
        %v2651 = vadd.f32 0.0, %v2650
        %v2652 = vpop.f32.mrf.mxu0
        %v2653 = vadd.f32 0.0, %v2652
        %2654 = vdwg.mxu0
        %2655 = vmatpush.bf16.msra.mxu0 0
        %2656 = vmatpush.bf16.msra.mxu0 0
        %2657 = vmatpush.bf16.msra.mxu0 0
        %2658 = vmatpush.bf16.msra.mxu0 0
        %2659 = vmatpush.bf16.msra.mxu0 0
        %2660 = vmatpush.bf16.msra.mxu0 0
        %2661 = vmatpush.bf16.msra.mxu0 0
        %2662 = vmatpush.bf16.msra.mxu0 %v2558
        %2663 = vmatmul.bf16.gmra.mxu0 %v2569
        %v2664 = vpop.f32.mrf.mxu0
        %v2665 = vadd.f32 0.0, %v2664
        %v2666 = vpop.f32.mrf.mxu0
        %v2667 = vadd.f32 0.0, %v2666
        %2668 = vdwg.mxu0
        %2669 = vmatpush.bf16.msra.mxu0 0
        %2670 = vmatpush.bf16.msra.mxu0 0
        %2671 = vmatpush.bf16.msra.mxu0 0
        %2672 = vmatpush.bf16.msra.mxu0 0
        %2673 = vmatpush.bf16.msra.mxu0 0
        %2674 = vmatpush.bf16.msra.mxu0 0
        %2675 = vmatpush.bf16.msra.mxu0 0
        %2676 = vmatpush.bf16.msra.mxu0 %v2559
        %2677 = vmatmul.bf16.gmra.mxu0 %v2569
        %v2678 = vpop.f32.mrf.mxu0
        %v2679 = vadd.f32 0.0, %v2678
        %v2680 = vpop.f32.mrf.mxu0
        %v2681 = vadd.f32 0.0, %v2680
        %2682 = vdwg.mxu0
        %v2685 = vunpack.c.l.b16 %v2467
        %v2686 = vunpack.c.l.b16 %v2468
        %v2687 = vpack.c.b16 %v2686, %v2685
        %v2698 = vunpack.c.l.b16 %v2469
        %v2699 = vunpack.c.h.b16 %v2469
        %v2700 = vunpack.c.l.b16 %v2470
        %v2701 = vunpack.c.h.b16 %v2470
        %v2702 = vunpack.c.l.b16 %v2471
        %v2703 = vunpack.c.h.b16 %v2471
        %v2704 = vunpack.c.l.b16 %v2472
        %v2705 = vunpack.c.h.b16 %v2472
        %v2706 = vunpack.c.l.b16 %v2473
        %v2707 = vunpack.c.l.b16 %v2474
        %v2708 = vunpack.c.h.b16 %v2474
        %v2709 = vunpack.c.l.b16 %v2475
        %v2710 = vunpack.c.h.b16 %v2475
        %v2711 = vunpack.c.l.b16 %v2476
        %v2712 = vunpack.c.h.b16 %v2476
        %v2713 = vunpack.c.l.b16 %v2477
        %v2714 = vunpack.c.h.b16 %v2477
        %v2715 = vunpack.c.l.b16 %v2478
        %v2716 = vpack.c.b16 %v2707, %v2698
        %v2717 = vpack.c.b16 %v2708, %v2699
        %v2718 = vpack.c.b16 %v2709, %v2700
        %v2719 = vpack.c.b16 %v2710, %v2701
        %v2720 = vpack.c.b16 %v2711, %v2702
        %v2721 = vpack.c.b16 %v2712, %v2703
        %v2722 = vpack.c.b16 %v2713, %v2704
        %v2723 = vpack.c.b16 %v2714, %v2705
        %v2724 = vpack.c.b16 %v2715, %v2706
        %2725 = vrot.lane.b32.xlu0 %v2716, 1
        %v2726 = vpop.permute.xlu0 %2725
        %2727 = vrot.lane.b32.xlu0 %v2717, 1
        %v2728 = vpop.permute.xlu0 %2727
        %2729 = vrot.lane.b32.xlu0 %v2718, 1
        %v2730 = vpop.permute.xlu0 %2729
        %2731 = vrot.lane.b32.xlu0 %v2719, 1
        %v2732 = vpop.permute.xlu0 %2731
        %2733 = vrot.lane.b32.xlu0 %v2720, 1
        %v2734 = vpop.permute.xlu0 %2733
        %2735 = vrot.lane.b32.xlu0 %v2721, 1
        %v2736 = vpop.permute.xlu0 %2735
        %2737 = vrot.lane.b32.xlu0 %v2722, 1
        %v2738 = vpop.permute.xlu0 %2737
        %2739 = vrot.lane.b32.xlu0 %v2723, 1
        %v2740 = vpop.permute.xlu0 %2739
        %2741 = vrot.lane.b32.xlu0 %v2724, 1
        %v2742 = vpop.permute.xlu0 %2741
        %v2743 = vsel %vm1006, %v2726, %v2728
        %v2744 = vsel %vm1006, %v2728, %v2730
        %v2745 = vsel %vm1006, %v2730, %v2732
        %v2746 = vsel %vm1006, %v2732, %v2734
        %v2747 = vsel %vm1006, %v2734, %v2736
        %v2748 = vsel %vm1006, %v2736, %v2738
        %v2749 = vsel %vm1006, %v2738, %v2740
        %v2750 = vsel %vm1006, %v2740, %v2742
        %v2760 = vsel %vm674, %v2687, 0
        %2762 = vmatpush.bf16.msra.mxu0 0
        %2763 = vmatpush.bf16.msra.mxu0 0
        %2764 = vmatpush.bf16.msra.mxu0 0
        %2765 = vmatpush.bf16.msra.mxu0 0
        %2766 = vmatpush.bf16.msra.mxu0 0
        %2767 = vmatpush.bf16.msra.mxu0 0
        %2768 = vmatpush.bf16.msra.mxu0 0
        %2769 = vmatpush.bf16.msra.mxu0 %v2743
        %2770 = vmatmul.bf16.gmra.mxu0 %v2760
        %v2771 = vpop.f32.mrf.mxu0
        %v2772 = vadd.f32 %v2581, %v2771
        %v2773 = vpop.f32.mrf.mxu0
        %v2774 = vadd.f32 %v2583, %v2773
        %2775 = vdwg.mxu0
        %2776 = vmatpush.bf16.msra.mxu0 0
        %2777 = vmatpush.bf16.msra.mxu0 0
        %2778 = vmatpush.bf16.msra.mxu0 0
        %2779 = vmatpush.bf16.msra.mxu0 0
        %2780 = vmatpush.bf16.msra.mxu0 0
        %2781 = vmatpush.bf16.msra.mxu0 0
        %2782 = vmatpush.bf16.msra.mxu0 0
        %2783 = vmatpush.bf16.msra.mxu0 %v2744
        %2784 = vmatmul.bf16.gmra.mxu0 %v2760
        %v2785 = vpop.f32.mrf.mxu0
        %v2786 = vadd.f32 %v2595, %v2785
        %v2787 = vpop.f32.mrf.mxu0
        %v2788 = vadd.f32 %v2597, %v2787
        %2789 = vdwg.mxu0
        %2790 = vmatpush.bf16.msra.mxu0 0
        %2791 = vmatpush.bf16.msra.mxu0 0
        %2792 = vmatpush.bf16.msra.mxu0 0
        %2793 = vmatpush.bf16.msra.mxu0 0
        %2794 = vmatpush.bf16.msra.mxu0 0
        %2795 = vmatpush.bf16.msra.mxu0 0
        %2796 = vmatpush.bf16.msra.mxu0 0
        %2797 = vmatpush.bf16.msra.mxu0 %v2745
        %2798 = vmatmul.bf16.gmra.mxu0 %v2760
        %v2799 = vpop.f32.mrf.mxu0
        %v2800 = vadd.f32 %v2609, %v2799
        %v2801 = vpop.f32.mrf.mxu0
        %v2802 = vadd.f32 %v2611, %v2801
        %2803 = vdwg.mxu0
        %2804 = vmatpush.bf16.msra.mxu0 0
        %2805 = vmatpush.bf16.msra.mxu0 0
        %2806 = vmatpush.bf16.msra.mxu0 0
        %2807 = vmatpush.bf16.msra.mxu0 0
        %2808 = vmatpush.bf16.msra.mxu0 0
        %2809 = vmatpush.bf16.msra.mxu0 0
        %2810 = vmatpush.bf16.msra.mxu0 0
        %2811 = vmatpush.bf16.msra.mxu0 %v2746
        %2812 = vmatmul.bf16.gmra.mxu0 %v2760
        %v2813 = vpop.f32.mrf.mxu0
        %v2814 = vadd.f32 %v2623, %v2813
        %v2815 = vpop.f32.mrf.mxu0
        %v2816 = vadd.f32 %v2625, %v2815
        %2817 = vdwg.mxu0
        %2818 = vmatpush.bf16.msra.mxu0 0
        %2819 = vmatpush.bf16.msra.mxu0 0
        %2820 = vmatpush.bf16.msra.mxu0 0
        %2821 = vmatpush.bf16.msra.mxu0 0
        %2822 = vmatpush.bf16.msra.mxu0 0
        %2823 = vmatpush.bf16.msra.mxu0 0
        %2824 = vmatpush.bf16.msra.mxu0 0
        %2825 = vmatpush.bf16.msra.mxu0 %v2747
        %2826 = vmatmul.bf16.gmra.mxu0 %v2760
        %v2827 = vpop.f32.mrf.mxu0
        %v2828 = vadd.f32 %v2637, %v2827
        %v2829 = vpop.f32.mrf.mxu0
        %v2830 = vadd.f32 %v2639, %v2829
        %2831 = vdwg.mxu0
        %2832 = vmatpush.bf16.msra.mxu0 0
        %2833 = vmatpush.bf16.msra.mxu0 0
        %2834 = vmatpush.bf16.msra.mxu0 0
        %2835 = vmatpush.bf16.msra.mxu0 0
        %2836 = vmatpush.bf16.msra.mxu0 0
        %2837 = vmatpush.bf16.msra.mxu0 0
        %2838 = vmatpush.bf16.msra.mxu0 0
        %2839 = vmatpush.bf16.msra.mxu0 %v2748
        %2840 = vmatmul.bf16.gmra.mxu0 %v2760
        %v2841 = vpop.f32.mrf.mxu0
        %v2842 = vadd.f32 %v2651, %v2841
        %v2843 = vpop.f32.mrf.mxu0
        %v2844 = vadd.f32 %v2653, %v2843
        %2845 = vdwg.mxu0
        %2846 = vmatpush.bf16.msra.mxu0 0
        %2847 = vmatpush.bf16.msra.mxu0 0
        %2848 = vmatpush.bf16.msra.mxu0 0
        %2849 = vmatpush.bf16.msra.mxu0 0
        %2850 = vmatpush.bf16.msra.mxu0 0
        %2851 = vmatpush.bf16.msra.mxu0 0
        %2852 = vmatpush.bf16.msra.mxu0 0
        %2853 = vmatpush.bf16.msra.mxu0 %v2749
        %2854 = vmatmul.bf16.gmra.mxu0 %v2760
        %v2855 = vpop.f32.mrf.mxu0
        %v2856 = vadd.f32 %v2665, %v2855
        %v2857 = vpop.f32.mrf.mxu0
        %v2858 = vadd.f32 %v2667, %v2857
        %2859 = vdwg.mxu0
        %2860 = vmatpush.bf16.msra.mxu0 0
        %2861 = vmatpush.bf16.msra.mxu0 0
        %2862 = vmatpush.bf16.msra.mxu0 0
        %2863 = vmatpush.bf16.msra.mxu0 0
        %2864 = vmatpush.bf16.msra.mxu0 0
        %2865 = vmatpush.bf16.msra.mxu0 0
        %2866 = vmatpush.bf16.msra.mxu0 0
        %2867 = vmatpush.bf16.msra.mxu0 %v2750
        %2868 = vmatmul.bf16.gmra.mxu0 %v2760
        %v2869 = vpop.f32.mrf.mxu0
        %v2870 = vadd.f32 %v2679, %v2869
        %v2871 = vpop.f32.mrf.mxu0
        %v2872 = vadd.f32 %v2681, %v2871
        %2873 = vdwg.mxu0
        %v2874 = vld [vmem:[%s6 + $0x30] sm:$0xf]
        %v2875 = vld [vmem:[%s6 + $0x34] sm:$0xf]
        %v2878 = vunpack.c.l.b16 %v2874
        %v2879 = vunpack.c.l.b16 %v2875
        %v2880 = vpack.c.b16 %v2879, %v2878
        %2881 = vrot.lane.b32.xlu0 %v2524, 65
        %v2882 = vpop.permute.xlu0 %2881
        %2883 = vrot.lane.b32.xlu0 %v2525, 65
        %v2884 = vpop.permute.xlu0 %2883
        %2885 = vrot.lane.b32.xlu0 %v2526, 65
        %v2886 = vpop.permute.xlu0 %2885
        %2887 = vrot.lane.b32.xlu0 %v2527, 65
        %v2888 = vpop.permute.xlu0 %2887
        %2889 = vrot.lane.b32.xlu0 %v2528, 65
        %v2890 = vpop.permute.xlu0 %2889
        %2891 = vrot.lane.b32.xlu0 %v2529, 65
        %v2892 = vpop.permute.xlu0 %2891
        %2893 = vrot.lane.b32.xlu0 %v2530, 65
        %v2894 = vpop.permute.xlu0 %2893
        %2895 = vrot.lane.b32.xlu0 %v2531, 65
        %v2896 = vpop.permute.xlu0 %2895
        %2897 = vrot.lane.b32.xlu0 %v2532, 65
        %v2898 = vpop.permute.xlu0 %2897
        %v2899 = vsel %vm832, %v2882, %v2884
        %v2900 = vsel %vm832, %v2884, %v2886
        %v2901 = vsel %vm832, %v2886, %v2888
        %v2902 = vsel %vm832, %v2888, %v2890
        %v2903 = vsel %vm832, %v2890, %v2892
        %v2904 = vsel %vm832, %v2892, %v2894
        %v2905 = vsel %vm832, %v2894, %v2896
        %v2906 = vsel %vm832, %v2896, %v2898
        %v2916 = vsel %vm674, %v2880, 0
        %2918 = vmatpush.bf16.msra.mxu0 0
        %2919 = vmatpush.bf16.msra.mxu0 0
        %2920 = vmatpush.bf16.msra.mxu0 0
        %2921 = vmatpush.bf16.msra.mxu0 0
        %2922 = vmatpush.bf16.msra.mxu0 0
        %2923 = vmatpush.bf16.msra.mxu0 0
        %2924 = vmatpush.bf16.msra.mxu0 0
        %2925 = vmatpush.bf16.msra.mxu0 %v2899
        %2926 = vmatmul.bf16.gmra.mxu0 %v2916
        %v2927 = vpop.f32.mrf.mxu0
        %v2928 = vadd.f32 0.0, %v2927
        %v2929 = vpop.f32.mrf.mxu0
        %v2930 = vadd.f32 0.0, %v2929
        %2931 = vdwg.mxu0
        %2932 = vmatpush.bf16.msra.mxu0 0
        %2933 = vmatpush.bf16.msra.mxu0 0
        %2934 = vmatpush.bf16.msra.mxu0 0
        %2935 = vmatpush.bf16.msra.mxu0 0
        %2936 = vmatpush.bf16.msra.mxu0 0
        %2937 = vmatpush.bf16.msra.mxu0 0
        %2938 = vmatpush.bf16.msra.mxu0 0
        %2939 = vmatpush.bf16.msra.mxu0 %v2900
        %2940 = vmatmul.bf16.gmra.mxu0 %v2916
        %v2941 = vpop.f32.mrf.mxu0
        %v2942 = vadd.f32 0.0, %v2941
        %v2943 = vpop.f32.mrf.mxu0
        %v2944 = vadd.f32 0.0, %v2943
        %2945 = vdwg.mxu0
        %2946 = vmatpush.bf16.msra.mxu0 0
        %2947 = vmatpush.bf16.msra.mxu0 0
        %2948 = vmatpush.bf16.msra.mxu0 0
        %2949 = vmatpush.bf16.msra.mxu0 0
        %2950 = vmatpush.bf16.msra.mxu0 0
        %2951 = vmatpush.bf16.msra.mxu0 0
        %2952 = vmatpush.bf16.msra.mxu0 0
        %2953 = vmatpush.bf16.msra.mxu0 %v2901
        %2954 = vmatmul.bf16.gmra.mxu0 %v2916
        %v2955 = vpop.f32.mrf.mxu0
        %v2956 = vadd.f32 0.0, %v2955
        %v2957 = vpop.f32.mrf.mxu0
        %v2958 = vadd.f32 0.0, %v2957
        %2959 = vdwg.mxu0
        %2960 = vmatpush.bf16.msra.mxu0 0
        %2961 = vmatpush.bf16.msra.mxu0 0
        %2962 = vmatpush.bf16.msra.mxu0 0
        %2963 = vmatpush.bf16.msra.mxu0 0
        %2964 = vmatpush.bf16.msra.mxu0 0
        %2965 = vmatpush.bf16.msra.mxu0 0
        %2966 = vmatpush.bf16.msra.mxu0 0
        %2967 = vmatpush.bf16.msra.mxu0 %v2902
        %2968 = vmatmul.bf16.gmra.mxu0 %v2916
        %v2969 = vpop.f32.mrf.mxu0
        %v2970 = vadd.f32 0.0, %v2969
        %v2971 = vpop.f32.mrf.mxu0
        %v2972 = vadd.f32 0.0, %v2971
        %2973 = vdwg.mxu0
        %2974 = vmatpush.bf16.msra.mxu0 0
        %2975 = vmatpush.bf16.msra.mxu0 0
        %2976 = vmatpush.bf16.msra.mxu0 0
        %2977 = vmatpush.bf16.msra.mxu0 0
        %2978 = vmatpush.bf16.msra.mxu0 0
        %2979 = vmatpush.bf16.msra.mxu0 0
        %2980 = vmatpush.bf16.msra.mxu0 0
        %2981 = vmatpush.bf16.msra.mxu0 %v2903
        %2982 = vmatmul.bf16.gmra.mxu0 %v2916
        %v2983 = vpop.f32.mrf.mxu0
        %v2984 = vadd.f32 0.0, %v2983
        %v2985 = vpop.f32.mrf.mxu0
        %v2986 = vadd.f32 0.0, %v2985
        %2987 = vdwg.mxu0
        %2988 = vmatpush.bf16.msra.mxu0 0
        %2989 = vmatpush.bf16.msra.mxu0 0
        %2990 = vmatpush.bf16.msra.mxu0 0
        %2991 = vmatpush.bf16.msra.mxu0 0
        %2992 = vmatpush.bf16.msra.mxu0 0
        %2993 = vmatpush.bf16.msra.mxu0 0
        %2994 = vmatpush.bf16.msra.mxu0 0
        %2995 = vmatpush.bf16.msra.mxu0 %v2904
        %2996 = vmatmul.bf16.gmra.mxu0 %v2916
        %v2997 = vpop.f32.mrf.mxu0
        %v2998 = vadd.f32 0.0, %v2997
        %v2999 = vpop.f32.mrf.mxu0
        %v3000 = vadd.f32 0.0, %v2999
        %3001 = vdwg.mxu0
        %3002 = vmatpush.bf16.msra.mxu0 0
        %3003 = vmatpush.bf16.msra.mxu0 0
        %3004 = vmatpush.bf16.msra.mxu0 0
        %3005 = vmatpush.bf16.msra.mxu0 0
        %3006 = vmatpush.bf16.msra.mxu0 0
        %3007 = vmatpush.bf16.msra.mxu0 0
        %3008 = vmatpush.bf16.msra.mxu0 0
        %3009 = vmatpush.bf16.msra.mxu0 %v2905
        %3010 = vmatmul.bf16.gmra.mxu0 %v2916
        %v3011 = vpop.f32.mrf.mxu0
        %v3012 = vadd.f32 0.0, %v3011
        %v3013 = vpop.f32.mrf.mxu0
        %v3014 = vadd.f32 0.0, %v3013
        %3015 = vdwg.mxu0
        %3016 = vmatpush.bf16.msra.mxu0 0
        %3017 = vmatpush.bf16.msra.mxu0 0
        %3018 = vmatpush.bf16.msra.mxu0 0
        %3019 = vmatpush.bf16.msra.mxu0 0
        %3020 = vmatpush.bf16.msra.mxu0 0
        %3021 = vmatpush.bf16.msra.mxu0 0
        %3022 = vmatpush.bf16.msra.mxu0 0
        %3023 = vmatpush.bf16.msra.mxu0 %v2906
        %3024 = vmatmul.bf16.gmra.mxu0 %v2916
        %v3025 = vpop.f32.mrf.mxu0
        %v3026 = vadd.f32 0.0, %v3025
        %v3027 = vpop.f32.mrf.mxu0
        %v3028 = vadd.f32 0.0, %v3027
        %3029 = vdwg.mxu0
        %v3030 = vadd.f32 %v2772, %v2928
        %v3031 = vadd.f32 %v2786, %v2942
        %v3032 = vadd.f32 %v2800, %v2956
        %v3033 = vadd.f32 %v2814, %v2970
        %v3034 = vadd.f32 %v2828, %v2984
        %v3035 = vadd.f32 %v2842, %v2998
        %v3036 = vadd.f32 %v2856, %v3012
        %v3037 = vadd.f32 %v2870, %v3026
        %v3038 = vadd.f32 %v2774, %v2930
        %v3039 = vadd.f32 %v2788, %v2944
        %v3040 = vadd.f32 %v2802, %v2958
        %v3041 = vadd.f32 %v2816, %v2972
        %v3042 = vadd.f32 %v2830, %v2986
        %v3043 = vadd.f32 %v2844, %v3000
        %v3044 = vadd.f32 %v2858, %v3014
        %v3045 = vadd.f32 %v2872, %v3028
        %v3046 = vsel %vm2465, 1, 0
        %v3047 = vperm.slane %v3046, 0
        %v3048 = vperm.slane %v3046, 1
        %v3049 = vperm.slane %v3046, 2
        %v3050 = vperm.slane %v3046, 3
        %v3051 = vperm.slane %v3046, 4
        %v3052 = vperm.slane %v3046, 5
        %v3053 = vperm.slane %v3046, 6
        %v3054 = vperm.slane %v3046, 7
        %vm3055 = vcmp.eq.s32.totalorder %v3047, 1
        %vm3056 = vcmp.eq.s32.totalorder %v3048, 1
        %vm3057 = vcmp.eq.s32.totalorder %v3049, 1
        %vm3058 = vcmp.eq.s32.totalorder %v3050, 1
        %vm3059 = vcmp.eq.s32.totalorder %v3051, 1
        %vm3060 = vcmp.eq.s32.totalorder %v3052, 1
        %vm3061 = vcmp.eq.s32.totalorder %v3053, 1
        %vm3062 = vcmp.eq.s32.totalorder %v3054, 1
        %v3063 = vsel %vm3055, %v3030, 0.0
        %v3064 = vsel %vm3056, %v3031, 0.0
        %v3065 = vsel %vm3057, %v3032, 0.0
        %v3066 = vsel %vm3058, %v3033, 0.0
        %v3067 = vsel %vm3059, %v3034, 0.0
        %v3068 = vsel %vm3060, %v3035, 0.0
        %v3069 = vsel %vm3061, %v3036, 0.0
        %v3070 = vsel %vm3062, %v3037, 0.0
        %v3071 = vsel %vm3055, %v3038, 0.0
        %v3072 = vsel %vm3056, %v3039, 0.0
        %v3073 = vsel %vm3057, %v3040, 0.0
        %v3074 = vsel %vm3058, %v3041, 0.0
        %v3075 = vsel %vm3059, %v3042, 0.0
        %v3076 = vsel %vm3060, %v3043, 0.0
        %v3077 = vsel %vm3061, %v3044, 0.0
        %v3078 = vsel %vm3062, %v3045, 0.0
        %v3079 = vld [vmem:[%s6 + $0x8] sm:$0xf]
        %v3080 = vld [vmem:[%s6 + $0xc] sm:$0xf]
        %v3081 = vld [vmem:[#allocation3 + $0x4] sm:$0xff]
        %v3082 = vld [vmem:[#allocation3 + $0xc] sm:$0xff]
        %v3083 = vld [vmem:[#allocation3 + $0x14] sm:$0xff]
        %v3084 = vld [vmem:[#allocation3 + $0x1c] sm:$0xff]
        %v3085 = vld [vmem:[#allocation3 + $0x2c] sm:$0xff]
        %v3086 = vld [vmem:[#allocation3 + $0x34] sm:$0xff]
        %v3087 = vld [vmem:[#allocation3 + $0x3c] sm:$0xff]
        %v3088 = vld [vmem:[#allocation3 + $0x44] sm:$0xff]
        %v3089 = vld [vmem:[%s6 + $0x20] sm:$0xf]
        %v3090 = vld [vmem:[%s6 + $0x24] sm:$0xf]
        %v3093 = vunpack.c.l.b16 %v3089
        %v3094 = vunpack.c.l.b16 %v3090
        %v3095 = vpack.c.b16 %v3094, %v3093
        %3096 = vrot.lane.b32.xlu0 %v2524, 96
        %v3097 = vpop.permute.xlu0 %3096
        %3098 = vrot.lane.b32.xlu0 %v2525, 96
        %v3099 = vpop.permute.xlu0 %3098
        %3100 = vrot.lane.b32.xlu0 %v2526, 96
        %v3101 = vpop.permute.xlu0 %3100
        %3102 = vrot.lane.b32.xlu0 %v2527, 96
        %v3103 = vpop.permute.xlu0 %3102
        %3104 = vrot.lane.b32.xlu0 %v2528, 96
        %v3105 = vpop.permute.xlu0 %3104
        %3106 = vrot.lane.b32.xlu0 %v2529, 96
        %v3107 = vpop.permute.xlu0 %3106
        %3108 = vrot.lane.b32.xlu0 %v2530, 96
        %v3109 = vpop.permute.xlu0 %3108
        %3110 = vrot.lane.b32.xlu0 %v2531, 96
        %v3111 = vpop.permute.xlu0 %3110
        %3112 = vrot.lane.b32.xlu0 %v2532, 96
        %v3113 = vpop.permute.xlu0 %3112
        %vm3114 = vcmask 785408
        %v3115 = vsel %vm3114, %v3097, %v3099
        %v3116 = vsel %vm3114, %v3099, %v3101
        %v3117 = vsel %vm3114, %v3101, %v3103
        %v3118 = vsel %vm3114, %v3103, %v3105
        %v3119 = vsel %vm3114, %v3105, %v3107
        %v3120 = vsel %vm3114, %v3107, %v3109
        %v3121 = vsel %vm3114, %v3109, %v3111
        %v3122 = vsel %vm3114, %v3111, %v3113
        %v3132 = vsel %vm674, %v3095, 0
        %3134 = vmatpush.bf16.msra.mxu0 0
        %3135 = vmatpush.bf16.msra.mxu0 0
        %3136 = vmatpush.bf16.msra.mxu0 0
        %3137 = vmatpush.bf16.msra.mxu0 0
        %3138 = vmatpush.bf16.msra.mxu0 0
        %3139 = vmatpush.bf16.msra.mxu0 0
        %3140 = vmatpush.bf16.msra.mxu0 0
        %3141 = vmatpush.bf16.msra.mxu0 %v3115
        %3142 = vmatmul.bf16.gmra.mxu0 %v3132
        %v3143 = vpop.f32.mrf.mxu0
        %v3144 = vadd.f32 0.0, %v3143
        %v3145 = vpop.f32.mrf.mxu0
        %v3146 = vadd.f32 0.0, %v3145
        %3147 = vdwg.mxu0
        %3148 = vmatpush.bf16.msra.mxu0 0
        %3149 = vmatpush.bf16.msra.mxu0 0
        %3150 = vmatpush.bf16.msra.mxu0 0
        %3151 = vmatpush.bf16.msra.mxu0 0
        %3152 = vmatpush.bf16.msra.mxu0 0
        %3153 = vmatpush.bf16.msra.mxu0 0
        %3154 = vmatpush.bf16.msra.mxu0 0
        %3155 = vmatpush.bf16.msra.mxu0 %v3116
        %3156 = vmatmul.bf16.gmra.mxu0 %v3132
        %v3157 = vpop.f32.mrf.mxu0
        %v3158 = vadd.f32 0.0, %v3157
        %v3159 = vpop.f32.mrf.mxu0
        %v3160 = vadd.f32 0.0, %v3159
        %3161 = vdwg.mxu0
        %3162 = vmatpush.bf16.msra.mxu0 0
        %3163 = vmatpush.bf16.msra.mxu0 0
        %3164 = vmatpush.bf16.msra.mxu0 0
        %3165 = vmatpush.bf16.msra.mxu0 0
        %3166 = vmatpush.bf16.msra.mxu0 0
        %3167 = vmatpush.bf16.msra.mxu0 0
        %3168 = vmatpush.bf16.msra.mxu0 0
        %3169 = vmatpush.bf16.msra.mxu0 %v3117
        %3170 = vmatmul.bf16.gmra.mxu0 %v3132
        %v3171 = vpop.f32.mrf.mxu0
        %v3172 = vadd.f32 0.0, %v3171
        %v3173 = vpop.f32.mrf.mxu0
        %v3174 = vadd.f32 0.0, %v3173
        %3175 = vdwg.mxu0
        %3176 = vmatpush.bf16.msra.mxu0 0
        %3177 = vmatpush.bf16.msra.mxu0 0
        %3178 = vmatpush.bf16.msra.mxu0 0
        %3179 = vmatpush.bf16.msra.mxu0 0
        %3180 = vmatpush.bf16.msra.mxu0 0
        %3181 = vmatpush.bf16.msra.mxu0 0
        %3182 = vmatpush.bf16.msra.mxu0 0
        %3183 = vmatpush.bf16.msra.mxu0 %v3118
        %3184 = vmatmul.bf16.gmra.mxu0 %v3132
        %v3185 = vpop.f32.mrf.mxu0
        %v3186 = vadd.f32 0.0, %v3185
        %v3187 = vpop.f32.mrf.mxu0
        %v3188 = vadd.f32 0.0, %v3187
        %3189 = vdwg.mxu0
        %3190 = vmatpush.bf16.msra.mxu0 0
        %3191 = vmatpush.bf16.msra.mxu0 0
        %3192 = vmatpush.bf16.msra.mxu0 0
        %3193 = vmatpush.bf16.msra.mxu0 0
        %3194 = vmatpush.bf16.msra.mxu0 0
        %3195 = vmatpush.bf16.msra.mxu0 0
        %3196 = vmatpush.bf16.msra.mxu0 0
        %3197 = vmatpush.bf16.msra.mxu0 %v3119
        %3198 = vmatmul.bf16.gmra.mxu0 %v3132
        %v3199 = vpop.f32.mrf.mxu0
        %v3200 = vadd.f32 0.0, %v3199
        %v3201 = vpop.f32.mrf.mxu0
        %v3202 = vadd.f32 0.0, %v3201
        %3203 = vdwg.mxu0
        %3204 = vmatpush.bf16.msra.mxu0 0
        %3205 = vmatpush.bf16.msra.mxu0 0
        %3206 = vmatpush.bf16.msra.mxu0 0
        %3207 = vmatpush.bf16.msra.mxu0 0
        %3208 = vmatpush.bf16.msra.mxu0 0
        %3209 = vmatpush.bf16.msra.mxu0 0
        %3210 = vmatpush.bf16.msra.mxu0 0
        %3211 = vmatpush.bf16.msra.mxu0 %v3120
        %3212 = vmatmul.bf16.gmra.mxu0 %v3132
        %v3213 = vpop.f32.mrf.mxu0
        %v3214 = vadd.f32 0.0, %v3213
        %v3215 = vpop.f32.mrf.mxu0
        %v3216 = vadd.f32 0.0, %v3215
        %3217 = vdwg.mxu0
        %3218 = vmatpush.bf16.msra.mxu0 0
        %3219 = vmatpush.bf16.msra.mxu0 0
        %3220 = vmatpush.bf16.msra.mxu0 0
        %3221 = vmatpush.bf16.msra.mxu0 0
        %3222 = vmatpush.bf16.msra.mxu0 0
        %3223 = vmatpush.bf16.msra.mxu0 0
        %3224 = vmatpush.bf16.msra.mxu0 0
        %3225 = vmatpush.bf16.msra.mxu0 %v3121
        %3226 = vmatmul.bf16.gmra.mxu0 %v3132
        %v3227 = vpop.f32.mrf.mxu0
        %v3228 = vadd.f32 0.0, %v3227
        %v3229 = vpop.f32.mrf.mxu0
        %v3230 = vadd.f32 0.0, %v3229
        %3231 = vdwg.mxu0
        %3232 = vmatpush.bf16.msra.mxu0 0
        %3233 = vmatpush.bf16.msra.mxu0 0
        %3234 = vmatpush.bf16.msra.mxu0 0
        %3235 = vmatpush.bf16.msra.mxu0 0
        %3236 = vmatpush.bf16.msra.mxu0 0
        %3237 = vmatpush.bf16.msra.mxu0 0
        %3238 = vmatpush.bf16.msra.mxu0 0
        %3239 = vmatpush.bf16.msra.mxu0 %v3122
        %3240 = vmatmul.bf16.gmra.mxu0 %v3132
        %v3241 = vpop.f32.mrf.mxu0
        %v3242 = vadd.f32 0.0, %v3241
        %v3243 = vpop.f32.mrf.mxu0
        %v3244 = vadd.f32 0.0, %v3243
        %3245 = vdwg.mxu0
        %v3248 = vunpack.c.l.b16 %v3079
        %v3249 = vunpack.c.l.b16 %v3080
        %v3250 = vpack.c.b16 %v3249, %v3248
        %v3259 = vunpack.c.l.b16 %v3081
        %v3260 = vunpack.c.h.b16 %v3081
        %v3261 = vunpack.c.l.b16 %v3082
        %v3262 = vunpack.c.h.b16 %v3082
        %v3263 = vunpack.c.l.b16 %v3083
        %v3264 = vunpack.c.h.b16 %v3083
        %v3265 = vunpack.c.l.b16 %v3084
        %v3266 = vunpack.c.h.b16 %v3084
        %v3267 = vunpack.c.l.b16 %v3085
        %v3268 = vunpack.c.h.b16 %v3085
        %v3269 = vunpack.c.l.b16 %v3086
        %v3270 = vunpack.c.h.b16 %v3086
        %v3271 = vunpack.c.l.b16 %v3087
        %v3272 = vunpack.c.h.b16 %v3087
        %v3273 = vunpack.c.l.b16 %v3088
        %v3274 = vunpack.c.h.b16 %v3088
        %v3275 = vpack.c.b16 %v3267, %v3259
        %v3276 = vpack.c.b16 %v3268, %v3260
        %v3277 = vpack.c.b16 %v3269, %v3261
        %v3278 = vpack.c.b16 %v3270, %v3262
        %v3279 = vpack.c.b16 %v3271, %v3263
        %v3280 = vpack.c.b16 %v3272, %v3264
        %v3281 = vpack.c.b16 %v3273, %v3265
        %v3282 = vpack.c.b16 %v3274, %v3266
        %v3292 = vsel %vm674, %v3250, 0
        %3294 = vmatpush.bf16.msra.mxu0 0
        %3295 = vmatpush.bf16.msra.mxu0 0
        %3296 = vmatpush.bf16.msra.mxu0 0
        %3297 = vmatpush.bf16.msra.mxu0 0
        %3298 = vmatpush.bf16.msra.mxu0 0
        %3299 = vmatpush.bf16.msra.mxu0 0
        %3300 = vmatpush.bf16.msra.mxu0 0
        %3301 = vmatpush.bf16.msra.mxu0 %v3275
        %3302 = vmatmul.bf16.gmra.mxu0 %v3292
        %v3303 = vpop.f32.mrf.mxu0
        %v3304 = vadd.f32 %v3144, %v3303
        %v3305 = vpop.f32.mrf.mxu0
        %v3306 = vadd.f32 %v3146, %v3305
        %3307 = vdwg.mxu0
        %3308 = vmatpush.bf16.msra.mxu0 0
        %3309 = vmatpush.bf16.msra.mxu0 0
        %3310 = vmatpush.bf16.msra.mxu0 0
        %3311 = vmatpush.bf16.msra.mxu0 0
        %3312 = vmatpush.bf16.msra.mxu0 0
        %3313 = vmatpush.bf16.msra.mxu0 0
        %3314 = vmatpush.bf16.msra.mxu0 0
        %3315 = vmatpush.bf16.msra.mxu0 %v3276
        %3316 = vmatmul.bf16.gmra.mxu0 %v3292
        %v3317 = vpop.f32.mrf.mxu0
        %v3318 = vadd.f32 %v3158, %v3317
        %v3319 = vpop.f32.mrf.mxu0
        %v3320 = vadd.f32 %v3160, %v3319
        %3321 = vdwg.mxu0
        %3322 = vmatpush.bf16.msra.mxu0 0
        %3323 = vmatpush.bf16.msra.mxu0 0
        %3324 = vmatpush.bf16.msra.mxu0 0
        %3325 = vmatpush.bf16.msra.mxu0 0
        %3326 = vmatpush.bf16.msra.mxu0 0
        %3327 = vmatpush.bf16.msra.mxu0 0
        %3328 = vmatpush.bf16.msra.mxu0 0
        %3329 = vmatpush.bf16.msra.mxu0 %v3277
        %3330 = vmatmul.bf16.gmra.mxu0 %v3292
        %v3331 = vpop.f32.mrf.mxu0
        %v3332 = vadd.f32 %v3172, %v3331
        %v3333 = vpop.f32.mrf.mxu0
        %v3334 = vadd.f32 %v3174, %v3333
        %3335 = vdwg.mxu0
        %3336 = vmatpush.bf16.msra.mxu0 0
        %3337 = vmatpush.bf16.msra.mxu0 0
        %3338 = vmatpush.bf16.msra.mxu0 0
        %3339 = vmatpush.bf16.msra.mxu0 0
        %3340 = vmatpush.bf16.msra.mxu0 0
        %3341 = vmatpush.bf16.msra.mxu0 0
        %3342 = vmatpush.bf16.msra.mxu0 0
        %3343 = vmatpush.bf16.msra.mxu0 %v3278
        %3344 = vmatmul.bf16.gmra.mxu0 %v3292
        %v3345 = vpop.f32.mrf.mxu0
        %v3346 = vadd.f32 %v3186, %v3345
        %v3347 = vpop.f32.mrf.mxu0
        %v3348 = vadd.f32 %v3188, %v3347
        %3349 = vdwg.mxu0
        %3350 = vmatpush.bf16.msra.mxu0 0
        %3351 = vmatpush.bf16.msra.mxu0 0
        %3352 = vmatpush.bf16.msra.mxu0 0
        %3353 = vmatpush.bf16.msra.mxu0 0
        %3354 = vmatpush.bf16.msra.mxu0 0
        %3355 = vmatpush.bf16.msra.mxu0 0
        %3356 = vmatpush.bf16.msra.mxu0 0
        %3357 = vmatpush.bf16.msra.mxu0 %v3279
        %3358 = vmatmul.bf16.gmra.mxu0 %v3292
        %v3359 = vpop.f32.mrf.mxu0
        %v3360 = vadd.f32 %v3200, %v3359
        %v3361 = vpop.f32.mrf.mxu0
        %v3362 = vadd.f32 %v3202, %v3361
        %3363 = vdwg.mxu0
        %3364 = vmatpush.bf16.msra.mxu0 0
        %3365 = vmatpush.bf16.msra.mxu0 0
        %3366 = vmatpush.bf16.msra.mxu0 0
        %3367 = vmatpush.bf16.msra.mxu0 0
        %3368 = vmatpush.bf16.msra.mxu0 0
        %3369 = vmatpush.bf16.msra.mxu0 0
        %3370 = vmatpush.bf16.msra.mxu0 0
        %3371 = vmatpush.bf16.msra.mxu0 %v3280
        %3372 = vmatmul.bf16.gmra.mxu0 %v3292
        %v3373 = vpop.f32.mrf.mxu0
        %v3374 = vadd.f32 %v3214, %v3373
        %v3375 = vpop.f32.mrf.mxu0
        %v3376 = vadd.f32 %v3216, %v3375
        %3377 = vdwg.mxu0
        %3378 = vmatpush.bf16.msra.mxu0 0
        %3379 = vmatpush.bf16.msra.mxu0 0
        %3380 = vmatpush.bf16.msra.mxu0 0
        %3381 = vmatpush.bf16.msra.mxu0 0
        %3382 = vmatpush.bf16.msra.mxu0 0
        %3383 = vmatpush.bf16.msra.mxu0 0
        %3384 = vmatpush.bf16.msra.mxu0 0
        %3385 = vmatpush.bf16.msra.mxu0 %v3281
        %3386 = vmatmul.bf16.gmra.mxu0 %v3292
        %v3387 = vpop.f32.mrf.mxu0
        %v3388 = vadd.f32 %v3228, %v3387
        %v3389 = vpop.f32.mrf.mxu0
        %v3390 = vadd.f32 %v3230, %v3389
        %3391 = vdwg.mxu0
        %3392 = vmatpush.bf16.msra.mxu0 0
        %3393 = vmatpush.bf16.msra.mxu0 0
        %3394 = vmatpush.bf16.msra.mxu0 0
        %3395 = vmatpush.bf16.msra.mxu0 0
        %3396 = vmatpush.bf16.msra.mxu0 0
        %3397 = vmatpush.bf16.msra.mxu0 0
        %3398 = vmatpush.bf16.msra.mxu0 0
        %3399 = vmatpush.bf16.msra.mxu0 %v3282
        %3400 = vmatmul.bf16.gmra.mxu0 %v3292
        %v3401 = vpop.f32.mrf.mxu0
        %v3402 = vadd.f32 %v3242, %v3401
        %v3403 = vpop.f32.mrf.mxu0
        %v3404 = vadd.f32 %v3244, %v3403
        %3405 = vdwg.mxu0
        %v3406 = vld [vmem:[%s6 + $0x38] sm:$0xf]
        %v3407 = vld [vmem:[%s6 + $0x3c] sm:$0xf]
        %v3410 = vunpack.c.l.b16 %v3406
        %v3411 = vunpack.c.l.b16 %v3407
        %v3412 = vpack.c.b16 %v3411, %v3410
        %3413 = vrot.lane.b32.xlu0 %v2524, 64
        %v3414 = vpop.permute.xlu0 %3413
        %3415 = vrot.lane.b32.xlu0 %v2525, 64
        %v3416 = vpop.permute.xlu0 %3415
        %3417 = vrot.lane.b32.xlu0 %v2526, 64
        %v3418 = vpop.permute.xlu0 %3417
        %3419 = vrot.lane.b32.xlu0 %v2527, 64
        %v3420 = vpop.permute.xlu0 %3419
        %3421 = vrot.lane.b32.xlu0 %v2528, 64
        %v3422 = vpop.permute.xlu0 %3421
        %3423 = vrot.lane.b32.xlu0 %v2529, 64
        %v3424 = vpop.permute.xlu0 %3423
        %3425 = vrot.lane.b32.xlu0 %v2530, 64
        %v3426 = vpop.permute.xlu0 %3425
        %3427 = vrot.lane.b32.xlu0 %v2531, 64
        %v3428 = vpop.permute.xlu0 %3427
        %3429 = vrot.lane.b32.xlu0 %v2532, 64
        %v3430 = vpop.permute.xlu0 %3429
        %v3431 = vsel %vm1410, %v3414, %v3416
        %v3432 = vsel %vm1410, %v3416, %v3418
        %v3433 = vsel %vm1410, %v3418, %v3420
        %v3434 = vsel %vm1410, %v3420, %v3422
        %v3435 = vsel %vm1410, %v3422, %v3424
        %v3436 = vsel %vm1410, %v3424, %v3426
        %v3437 = vsel %vm1410, %v3426, %v3428
        %v3438 = vsel %vm1410, %v3428, %v3430
        %v3448 = vsel %vm674, %v3412, 0
        %3450 = vmatpush.bf16.msra.mxu0 0
        %3451 = vmatpush.bf16.msra.mxu0 0
        %3452 = vmatpush.bf16.msra.mxu0 0
        %3453 = vmatpush.bf16.msra.mxu0 0
        %3454 = vmatpush.bf16.msra.mxu0 0
        %3455 = vmatpush.bf16.msra.mxu0 0
        %3456 = vmatpush.bf16.msra.mxu0 0
        %3457 = vmatpush.bf16.msra.mxu0 %v3431
        %3458 = vmatmul.bf16.gmra.mxu0 %v3448
        %v3459 = vpop.f32.mrf.mxu0
        %v3460 = vadd.f32 0.0, %v3459
        %v3461 = vpop.f32.mrf.mxu0
        %v3462 = vadd.f32 0.0, %v3461
        %3463 = vdwg.mxu0
        %3464 = vmatpush.bf16.msra.mxu0 0
        %3465 = vmatpush.bf16.msra.mxu0 0
        %3466 = vmatpush.bf16.msra.mxu0 0
        %3467 = vmatpush.bf16.msra.mxu0 0
        %3468 = vmatpush.bf16.msra.mxu0 0
        %3469 = vmatpush.bf16.msra.mxu0 0
        %3470 = vmatpush.bf16.msra.mxu0 0
        %3471 = vmatpush.bf16.msra.mxu0 %v3432
        %3472 = vmatmul.bf16.gmra.mxu0 %v3448
        %v3473 = vpop.f32.mrf.mxu0
        %v3474 = vadd.f32 0.0, %v3473
        %v3475 = vpop.f32.mrf.mxu0
        %v3476 = vadd.f32 0.0, %v3475
        %3477 = vdwg.mxu0
        %3478 = vmatpush.bf16.msra.mxu0 0
        %3479 = vmatpush.bf16.msra.mxu0 0
        %3480 = vmatpush.bf16.msra.mxu0 0
        %3481 = vmatpush.bf16.msra.mxu0 0
        %3482 = vmatpush.bf16.msra.mxu0 0
        %3483 = vmatpush.bf16.msra.mxu0 0
        %3484 = vmatpush.bf16.msra.mxu0 0
        %3485 = vmatpush.bf16.msra.mxu0 %v3433
        %3486 = vmatmul.bf16.gmra.mxu0 %v3448
        %v3487 = vpop.f32.mrf.mxu0
        %v3488 = vadd.f32 0.0, %v3487
        %v3489 = vpop.f32.mrf.mxu0
        %v3490 = vadd.f32 0.0, %v3489
        %3491 = vdwg.mxu0
        %3492 = vmatpush.bf16.msra.mxu0 0
        %3493 = vmatpush.bf16.msra.mxu0 0
        %3494 = vmatpush.bf16.msra.mxu0 0
        %3495 = vmatpush.bf16.msra.mxu0 0
        %3496 = vmatpush.bf16.msra.mxu0 0
        %3497 = vmatpush.bf16.msra.mxu0 0
        %3498 = vmatpush.bf16.msra.mxu0 0
        %3499 = vmatpush.bf16.msra.mxu0 %v3434
        %3500 = vmatmul.bf16.gmra.mxu0 %v3448
        %v3501 = vpop.f32.mrf.mxu0
        %v3502 = vadd.f32 0.0, %v3501
        %v3503 = vpop.f32.mrf.mxu0
        %v3504 = vadd.f32 0.0, %v3503
        %3505 = vdwg.mxu0
        %3506 = vmatpush.bf16.msra.mxu0 0
        %3507 = vmatpush.bf16.msra.mxu0 0
        %3508 = vmatpush.bf16.msra.mxu0 0
        %3509 = vmatpush.bf16.msra.mxu0 0
        %3510 = vmatpush.bf16.msra.mxu0 0
        %3511 = vmatpush.bf16.msra.mxu0 0
        %3512 = vmatpush.bf16.msra.mxu0 0
        %3513 = vmatpush.bf16.msra.mxu0 %v3435
        %3514 = vmatmul.bf16.gmra.mxu0 %v3448
        %v3515 = vpop.f32.mrf.mxu0
        %v3516 = vadd.f32 0.0, %v3515
        %v3517 = vpop.f32.mrf.mxu0
        %v3518 = vadd.f32 0.0, %v3517
        %3519 = vdwg.mxu0
        %3520 = vmatpush.bf16.msra.mxu0 0
        %3521 = vmatpush.bf16.msra.mxu0 0
        %3522 = vmatpush.bf16.msra.mxu0 0
        %3523 = vmatpush.bf16.msra.mxu0 0
        %3524 = vmatpush.bf16.msra.mxu0 0
        %3525 = vmatpush.bf16.msra.mxu0 0
        %3526 = vmatpush.bf16.msra.mxu0 0
        %3527 = vmatpush.bf16.msra.mxu0 %v3436
        %3528 = vmatmul.bf16.gmra.mxu0 %v3448
        %v3529 = vpop.f32.mrf.mxu0
        %v3530 = vadd.f32 0.0, %v3529
        %v3531 = vpop.f32.mrf.mxu0
        %v3532 = vadd.f32 0.0, %v3531
        %3533 = vdwg.mxu0
        %3534 = vmatpush.bf16.msra.mxu0 0
        %3535 = vmatpush.bf16.msra.mxu0 0
        %3536 = vmatpush.bf16.msra.mxu0 0
        %3537 = vmatpush.bf16.msra.mxu0 0
        %3538 = vmatpush.bf16.msra.mxu0 0
        %3539 = vmatpush.bf16.msra.mxu0 0
        %3540 = vmatpush.bf16.msra.mxu0 0
        %3541 = vmatpush.bf16.msra.mxu0 %v3437
        %3542 = vmatmul.bf16.gmra.mxu0 %v3448
        %v3543 = vpop.f32.mrf.mxu0
        %v3544 = vadd.f32 0.0, %v3543
        %v3545 = vpop.f32.mrf.mxu0
        %v3546 = vadd.f32 0.0, %v3545
        %3547 = vdwg.mxu0
        %3548 = vmatpush.bf16.msra.mxu0 0
        %3549 = vmatpush.bf16.msra.mxu0 0
        %3550 = vmatpush.bf16.msra.mxu0 0
        %3551 = vmatpush.bf16.msra.mxu0 0
        %3552 = vmatpush.bf16.msra.mxu0 0
        %3553 = vmatpush.bf16.msra.mxu0 0
        %3554 = vmatpush.bf16.msra.mxu0 0
        %3555 = vmatpush.bf16.msra.mxu0 %v3438
        %3556 = vmatmul.bf16.gmra.mxu0 %v3448
        %v3557 = vpop.f32.mrf.mxu0
        %v3558 = vadd.f32 0.0, %v3557
        %v3559 = vpop.f32.mrf.mxu0
        %v3560 = vadd.f32 0.0, %v3559
        %3561 = vdwg.mxu0
        %v3562 = vadd.f32 %v3304, %v3460
        %v3563 = vadd.f32 %v3318, %v3474
        %v3564 = vadd.f32 %v3332, %v3488
        %v3565 = vadd.f32 %v3346, %v3502
        %v3566 = vadd.f32 %v3360, %v3516
        %v3567 = vadd.f32 %v3374, %v3530
        %v3568 = vadd.f32 %v3388, %v3544
        %v3569 = vadd.f32 %v3402, %v3558
        %v3570 = vadd.f32 %v3306, %v3462
        %v3571 = vadd.f32 %v3320, %v3476
        %v3572 = vadd.f32 %v3334, %v3490
        %v3573 = vadd.f32 %v3348, %v3504
        %v3574 = vadd.f32 %v3362, %v3518
        %v3575 = vadd.f32 %v3376, %v3532
        %v3576 = vadd.f32 %v3390, %v3546
        %v3577 = vadd.f32 %v3404, %v3560
        %v3578 = vadd.f32 %v3063, %v3562
        %v3579 = vadd.f32 %v3064, %v3563
        %v3580 = vadd.f32 %v3065, %v3564
        %v3581 = vadd.f32 %v3066, %v3565
        %v3582 = vadd.f32 %v3067, %v3566
        %v3583 = vadd.f32 %v3068, %v3567
        %v3584 = vadd.f32 %v3069, %v3568
        %v3585 = vadd.f32 %v3070, %v3569
        %v3586 = vadd.f32 %v3071, %v3570
        %v3587 = vadd.f32 %v3072, %v3571
        %v3588 = vadd.f32 %v3073, %v3572
        %v3589 = vadd.f32 %v3074, %v3573
        %v3590 = vadd.f32 %v3075, %v3574
        %v3591 = vadd.f32 %v3076, %v3575
        %v3592 = vadd.f32 %v3077, %v3576
        %v3593 = vadd.f32 %v3078, %v3577
        %v3594 = vld [vmem:[%s6 + $0x10] sm:$0xf]
        %v3595 = vld [vmem:[%s6 + $0x14] sm:$0xf]
        %v3596 = vld [vmem:[%s6 + $0x28] sm:$0xf]
        %v3597 = vld [vmem:[%s6 + $0x2c] sm:$0xf]
        %v3600 = vunpack.c.l.b16 %v3596
        %v3601 = vunpack.c.l.b16 %v3597
        %v3602 = vpack.c.b16 %v3601, %v3600
        %3603 = vrot.lane.b32.xlu0 %v2524, 95
        %v3604 = vpop.permute.xlu0 %3603
        %3605 = vrot.lane.b32.xlu0 %v2525, 95
        %v3606 = vpop.permute.xlu0 %3605
        %3607 = vrot.lane.b32.xlu0 %v2526, 95
        %v3608 = vpop.permute.xlu0 %3607
        %3609 = vrot.lane.b32.xlu0 %v2527, 95
        %v3610 = vpop.permute.xlu0 %3609
        %3611 = vrot.lane.b32.xlu0 %v2528, 95
        %v3612 = vpop.permute.xlu0 %3611
        %3613 = vrot.lane.b32.xlu0 %v2529, 95
        %v3614 = vpop.permute.xlu0 %3613
        %3615 = vrot.lane.b32.xlu0 %v2530, 95
        %v3616 = vpop.permute.xlu0 %3615
        %3617 = vrot.lane.b32.xlu0 %v2531, 95
        %v3618 = vpop.permute.xlu0 %3617
        %3619 = vrot.lane.b32.xlu0 %v2532, 95
        %v3620 = vpop.permute.xlu0 %3619
        %vm3621 = vcmask 777216
        %v3622 = vsel %vm3621, %v3604, %v3606
        %v3623 = vsel %vm3621, %v3606, %v3608
        %v3624 = vsel %vm3621, %v3608, %v3610
        %v3625 = vsel %vm3621, %v3610, %v3612
        %v3626 = vsel %vm3621, %v3612, %v3614
        %v3627 = vsel %vm3621, %v3614, %v3616
        %v3628 = vsel %vm3621, %v3616, %v3618
        %v3629 = vsel %vm3621, %v3618, %v3620
        %v3639 = vsel %vm674, %v3602, 0
        %3641 = vmatpush.bf16.msra.mxu0 0
        %3642 = vmatpush.bf16.msra.mxu0 0
        %3643 = vmatpush.bf16.msra.mxu0 0
        %3644 = vmatpush.bf16.msra.mxu0 0
        %3645 = vmatpush.bf16.msra.mxu0 0
        %3646 = vmatpush.bf16.msra.mxu0 0
        %3647 = vmatpush.bf16.msra.mxu0 0
        %3648 = vmatpush.bf16.msra.mxu0 %v3622
        %3649 = vmatmul.bf16.gmra.mxu0 %v3639
        %v3650 = vpop.f32.mrf.mxu0
        %v3651 = vadd.f32 0.0, %v3650
        %v3652 = vpop.f32.mrf.mxu0
        %v3653 = vadd.f32 0.0, %v3652
        %3654 = vdwg.mxu0
        %3655 = vmatpush.bf16.msra.mxu0 0
        %3656 = vmatpush.bf16.msra.mxu0 0
        %3657 = vmatpush.bf16.msra.mxu0 0
        %3658 = vmatpush.bf16.msra.mxu0 0
        %3659 = vmatpush.bf16.msra.mxu0 0
        %3660 = vmatpush.bf16.msra.mxu0 0
        %3661 = vmatpush.bf16.msra.mxu0 0
        %3662 = vmatpush.bf16.msra.mxu0 %v3623
        %3663 = vmatmul.bf16.gmra.mxu0 %v3639
        %v3664 = vpop.f32.mrf.mxu0
        %v3665 = vadd.f32 0.0, %v3664
        %v3666 = vpop.f32.mrf.mxu0
        %v3667 = vadd.f32 0.0, %v3666
        %3668 = vdwg.mxu0
        %3669 = vmatpush.bf16.msra.mxu0 0
        %3670 = vmatpush.bf16.msra.mxu0 0
        %3671 = vmatpush.bf16.msra.mxu0 0
        %3672 = vmatpush.bf16.msra.mxu0 0
        %3673 = vmatpush.bf16.msra.mxu0 0
        %3674 = vmatpush.bf16.msra.mxu0 0
        %3675 = vmatpush.bf16.msra.mxu0 0
        %3676 = vmatpush.bf16.msra.mxu0 %v3624
        %3677 = vmatmul.bf16.gmra.mxu0 %v3639
        %v3678 = vpop.f32.mrf.mxu0
        %v3679 = vadd.f32 0.0, %v3678
        %v3680 = vpop.f32.mrf.mxu0
        %v3681 = vadd.f32 0.0, %v3680
        %3682 = vdwg.mxu0
        %3683 = vmatpush.bf16.msra.mxu0 0
        %3684 = vmatpush.bf16.msra.mxu0 0
        %3685 = vmatpush.bf16.msra.mxu0 0
        %3686 = vmatpush.bf16.msra.mxu0 0
        %3687 = vmatpush.bf16.msra.mxu0 0
        %3688 = vmatpush.bf16.msra.mxu0 0
        %3689 = vmatpush.bf16.msra.mxu0 0
        %3690 = vmatpush.bf16.msra.mxu0 %v3625
        %3691 = vmatmul.bf16.gmra.mxu0 %v3639
        %v3692 = vpop.f32.mrf.mxu0
        %v3693 = vadd.f32 0.0, %v3692
        %v3694 = vpop.f32.mrf.mxu0
        %v3695 = vadd.f32 0.0, %v3694
        %3696 = vdwg.mxu0
        %3697 = vmatpush.bf16.msra.mxu0 0
        %3698 = vmatpush.bf16.msra.mxu0 0
        %3699 = vmatpush.bf16.msra.mxu0 0
        %3700 = vmatpush.bf16.msra.mxu0 0
        %3701 = vmatpush.bf16.msra.mxu0 0
        %3702 = vmatpush.bf16.msra.mxu0 0
        %3703 = vmatpush.bf16.msra.mxu0 0
        %3704 = vmatpush.bf16.msra.mxu0 %v3626
        %3705 = vmatmul.bf16.gmra.mxu0 %v3639
        %v3706 = vpop.f32.mrf.mxu0
        %v3707 = vadd.f32 0.0, %v3706
        %v3708 = vpop.f32.mrf.mxu0
        %v3709 = vadd.f32 0.0, %v3708
        %3710 = vdwg.mxu0
        %3711 = vmatpush.bf16.msra.mxu0 0
        %3712 = vmatpush.bf16.msra.mxu0 0
        %3713 = vmatpush.bf16.msra.mxu0 0
        %3714 = vmatpush.bf16.msra.mxu0 0
        %3715 = vmatpush.bf16.msra.mxu0 0
        %3716 = vmatpush.bf16.msra.mxu0 0
        %3717 = vmatpush.bf16.msra.mxu0 0
        %3718 = vmatpush.bf16.msra.mxu0 %v3627
        %3719 = vmatmul.bf16.gmra.mxu0 %v3639
        %v3720 = vpop.f32.mrf.mxu0
        %v3721 = vadd.f32 0.0, %v3720
        %v3722 = vpop.f32.mrf.mxu0
        %v3723 = vadd.f32 0.0, %v3722
        %3724 = vdwg.mxu0
        %3725 = vmatpush.bf16.msra.mxu0 0
        %3726 = vmatpush.bf16.msra.mxu0 0
        %3727 = vmatpush.bf16.msra.mxu0 0
        %3728 = vmatpush.bf16.msra.mxu0 0
        %3729 = vmatpush.bf16.msra.mxu0 0
        %3730 = vmatpush.bf16.msra.mxu0 0
        %3731 = vmatpush.bf16.msra.mxu0 0
        %3732 = vmatpush.bf16.msra.mxu0 %v3628
        %3733 = vmatmul.bf16.gmra.mxu0 %v3639
        %v3734 = vpop.f32.mrf.mxu0
        %v3735 = vadd.f32 0.0, %v3734
        %v3736 = vpop.f32.mrf.mxu0
        %v3737 = vadd.f32 0.0, %v3736
        %3738 = vdwg.mxu0
        %3739 = vmatpush.bf16.msra.mxu0 0
        %3740 = vmatpush.bf16.msra.mxu0 0
        %3741 = vmatpush.bf16.msra.mxu0 0
        %3742 = vmatpush.bf16.msra.mxu0 0
        %3743 = vmatpush.bf16.msra.mxu0 0
        %3744 = vmatpush.bf16.msra.mxu0 0
        %3745 = vmatpush.bf16.msra.mxu0 0
        %3746 = vmatpush.bf16.msra.mxu0 %v3629
        %3747 = vmatmul.bf16.gmra.mxu0 %v3639
        %v3748 = vpop.f32.mrf.mxu0
        %v3749 = vadd.f32 0.0, %v3748
        %v3750 = vpop.f32.mrf.mxu0
        %v3751 = vadd.f32 0.0, %v3750
        %3752 = vdwg.mxu0
        %v3755 = vunpack.c.l.b16 %v3594
        %v3756 = vunpack.c.l.b16 %v3595
        %v3757 = vpack.c.b16 %v3756, %v3755
        %3758 = vrot.lane.b32.xlu0 %v2524, 127
        %v3759 = vpop.permute.xlu0 %3758
        %3760 = vrot.lane.b32.xlu0 %v2525, 127
        %v3761 = vpop.permute.xlu0 %3760
        %3762 = vrot.lane.b32.xlu0 %v2526, 127
        %v3763 = vpop.permute.xlu0 %3762
        %3764 = vrot.lane.b32.xlu0 %v2527, 127
        %v3765 = vpop.permute.xlu0 %3764
        %3766 = vrot.lane.b32.xlu0 %v2528, 127
        %v3767 = vpop.permute.xlu0 %3766
        %3768 = vrot.lane.b32.xlu0 %v2529, 127
        %v3769 = vpop.permute.xlu0 %3768
        %3770 = vrot.lane.b32.xlu0 %v2530, 127
        %v3771 = vpop.permute.xlu0 %3770
        %3772 = vrot.lane.b32.xlu0 %v2531, 127
        %v3773 = vpop.permute.xlu0 %3772
        %3774 = vrot.lane.b32.xlu0 %v2532, 127
        %v3775 = vpop.permute.xlu0 %3774
        %v3776 = vsel %vm2160, %v3759, %v3761
        %v3777 = vsel %vm2160, %v3761, %v3763
        %v3778 = vsel %vm2160, %v3763, %v3765
        %v3779 = vsel %vm2160, %v3765, %v3767
        %v3780 = vsel %vm2160, %v3767, %v3769
        %v3781 = vsel %vm2160, %v3769, %v3771
        %v3782 = vsel %vm2160, %v3771, %v3773
        %v3783 = vsel %vm2160, %v3773, %v3775
        %v3793 = vsel %vm674, %v3757, 0
        %3795 = vmatpush.bf16.msra.mxu0 0
        %3796 = vmatpush.bf16.msra.mxu0 0
        %3797 = vmatpush.bf16.msra.mxu0 0
        %3798 = vmatpush.bf16.msra.mxu0 0
        %3799 = vmatpush.bf16.msra.mxu0 0
        %3800 = vmatpush.bf16.msra.mxu0 0
        %3801 = vmatpush.bf16.msra.mxu0 0
        %3802 = vmatpush.bf16.msra.mxu0 %v3776
        %3803 = vmatmul.bf16.gmra.mxu0 %v3793
        %v3804 = vpop.f32.mrf.mxu0
        %v3805 = vadd.f32 %v3651, %v3804
        %v3806 = vpop.f32.mrf.mxu0
        %v3807 = vadd.f32 %v3653, %v3806
        %3808 = vdwg.mxu0
        %3809 = vmatpush.bf16.msra.mxu0 0
        %3810 = vmatpush.bf16.msra.mxu0 0
        %3811 = vmatpush.bf16.msra.mxu0 0
        %3812 = vmatpush.bf16.msra.mxu0 0
        %3813 = vmatpush.bf16.msra.mxu0 0
        %3814 = vmatpush.bf16.msra.mxu0 0
        %3815 = vmatpush.bf16.msra.mxu0 0
        %3816 = vmatpush.bf16.msra.mxu0 %v3777
        %3817 = vmatmul.bf16.gmra.mxu0 %v3793
        %v3818 = vpop.f32.mrf.mxu0
        %v3819 = vadd.f32 %v3665, %v3818
        %v3820 = vpop.f32.mrf.mxu0
        %v3821 = vadd.f32 %v3667, %v3820
        %3822 = vdwg.mxu0
        %3823 = vmatpush.bf16.msra.mxu0 0
        %3824 = vmatpush.bf16.msra.mxu0 0
        %3825 = vmatpush.bf16.msra.mxu0 0
        %3826 = vmatpush.bf16.msra.mxu0 0
        %3827 = vmatpush.bf16.msra.mxu0 0
        %3828 = vmatpush.bf16.msra.mxu0 0
        %3829 = vmatpush.bf16.msra.mxu0 0
        %3830 = vmatpush.bf16.msra.mxu0 %v3778
        %3831 = vmatmul.bf16.gmra.mxu0 %v3793
        %v3832 = vpop.f32.mrf.mxu0
        %v3833 = vadd.f32 %v3679, %v3832
        %v3834 = vpop.f32.mrf.mxu0
        %v3835 = vadd.f32 %v3681, %v3834
        %3836 = vdwg.mxu0
        %3837 = vmatpush.bf16.msra.mxu0 0
        %3838 = vmatpush.bf16.msra.mxu0 0
        %3839 = vmatpush.bf16.msra.mxu0 0
        %3840 = vmatpush.bf16.msra.mxu0 0
        %3841 = vmatpush.bf16.msra.mxu0 0
        %3842 = vmatpush.bf16.msra.mxu0 0
        %3843 = vmatpush.bf16.msra.mxu0 0
        %3844 = vmatpush.bf16.msra.mxu0 %v3779
        %3845 = vmatmul.bf16.gmra.mxu0 %v3793
        %v3846 = vpop.f32.mrf.mxu0
        %v3847 = vadd.f32 %v3693, %v3846
        %v3848 = vpop.f32.mrf.mxu0
        %v3849 = vadd.f32 %v3695, %v3848
        %3850 = vdwg.mxu0
        %3851 = vmatpush.bf16.msra.mxu0 0
        %3852 = vmatpush.bf16.msra.mxu0 0
        %3853 = vmatpush.bf16.msra.mxu0 0
        %3854 = vmatpush.bf16.msra.mxu0 0
        %3855 = vmatpush.bf16.msra.mxu0 0
        %3856 = vmatpush.bf16.msra.mxu0 0
        %3857 = vmatpush.bf16.msra.mxu0 0
        %3858 = vmatpush.bf16.msra.mxu0 %v3780
        %3859 = vmatmul.bf16.gmra.mxu0 %v3793
        %v3860 = vpop.f32.mrf.mxu0
        %v3861 = vadd.f32 %v3707, %v3860
        %v3862 = vpop.f32.mrf.mxu0
        %v3863 = vadd.f32 %v3709, %v3862
        %3864 = vdwg.mxu0
        %3865 = vmatpush.bf16.msra.mxu0 0
        %3866 = vmatpush.bf16.msra.mxu0 0
        %3867 = vmatpush.bf16.msra.mxu0 0
        %3868 = vmatpush.bf16.msra.mxu0 0
        %3869 = vmatpush.bf16.msra.mxu0 0
        %3870 = vmatpush.bf16.msra.mxu0 0
        %3871 = vmatpush.bf16.msra.mxu0 0
        %3872 = vmatpush.bf16.msra.mxu0 %v3781
        %3873 = vmatmul.bf16.gmra.mxu0 %v3793
        %v3874 = vpop.f32.mrf.mxu0
        %v3875 = vadd.f32 %v3721, %v3874
        %v3876 = vpop.f32.mrf.mxu0
        %v3877 = vadd.f32 %v3723, %v3876
        %3878 = vdwg.mxu0
        %3879 = vmatpush.bf16.msra.mxu0 0
        %3880 = vmatpush.bf16.msra.mxu0 0
        %3881 = vmatpush.bf16.msra.mxu0 0
        %3882 = vmatpush.bf16.msra.mxu0 0
        %3883 = vmatpush.bf16.msra.mxu0 0
        %3884 = vmatpush.bf16.msra.mxu0 0
        %3885 = vmatpush.bf16.msra.mxu0 0
        %3886 = vmatpush.bf16.msra.mxu0 %v3782
        %3887 = vmatmul.bf16.gmra.mxu0 %v3793
        %v3888 = vpop.f32.mrf.mxu0
        %v3889 = vadd.f32 %v3735, %v3888
        %v3890 = vpop.f32.mrf.mxu0
        %v3891 = vadd.f32 %v3737, %v3890
        %3892 = vdwg.mxu0
        %3893 = vmatpush.bf16.msra.mxu0 0
        %3894 = vmatpush.bf16.msra.mxu0 0
        %3895 = vmatpush.bf16.msra.mxu0 0
        %3896 = vmatpush.bf16.msra.mxu0 0
        %3897 = vmatpush.bf16.msra.mxu0 0
        %3898 = vmatpush.bf16.msra.mxu0 0
        %3899 = vmatpush.bf16.msra.mxu0 0
        %3900 = vmatpush.bf16.msra.mxu0 %v3783
        %3901 = vmatmul.bf16.gmra.mxu0 %v3793
        %v3902 = vpop.f32.mrf.mxu0
        %v3903 = vadd.f32 %v3749, %v3902
        %v3904 = vpop.f32.mrf.mxu0
        %v3905 = vadd.f32 %v3751, %v3904
        %3906 = vdwg.mxu0
        %v3907 = vld [vmem:[%s6 + $0x40] sm:$0xf]
        %v3908 = vld [vmem:[%s6 + $0x44] sm:$0xf]
        %v3911 = vunpack.c.l.b16 %v3907
        %v3912 = vunpack.c.l.b16 %v3908
        %v3913 = vpack.c.b16 %v3912, %v3911
        %3914 = vrot.lane.b32.xlu0 %v2524, 63
        %v3915 = vpop.permute.xlu0 %3914
        %3916 = vrot.lane.b32.xlu0 %v2525, 63
        %v3917 = vpop.permute.xlu0 %3916
        %3918 = vrot.lane.b32.xlu0 %v2526, 63
        %v3919 = vpop.permute.xlu0 %3918
        %3920 = vrot.lane.b32.xlu0 %v2527, 63
        %v3921 = vpop.permute.xlu0 %3920
        %3922 = vrot.lane.b32.xlu0 %v2528, 63
        %v3923 = vpop.permute.xlu0 %3922
        %3924 = vrot.lane.b32.xlu0 %v2529, 63
        %v3925 = vpop.permute.xlu0 %3924
        %3926 = vrot.lane.b32.xlu0 %v2530, 63
        %v3927 = vpop.permute.xlu0 %3926
        %3928 = vrot.lane.b32.xlu0 %v2531, 63
        %v3929 = vpop.permute.xlu0 %3928
        %3930 = vrot.lane.b32.xlu0 %v2532, 63
        %v3931 = vpop.permute.xlu0 %3930
        %v3932 = vsel %vm1987, %v3915, %v3917
        %v3933 = vsel %vm1987, %v3917, %v3919
        %v3934 = vsel %vm1987, %v3919, %v3921
        %v3935 = vsel %vm1987, %v3921, %v3923
        %v3936 = vsel %vm1987, %v3923, %v3925
        %v3937 = vsel %vm1987, %v3925, %v3927
        %v3938 = vsel %vm1987, %v3927, %v3929
        %v3939 = vsel %vm1987, %v3929, %v3931
        %v3949 = vsel %vm674, %v3913, 0
        %3951 = vmatpush.bf16.msra.mxu0 0
        %3952 = vmatpush.bf16.msra.mxu0 0
        %3953 = vmatpush.bf16.msra.mxu0 0
        %3954 = vmatpush.bf16.msra.mxu0 0
        %3955 = vmatpush.bf16.msra.mxu0 0
        %3956 = vmatpush.bf16.msra.mxu0 0
        %3957 = vmatpush.bf16.msra.mxu0 0
        %3958 = vmatpush.bf16.msra.mxu0 %v3932
        %3959 = vmatmul.bf16.gmra.mxu0 %v3949
        %v3960 = vpop.f32.mrf.mxu0
        %v3961 = vadd.f32 0.0, %v3960
        %v3962 = vpop.f32.mrf.mxu0
        %v3963 = vadd.f32 0.0, %v3962
        %3964 = vdwg.mxu0
        %3965 = vmatpush.bf16.msra.mxu0 0
        %3966 = vmatpush.bf16.msra.mxu0 0
        %3967 = vmatpush.bf16.msra.mxu0 0
        %3968 = vmatpush.bf16.msra.mxu0 0
        %3969 = vmatpush.bf16.msra.mxu0 0
        %3970 = vmatpush.bf16.msra.mxu0 0
        %3971 = vmatpush.bf16.msra.mxu0 0
        %3972 = vmatpush.bf16.msra.mxu0 %v3933
        %3973 = vmatmul.bf16.gmra.mxu0 %v3949
        %v3974 = vpop.f32.mrf.mxu0
        %v3975 = vadd.f32 0.0, %v3974
        %v3976 = vpop.f32.mrf.mxu0
        %v3977 = vadd.f32 0.0, %v3976
        %3978 = vdwg.mxu0
        %3979 = vmatpush.bf16.msra.mxu0 0
        %3980 = vmatpush.bf16.msra.mxu0 0
        %3981 = vmatpush.bf16.msra.mxu0 0
        %3982 = vmatpush.bf16.msra.mxu0 0
        %3983 = vmatpush.bf16.msra.mxu0 0
        %3984 = vmatpush.bf16.msra.mxu0 0
        %3985 = vmatpush.bf16.msra.mxu0 0
        %3986 = vmatpush.bf16.msra.mxu0 %v3934
        %3987 = vmatmul.bf16.gmra.mxu0 %v3949
        %v3988 = vpop.f32.mrf.mxu0
        %v3989 = vadd.f32 0.0, %v3988
        %v3990 = vpop.f32.mrf.mxu0
        %v3991 = vadd.f32 0.0, %v3990
        %3992 = vdwg.mxu0
        %3993 = vmatpush.bf16.msra.mxu0 0
        %3994 = vmatpush.bf16.msra.mxu0 0
        %3995 = vmatpush.bf16.msra.mxu0 0
        %3996 = vmatpush.bf16.msra.mxu0 0
        %3997 = vmatpush.bf16.msra.mxu0 0
        %3998 = vmatpush.bf16.msra.mxu0 0
        %3999 = vmatpush.bf16.msra.mxu0 0
        %4000 = vmatpush.bf16.msra.mxu0 %v3935
        %4001 = vmatmul.bf16.gmra.mxu0 %v3949
        %v4002 = vpop.f32.mrf.mxu0
        %v4003 = vadd.f32 0.0, %v4002
        %v4004 = vpop.f32.mrf.mxu0
        %v4005 = vadd.f32 0.0, %v4004
        %4006 = vdwg.mxu0
        %4007 = vmatpush.bf16.msra.mxu0 0
        %4008 = vmatpush.bf16.msra.mxu0 0
        %4009 = vmatpush.bf16.msra.mxu0 0
        %4010 = vmatpush.bf16.msra.mxu0 0
        %4011 = vmatpush.bf16.msra.mxu0 0
        %4012 = vmatpush.bf16.msra.mxu0 0
        %4013 = vmatpush.bf16.msra.mxu0 0
        %4014 = vmatpush.bf16.msra.mxu0 %v3936
        %4015 = vmatmul.bf16.gmra.mxu0 %v3949
        %v4016 = vpop.f32.mrf.mxu0
        %v4017 = vadd.f32 0.0, %v4016
        %v4018 = vpop.f32.mrf.mxu0
        %v4019 = vadd.f32 0.0, %v4018
        %4020 = vdwg.mxu0
        %4021 = vmatpush.bf16.msra.mxu0 0
        %4022 = vmatpush.bf16.msra.mxu0 0
        %4023 = vmatpush.bf16.msra.mxu0 0
        %4024 = vmatpush.bf16.msra.mxu0 0
        %4025 = vmatpush.bf16.msra.mxu0 0
        %4026 = vmatpush.bf16.msra.mxu0 0
        %4027 = vmatpush.bf16.msra.mxu0 0
        %4028 = vmatpush.bf16.msra.mxu0 %v3937
        %4029 = vmatmul.bf16.gmra.mxu0 %v3949
        %v4030 = vpop.f32.mrf.mxu0
        %v4031 = vadd.f32 0.0, %v4030
        %v4032 = vpop.f32.mrf.mxu0
        %v4033 = vadd.f32 0.0, %v4032
        %4034 = vdwg.mxu0
        %4035 = vmatpush.bf16.msra.mxu0 0
        %4036 = vmatpush.bf16.msra.mxu0 0
        %4037 = vmatpush.bf16.msra.mxu0 0
        %4038 = vmatpush.bf16.msra.mxu0 0
        %4039 = vmatpush.bf16.msra.mxu0 0
        %4040 = vmatpush.bf16.msra.mxu0 0
        %4041 = vmatpush.bf16.msra.mxu0 0
        %4042 = vmatpush.bf16.msra.mxu0 %v3938
        %4043 = vmatmul.bf16.gmra.mxu0 %v3949
        %v4044 = vpop.f32.mrf.mxu0
        %v4045 = vadd.f32 0.0, %v4044
        %v4046 = vpop.f32.mrf.mxu0
        %v4047 = vadd.f32 0.0, %v4046
        %4048 = vdwg.mxu0
        %4049 = vmatpush.bf16.msra.mxu0 0
        %4050 = vmatpush.bf16.msra.mxu0 0
        %4051 = vmatpush.bf16.msra.mxu0 0
        %4052 = vmatpush.bf16.msra.mxu0 0
        %4053 = vmatpush.bf16.msra.mxu0 0
        %4054 = vmatpush.bf16.msra.mxu0 0
        %4055 = vmatpush.bf16.msra.mxu0 0
        %4056 = vmatpush.bf16.msra.mxu0 %v3939
        %4057 = vmatmul.bf16.gmra.mxu0 %v3949
        %v4058 = vpop.f32.mrf.mxu0
        %v4059 = vadd.f32 0.0, %v4058
        %v4060 = vpop.f32.mrf.mxu0
        %v4061 = vadd.f32 0.0, %v4060
        %4062 = vdwg.mxu0
        %v4063 = vadd.f32 %v3805, %v3961
        %v4064 = vadd.f32 %v3819, %v3975
        %v4065 = vadd.f32 %v3833, %v3989
        %v4066 = vadd.f32 %v3847, %v4003
        %v4067 = vadd.f32 %v3861, %v4017
        %v4068 = vadd.f32 %v3875, %v4031
        %v4069 = vadd.f32 %v3889, %v4045
        %v4070 = vadd.f32 %v3903, %v4059
        %v4071 = vadd.f32 %v3807, %v3963
        %v4072 = vadd.f32 %v3821, %v3977
        %v4073 = vadd.f32 %v3835, %v3991
        %v4074 = vadd.f32 %v3849, %v4005
        %v4075 = vadd.f32 %v3863, %v4019
        %v4076 = vadd.f32 %v3877, %v4033
        %v4077 = vadd.f32 %v3891, %v4047
        %v4078 = vadd.f32 %v3905, %v4061
        %v4079 = vsel %vm2466, 1, 0
        %v4080 = vperm.slane %v4079, 0
        %v4081 = vperm.slane %v4079, 1
        %v4082 = vperm.slane %v4079, 2
        %v4083 = vperm.slane %v4079, 3
        %v4084 = vperm.slane %v4079, 4
        %v4085 = vperm.slane %v4079, 5
        %v4086 = vperm.slane %v4079, 6
        %v4087 = vperm.slane %v4079, 7
        %vm4088 = vcmp.eq.s32.totalorder %v4080, 1
        %vm4089 = vcmp.eq.s32.totalorder %v4081, 1
        %vm4090 = vcmp.eq.s32.totalorder %v4082, 1
        %vm4091 = vcmp.eq.s32.totalorder %v4083, 1
        %vm4092 = vcmp.eq.s32.totalorder %v4084, 1
        %vm4093 = vcmp.eq.s32.totalorder %v4085, 1
        %vm4094 = vcmp.eq.s32.totalorder %v4086, 1
        %vm4095 = vcmp.eq.s32.totalorder %v4087, 1
        %v4096 = vsel %vm4088, %v4063, 0.0
        %v4097 = vsel %vm4089, %v4064, 0.0
        %v4098 = vsel %vm4090, %v4065, 0.0
        %v4099 = vsel %vm4091, %v4066, 0.0
        %v4100 = vsel %vm4092, %v4067, 0.0
        %v4101 = vsel %vm4093, %v4068, 0.0
        %v4102 = vsel %vm4094, %v4069, 0.0
        %v4103 = vsel %vm4095, %v4070, 0.0
        %v4104 = vsel %vm4088, %v4071, 0.0
        %v4105 = vsel %vm4089, %v4072, 0.0
        %v4106 = vsel %vm4090, %v4073, 0.0
        %v4107 = vsel %vm4091, %v4074, 0.0
        %v4108 = vsel %vm4092, %v4075, 0.0
        %v4109 = vsel %vm4093, %v4076, 0.0
        %v4110 = vsel %vm4094, %v4077, 0.0
        %v4111 = vsel %vm4095, %v4078, 0.0
        %v4112 = vadd.f32 %v3578, %v4096
        %v4113 = vadd.f32 %v3579, %v4097
        %v4114 = vadd.f32 %v3580, %v4098
        %v4115 = vadd.f32 %v3581, %v4099
        %v4116 = vadd.f32 %v3582, %v4100
        %v4117 = vadd.f32 %v3583, %v4101
        %v4118 = vadd.f32 %v3584, %v4102
        %v4119 = vadd.f32 %v3585, %v4103
        %v4120 = vadd.f32 %v3586, %v4104
        %v4121 = vadd.f32 %v3587, %v4105
        %v4122 = vadd.f32 %v3588, %v4106
        %v4123 = vadd.f32 %v3589, %v4107
        %v4124 = vadd.f32 %v3590, %v4108
        %v4125 = vadd.f32 %v3591, %v4109
        %v4126 = vadd.f32 %v3592, %v4110
        %v4127 = vadd.f32 %v3593, %v4111
        %v4128 = vld [vmem:[%s7] sm:$0xff]
        %v4129 = vld [vmem:[%s7 + $0x8] sm:$0xff]
        %4131 = vset.pattern.permute.xlu0 0
        %4132 = vperm.xlu0 %4131, %v4128
        %v4133 = vpop.permute.xlu0 %4132
        %4136 = vset.pattern.permute.xlu0 0
        %4137 = vperm.xlu0 %4136, %v4129
        %v4138 = vpop.permute.xlu0 %4137
        %v4140 = vadd.f32 %v4112, %v4133
        %v4141 = vadd.f32 %v4113, %v4133
        %v4142 = vadd.f32 %v4114, %v4133
        %v4143 = vadd.f32 %v4115, %v4133
        %v4144 = vadd.f32 %v4116, %v4133
        %v4145 = vadd.f32 %v4117, %v4133
        %v4146 = vadd.f32 %v4118, %v4133
        %v4147 = vadd.f32 %v4119, %v4133
        %v4148 = vadd.f32 %v4120, %v4138
        %v4149 = vadd.f32 %v4121, %v4138
        %v4150 = vadd.f32 %v4122, %v4138
        %v4151 = vadd.f32 %v4123, %v4138
        %v4152 = vadd.f32 %v4124, %v4138
        %v4153 = vadd.f32 %v4125, %v4138
        %v4154 = vadd.f32 %v4126, %v4138
        %v4155 = vadd.f32 %v4127, %v4138
        %v4156 = vld [vmem:[%s487] sm:$0xff]
        %v4157 = vld [vmem:[%s487 + $0x8] sm:$0xff]
        %v4158 = vld [vmem:[%s487 + $0x10] sm:$0xff]
        %v4159 = vld [vmem:[%s487 + $0x18] sm:$0xff]
        %v4160 = vld [vmem:[%s487 + $0x20] sm:$0xff]
        %v4161 = vld [vmem:[%s487 + $0x28] sm:$0xff]
        %v4162 = vld [vmem:[%s487 + $0x30] sm:$0xff]
        %v4163 = vld [vmem:[%s487 + $0x38] sm:$0xff]
        %v4164 = vld [vmem:[%s487 + $0x40] sm:$0xff]
        %v4165 = vld [vmem:[%s487 + $0x48] sm:$0xff]
        %v4166 = vld [vmem:[%s487 + $0x50] sm:$0xff]
        %v4167 = vld [vmem:[%s487 + $0x58] sm:$0xff]
        %v4168 = vld [vmem:[%s487 + $0x60] sm:$0xff]
        %v4169 = vld [vmem:[%s487 + $0x68] sm:$0xff]
        %v4170 = vld [vmem:[%s487 + $0x70] sm:$0xff]
        %v4171 = vld [vmem:[%s487 + $0x78] sm:$0xff]
        %v4172 = vadd.f32 %v4140, %v4156
        %v4173 = vadd.f32 %v4141, %v4157
        %v4174 = vadd.f32 %v4142, %v4158
        %v4175 = vadd.f32 %v4143, %v4159
        %v4176 = vadd.f32 %v4144, %v4160
        %v4177 = vadd.f32 %v4145, %v4161
        %v4178 = vadd.f32 %v4146, %v4162
        %v4179 = vadd.f32 %v4147, %v4163
        %v4180 = vadd.f32 %v4148, %v4164
        %v4181 = vadd.f32 %v4149, %v4165
        %v4182 = vadd.f32 %v4150, %v4166
        %v4183 = vadd.f32 %v4151, %v4167
        %v4184 = vadd.f32 %v4152, %v4168
        %v4185 = vadd.f32 %v4153, %v4169
        %v4186 = vadd.f32 %v4154, %v4170
        %v4187 = vadd.f32 %v4155, %v4171
        %4188 = vst [vmem:[%s501] sm:$0xff] %v4172
        %4189 = vst [vmem:[%s501 + $0x8] sm:$0xff] %v4173
        %4190 = vst [vmem:[%s501 + $0x10] sm:$0xff] %v4174
        %4191 = vst [vmem:[%s501 + $0x18] sm:$0xff] %v4175
        %4192 = vst [vmem:[%s501 + $0x20] sm:$0xff] %v4176
        %4193 = vst [vmem:[%s501 + $0x28] sm:$0xff] %v4177
        %4194 = vst [vmem:[%s501 + $0x30] sm:$0xff] %v4178
        %4195 = vst [vmem:[%s501 + $0x38] sm:$0xff] %v4179
        %4196 = vst [vmem:[%s501 + $0x40] sm:$0xff] %v4180
        %4197 = vst [vmem:[%s501 + $0x48] sm:$0xff] %v4181
        %4198 = vst [vmem:[%s501 + $0x50] sm:$0xff] %v4182
        %4199 = vst [vmem:[%s501 + $0x58] sm:$0xff] %v4183
        %4200 = vst [vmem:[%s501 + $0x60] sm:$0xff] %v4184
        %4201 = vst [vmem:[%s501 + $0x68] sm:$0xff] %v4185
        %4202 = vst [vmem:[%s501 + $0x70] sm:$0xff] %v4186
        %4203 = vst [vmem:[%s501 + $0x78] sm:$0xff] %v4187
        %s4204 = smul.u32 8, %s24
        %p4205 = scmp.lt.s32.totalorder %s23, 1
        %s4206 = scalar_select %p4205, %s23, 1
        %p4207 = scmp.lt.s32.totalorder %s4204, 7
        %s4208 = scalar_select %p4207, %s4204, 7
        %s4209 = smul.addr %s4206, 16
        %s4210 = sadd.s32 %s4208, %s4209
        %s4211 = smul.addr %s4210, 8
        %s4212 = scalar_lea.vmem %s8, %s4211
        // Predicated region
        $region133: #{resblock_forward.1} parent=119 // pred_check
          %p4213 = pneg %p256
        $region134: #{resblock_forward.1} parent=119 // pred_check_branch
          %4215 = sbr.rel (%p4213) target = $region136
        $region135: #{resblock_forward.1} parent=119 // pred_region
          %s4216 = smul.u32 8, %s24
        $region136: #{resblock_forward.1} parent=119 // pred_fallthru
          _
      $region120: #{resblock_forward.1} parent=5 // pred_fallthru
        _
      %p4217 = scmp.le.s32.totalorder 2, %s14
      // Predicated region
      $region137: #{resblock_forward.1} parent=5 // pred_check
        %p4218 = pneg %p4217
      $region138: #{resblock_forward.1} parent=5 // pred_check_branch
        %4220 = sbr.rel (%p4218) target = $region140
      $region139: #{resblock_forward.1} parent=5 // pred_region
        %s4221 = ssub.s32 %s14, 2
        // Predicated region
        $region141: #{resblock_forward.1} parent=139 // pred_check
          %p4222 = pneg %p262
        $region142: #{resblock_forward.1} parent=139 // pred_check_branch
          %4224 = sbr.rel (%p4222) target = $region144
        $region143: #{resblock_forward.1} parent=139 // pred_region
          %s4225 = smul.u32 8, %s26
          %p4226 = scmp.lt.s32.totalorder %s25, 1
          %s4227 = scalar_select %p4226, %s25, 1
          %p4228 = scmp.lt.s32.totalorder %s4225, 7
          %s4229 = scalar_select %p4228, %s4225, 7
          %s4230 = smul.addr %s4227, 16
          %s4231 = sadd.s32 %s4229, %s4230
          %s4232 = smul.addr %s4231, 8
          %s4233 = scalar_lea.vmem %s8, %s4232
        $region144: #{resblock_forward.1} parent=139 // pred_fallthru
          _
      $region140: #{resblock_forward.1} parent=5 // pred_fallthru
        _
    $region6: #{resblock_forward.1} parent=1 // loop_footer
      %s18 = sadd.s32 1, %s14
    $region7: #{resblock_forward.1} parent=1 // loop_footer_branch
      %13 = sbr.rel target = $region3
    $region8: #{resblock_forward.1} parent=1 // loop_exit
      _

</llo_original>
